<compile_context>
chip_gen: v7x
topology: tpu7x:2x2x1
jax: 0.10.0
libtpu: 0.0.40
codegen_flags: <defaults>
</compile_context>

<pallas_src>
import functools

import jax
import jax.numpy as jnp
from jax.experimental import pallas as pl
from jax.experimental.pallas import tpu as pltpu

_LN_EPS = 1e-5  # torch.nn.LayerNorm default


# ----------------------------------------------------------------------------
# Fused branch kernel: ProjectInOut(PreNorm(Attention)) + residual, one batch
# tile (TB cls tokens + their TB*M raw context rows) per grid step.
# ----------------------------------------------------------------------------
def _fused_branch_kernel(cls_ref, ctx_ref, pin_w_ref, pin_b_ref, g_ref, b_ref,
                         wq_ref, wk_ref, wv_ref, wo_ref, bo_ref,
                         pout_w_ref, pout_b_ref, e_ref, et_ref, r_ref, rt_ref,
                         o_ref, *, dim_head):
    f32 = jnp.float32
    bf16 = jnp.bfloat16
    scale = dim_head ** -0.5

    cls_tok = cls_ref[...].astype(f32)                 # (TB, dim_in)
    ctx = ctx_ref[...].astype(bf16)                    # (TB*M, D) raw patches

    # -- ProjectInOut.project_in : Linear(dim_in -> D), bf16 operands / f32 acc
    x = jnp.dot(cls_tok.astype(bf16), pin_w_ref[...],
                preferred_element_type=f32) + pin_b_ref[...].astype(f32)

    # -- PreNorm: LayerNorm over features (queries only; context stays raw)
    mu = jnp.mean(x, axis=-1, keepdims=True)
    xc = x - mu
    var = jnp.mean(xc * xc, axis=-1, keepdims=True)
    xn = xc * jax.lax.rsqrt(var + _LN_EPS) * g_ref[...].astype(f32) \
        + b_ref[...].astype(f32)                       # (TB, D)
    xn_b = xn.astype(bf16)

    # -- dense projections (softmax scale folded into q once)
    q = jnp.dot(xn_b, wq_ref[...], preferred_element_type=f32) * scale   # (TB, inner)
    k_self = jnp.dot(xn_b, wk_ref[...], preferred_element_type=f32)      # (TB, inner)
    v_self = jnp.dot(xn_b, wv_ref[...], preferred_element_type=f32)      # (TB, inner)
    k_ctx = jnp.dot(ctx, wk_ref[...], preferred_element_type=f32)        # (TB*M, inner)
    v_ctx = jnp.dot(ctx, wv_ref[...], preferred_element_type=f32)        # (TB*M, inner)

    # Structural 0/1 constants (f32, exact):
    #   E  (inner, heads): column h marks the feature lanes of head h
    #   R  (TB*M, TB):     row b*M+m marks batch b (segment membership)
    e_mat, et_mat = e_ref[...], et_ref[...]
    r_mat, rt_mat = r_ref[...], rt_ref[...]

    # -- all-head attention logits without per-head lane slices:
    #    scores[r, h] = sum_{i in head h} q[batch(r), i] * k[r, i]
    q_rep = jnp.dot(r_mat, q, preferred_element_type=f32)                # (TB*M, inner)
    scores_ctx = jnp.dot(q_rep * k_ctx, e_mat,
                         preferred_element_type=f32)                     # (TB*M, heads)
    scores_self = jnp.dot(q * k_self, e_mat,
                          preferred_element_type=f32)                    # (TB, heads)

    # -- softmax over {self} U {M context rows} per (batch, head).
    #    Softmax is shift-invariant, so a per-head *global* max is a valid,
    #    numerically safe shift and keeps everything 2-D.
    m = jnp.maximum(jnp.max(scores_ctx, axis=0, keepdims=True),
                    jnp.max(scores_self, axis=0, keepdims=True))         # (1, heads)
    e_ctx = jnp.exp(scores_ctx - m)                                      # (TB*M, heads)
    e_self = jnp.exp(scores_self - m)                                    # (TB, heads)
    denom = jnp.dot(rt_mat, e_ctx, preferred_element_type=f32) + e_self  # (TB, heads)
    inv = pl.reciprocal(denom, approx=True)                              # (TB, heads)
    attn_ctx = e_ctx * jnp.dot(r_mat, inv, preferred_element_type=f32)   # (TB*M, heads)
    attn_self = e_self * inv                                             # (TB, heads)

    # -- weighted sum of values: expand per-head weights onto the inner axis
    #    with E^T, multiply, and segment-sum with R^T.
    w_ctx = jnp.dot(attn_ctx, et_mat, preferred_element_type=f32) * v_ctx     # (TB*M, inner)
    w_self = jnp.dot(attn_self, et_mat, preferred_element_type=f32) * v_self  # (TB, inner)
    ctx_out = jnp.dot(rt_mat, w_ctx, preferred_element_type=f32) + w_self     # (TB, inner)

    # -- to_out Linear, ProjectInOut.project_out, residual add (all fused)
    out = jnp.dot(ctx_out.astype(bf16), wo_ref[...],
                  preferred_element_type=f32) + bo_ref[...].astype(f32)       # (TB, D)
    y = jnp.dot(out.astype(bf16), pout_w_ref[...],
                preferred_element_type=f32) + pout_b_ref[...].astype(f32)     # (TB, dim_in)
    o_ref[...] = (y + cls_tok).astype(o_ref.dtype)     # dense 2-D (TB, dim_in) store


def _full(shape):
    zeros = (0,) * len(shape)
    return pl.BlockSpec(shape, lambda i: zeros)


def _pick_batch_tile(batch):
    # TB rows per grid step: amortizes the ~0.35us/step pipeline overhead and
    # fills MXU sublanes.  TB must keep the block's second-to-last dim either a
    # multiple of 8 or the full array extent (Mosaic (8,128) rule).
    for tb in (32, 16, 8):
        if batch % tb == 0:
            return tb
    return batch


def fused_cross_branch(cls_tok, ctx, p, *, heads, dim_head):
    """One ProjectInOut(PreNorm(Attention)) branch + residual, fully fused.

    cls_tok: (B, 1, dim_in) float32   query cls token (pre-projection)
    ctx:     (B, M, D)     float32    raw patch tokens of the other branch
    returns: (B, 1, dim_in) updated cls token (residual included)
    """
    B, _, dim_in = cls_tok.shape
    _, M, D = ctx.shape
    inner = heads * dim_head
    TB = _pick_batch_tile(B)

    cls2 = cls_tok.reshape(B, dim_in)     # dense (TB, dim_in) blocks / stores
    ctx2 = ctx.reshape(B * M, D)          # dense (TB*M, D) blocks

    # 0/1 structural constants (trace-time, shared by every grid step)
    e_mat = (jnp.arange(inner)[:, None] // dim_head
             == jnp.arange(heads)[None, :]).astype(jnp.float32)           # (inner, heads)
    et_mat = e_mat.T                                                      # (heads, inner)
    seg = jnp.arange(TB * M) // M
    r_mat = (seg[:, None] == jnp.arange(TB)[None, :]).astype(jnp.float32)  # (TB*M, TB)
    rt_mat = r_mat.T                                                      # (TB, TB*M)

    kernel = functools.partial(_fused_branch_kernel, dim_head=dim_head)

    grid_spec = pltpu.PrefetchScalarGridSpec(
        num_scalar_prefetch=0,
        grid=(B // TB,),
        in_specs=[
            pl.BlockSpec((TB, dim_in), lambda i: (i, 0)),      # cls tokens
            pl.BlockSpec((TB * M, D), lambda i: (i, 0)),       # flattened context
            _full((dim_in, D)),                                # proj_in W  (bf16)
            _full((1, D)),                                     # proj_in b
            _full((1, D)),                                     # LN gamma
            _full((1, D)),                                     # LN beta
            _full((D, inner)),                                 # Wq (bf16)
            _full((D, inner)),                                 # Wk (bf16)
            _full((D, inner)),                                 # Wv (bf16)
            _full((inner, D)),                                 # Wo (bf16)
            _full((1, D)),                                     # bo
            _full((D, dim_in)),                                # proj_out W (bf16)
            _full((1, dim_in)),                                # proj_out b
            _full((inner, heads)),                             # E
            _full((heads, inner)),                             # E^T
            _full((TB * M, TB)),                               # R
            _full((TB, TB * M)),                               # R^T
        ],
        out_specs=pl.BlockSpec((TB, dim_in), lambda i: (i, 0)),
    )
    # NOTE: at real CrossViT sizes (D~384-768, M~256-576) raise
    # vmem_limit_bytes and re-derive TB against v7x's 64 MiB VMEM.
    out = pl.pallas_call(
        kernel,
        out_shape=jax.ShapeDtypeStruct((B, dim_in), cls_tok.dtype),
        grid_spec=grid_spec,
        compiler_params=pltpu.CompilerParams(
            # batch tiles are independent -> shard across both TCs on v7x
            dimension_semantics=("parallel",)),
    )(cls2, ctx2,
      p["proj_in_w"], p["proj_in_b"].reshape(1, D),
      p["ln_g"].reshape(1, D), p["ln_b"].reshape(1, D),
      p["wq"], p["wk"], p["wv"],
      p["wo"], p["bo"].reshape(1, D),
      p["proj_out_w"], p["proj_out_b"].reshape(1, dim_in),
      e_mat, et_mat, r_mat, rt_mat)
    return out.reshape(B, 1, dim_in)


# ----------------------------------------------------------------------------
# Pure-JAX reference of the fused branch (for correctness check only).
# ----------------------------------------------------------------------------
def _fused_cross_branch_ref(cls_tok, ctx, p, *, heads, dim_head):
    f32 = jnp.float32
    B, _, dim_in = cls_tok.shape
    inner = heads * dim_head
    scale = dim_head ** -0.5
    cls2 = cls_tok.reshape(B, dim_in).astype(f32)
    x = cls2 @ p["proj_in_w"].astype(f32) + p["proj_in_b"]
    mu = x.mean(-1, keepdims=True)
    var = ((x - mu) ** 2).mean(-1, keepdims=True)
    xn = (x - mu) / jnp.sqrt(var + _LN_EPS) * p["ln_g"] + p["ln_b"]
    full_ctx = jnp.concatenate([xn[:, None, :], ctx.astype(f32)], axis=1)  # (B, M+1, D)
    q = (xn @ p["wq"].astype(f32)) * scale
    k = jnp.einsum("bjd,de->bje", full_ctx, p["wk"].astype(f32))
    v = jnp.einsum("bjd,de->bje", full_ctx, p["wv"].astype(f32))
    qh = q.reshape(B, heads, dim_head)
    kh = k.reshape(B, -1, heads, dim_head)
    vh = v.reshape(B, -1, heads, dim_head)
    dots = jnp.einsum("bhd,bjhd->bhj", qh, kh)
    attn = jax.nn.softmax(dots, axis=-1)
    out = jnp.einsum("bhj,bjhd->bhd", attn, vh).reshape(B, inner)
    o = out @ p["wo"].astype(f32) + p["bo"]
    y = o @ p["proj_out_w"].astype(f32) + p["proj_out_b"]
    return (y + cls2).reshape(B, 1, dim_in).astype(cls_tok.dtype)


# ----------------------------------------------------------------------------
# Deterministic synthetic parameters (no checkpoint).  Matmul weights in bf16,
# biases / LN params in f32; the to_kv weight is split into Wk / Wv here.
# ----------------------------------------------------------------------------
def _normal(key, shape, scale=0.05):
    return scale * jax.random.normal(key, shape, dtype=jnp.float32)


def init_branch_params(key, dim_in, dim_out, heads, dim_head):
    inner = heads * dim_head
    keys = jax.random.split(key, 8)
    wkv = _normal(keys[3], (dim_out, 2 * inner))
    bf16 = jnp.bfloat16
    return {
        "proj_in_w": _normal(keys[0], (dim_in, dim_out)).astype(bf16),
        "proj_in_b": _normal(keys[1], (dim_out,)),
        "ln_g": jnp.ones((dim_out,), jnp.float32),
        "ln_b": jnp.zeros((dim_out,), jnp.float32),
        "wq": _normal(keys[2], (dim_out, inner)).astype(bf16),
        "wk": wkv[:, :inner].astype(bf16),     # lane-aligned split of to_kv
        "wv": wkv[:, inner:].astype(bf16),
        "wo": _normal(keys[4], (inner, dim_out)).astype(bf16),
        "bo": _normal(keys[5], (dim_out,)),
        "proj_out_w": _normal(keys[6], (dim_out, dim_in)).astype(bf16),
        "proj_out_b": _normal(keys[7], (dim_in,)),
    }


def init_cross_transformer(key, sm_dim, lg_dim, depth, heads, dim_head):
    layers = []
    for d in range(depth):
        k1 = jax.random.fold_in(key, 2 * d)
        k2 = jax.random.fold_in(key, 2 * d + 1)
        layers.append({
            "sm_attend_lg": init_branch_params(k1, sm_dim, lg_dim, heads, dim_head),
            "lg_attend_sm": init_branch_params(k2, lg_dim, sm_dim, heads, dim_head),
        })
    return {"layers": layers, "heads": heads, "dim_head": dim_head}


# ----------------------------------------------------------------------------
# Forward pass.  Everything per branch per layer lives in one pallas_call.
# ----------------------------------------------------------------------------
def cross_transformer_forward(params, sm_tokens, lg_tokens, *, use_pallas=True):
    heads, dim_head = params["heads"], params["dim_head"]
    sm_cls, sm_patch = sm_tokens[:, :1], sm_tokens[:, 1:]
    lg_cls, lg_patch = lg_tokens[:, :1], lg_tokens[:, 1:]
    branch = fused_cross_branch if use_pallas else _fused_cross_branch_ref

    for layer in params["layers"]:
        # The two branch attentions are independent; they could share one
        # pallas_call, but are kept as two calls for clarity.
        sm_cls = branch(sm_cls, lg_patch, layer["sm_attend_lg"],
                        heads=heads, dim_head=dim_head)
        lg_cls = branch(lg_cls, sm_patch, layer["lg_attend_sm"],
                        heads=heads, dim_head=dim_head)

    sm_out = jnp.concatenate([sm_cls, sm_patch], axis=1)
    lg_out = jnp.concatenate([lg_cls, lg_patch], axis=1)
    return sm_out, lg_out


if __name__ == "__main__":
    # Small config: sm_dim=32, lg_dim=64, depth=2, heads=4, dim_head=16
    B, sm_dim, lg_dim = 2, 32, 64
    depth, heads, dim_head = 2, 4, 16
    n_sm, n_lg = 8, 16          # patch tokens (plus 1 cls token each)

    key = jax.random.PRNGKey(0)
    k_p, k_sm, k_lg = jax.random.split(key, 3)
    params = init_cross_transformer(k_p, sm_dim, lg_dim, depth, heads, dim_head)

    sm_tokens = jax.random.normal(k_sm, (B, n_sm + 1, sm_dim), jnp.float32)
    lg_tokens = jax.random.normal(k_lg, (B, n_lg + 1, lg_dim), jnp.float32)

    fwd = jax.jit(
        lambda s, l: cross_transformer_forward(params, s, l, use_pallas=True))
    sm_out, lg_out = fwd(sm_tokens, lg_tokens)
    jax.block_until_ready((sm_out, lg_out))

    # Cross-check against the pure-JAX reference (same bf16 weights; the kernel
    # additionally runs activations through bf16 at MXU entry).
    sm_ref, lg_ref = cross_transformer_forward(
        params, sm_tokens, lg_tokens, use_pallas=False)
    assert sm_out.shape == (B, n_sm + 1, sm_dim)
    assert lg_out.shape == (B, n_lg + 1, lg_dim)
    assert jnp.allclose(sm_out, sm_ref, rtol=3e-2, atol=3e-2), \
        float(jnp.max(jnp.abs(sm_out - sm_ref)))
    assert jnp.allclose(lg_out, lg_ref, rtol=3e-2, atol=3e-2), \
        float(jnp.max(jnp.abs(lg_out - lg_ref)))

    print("KERNEL_OK")
</pallas_src>

<mosaic_0001>
module attributes {stable_mosaic.version = 11 : i64} {
  func.func @_fused_branch_kernel(%arg0: i32, %arg1: memref<2x32xf32, #tpu.memory_space<vmem>>, %arg2: memref<32x64xf32, #tpu.memory_space<vmem>>, %arg3: memref<32x64xbf16, #tpu.memory_space<vmem>>, %arg4: memref<1x64xf32, #tpu.memory_space<vmem>>, %arg5: memref<1x64xf32, #tpu.memory_space<vmem>>, %arg6: memref<1x64xf32, #tpu.memory_space<vmem>>, %arg7: memref<64x64xbf16, #tpu.memory_space<vmem>>, %arg8: memref<64x64xbf16, #tpu.memory_space<vmem>>, %arg9: memref<64x64xbf16, #tpu.memory_space<vmem>>, %arg10: memref<64x64xbf16, #tpu.memory_space<vmem>>, %arg11: memref<1x64xf32, #tpu.memory_space<vmem>>, %arg12: memref<64x32xbf16, #tpu.memory_space<vmem>>, %arg13: memref<1x32xf32, #tpu.memory_space<vmem>>, %arg14: memref<64x4xf32, #tpu.memory_space<vmem>>, %arg15: memref<4x64xf32, #tpu.memory_space<vmem>>, %arg16: memref<32x2xf32, #tpu.memory_space<vmem>>, %arg17: memref<2x32xf32, #tpu.memory_space<vmem>>, %arg18: memref<2x32xf32, #tpu.memory_space<vmem>>) attributes {dimension_semantics = [#tpu.dimension_semantics<parallel>], iteration_bounds = array<i64: 1>, scalar_prefetch = 0 : i64, scratch_operands = 0 : i64, tpu.core_type = #tpu.core_type<tc>, window_params = [{transform_indices = @transform_0, window_bounds = array<i64: 2, 32>}, {transform_indices = @transform_1, window_bounds = array<i64: 32, 64>}, {pipeline_mode = #tpu.pipeline_mode<synchronous>, transform_indices = @transform_2, window_bounds = array<i64: 32, 64>}, {pipeline_mode = #tpu.pipeline_mode<synchronous>, transform_indices = @transform_3, window_bounds = array<i64: 1, 64>}, {pipeline_mode = #tpu.pipeline_mode<synchronous>, transform_indices = @transform_4, window_bounds = array<i64: 1, 64>}, {pipeline_mode = #tpu.pipeline_mode<synchronous>, transform_indices = @transform_5, window_bounds = array<i64: 1, 64>}, {pipeline_mode = #tpu.pipeline_mode<synchronous>, transform_indices = @transform_6, window_bounds = array<i64: 64, 64>}, {pipeline_mode = #tpu.pipeline_mode<synchronous>, transform_indices = @transform_7, window_bounds = array<i64: 64, 64>}, {pipeline_mode = #tpu.pipeline_mode<synchronous>, transform_indices = @transform_8, window_bounds = array<i64: 64, 64>}, {pipeline_mode = #tpu.pipeline_mode<synchronous>, transform_indices = @transform_9, window_bounds = array<i64: 64, 64>}, {pipeline_mode = #tpu.pipeline_mode<synchronous>, transform_indices = @transform_10, window_bounds = array<i64: 1, 64>}, {pipeline_mode = #tpu.pipeline_mode<synchronous>, transform_indices = @transform_11, window_bounds = array<i64: 64, 32>}, {pipeline_mode = #tpu.pipeline_mode<synchronous>, transform_indices = @transform_12, window_bounds = array<i64: 1, 32>}, {pipeline_mode = #tpu.pipeline_mode<synchronous>, transform_indices = @transform_13, window_bounds = array<i64: 64, 4>}, {pipeline_mode = #tpu.pipeline_mode<synchronous>, transform_indices = @transform_14, window_bounds = array<i64: 4, 64>}, {pipeline_mode = #tpu.pipeline_mode<synchronous>, transform_indices = @transform_15, window_bounds = array<i64: 32, 2>}, {pipeline_mode = #tpu.pipeline_mode<synchronous>, transform_indices = @transform_16, window_bounds = array<i64: 2, 32>}, {transform_indices = @transform_17, window_bounds = array<i64: 2, 32>}]} {
    %c0 = arith.constant 0 : index
    %c0_0 = arith.constant 0 : index
    %0 = vector.load %arg1[%c0, %c0_0] : memref<2x32xf32, #tpu.memory_space<vmem>>, vector<2x32xf32>
    %c0_1 = arith.constant 0 : index
    %c0_2 = arith.constant 0 : index
    %1 = vector.load %arg2[%c0_1, %c0_2] : memref<32x64xf32, #tpu.memory_space<vmem>>, vector<32x64xf32>
    %2 = arith.truncf %1 : vector<32x64xf32> to vector<32x64xbf16>
    %3 = arith.truncf %0 : vector<2x32xf32> to vector<2x32xbf16>
    %c0_3 = arith.constant 0 : index
    %c0_4 = arith.constant 0 : index
    %4 = vector.load %arg3[%c0_3, %c0_4] : memref<32x64xbf16, #tpu.memory_space<vmem>>, vector<32x64xbf16>
    %cst = arith.constant dense<0.000000e+00> : vector<2x64xf32>
    %5 = tpu.matmul %3, %4, %cst {dimension_numbers = #tpu.dot_dimension_numbers<[1], [0], [0], [1], [0, 0, 1, 1], [], []>} : vector<2x32xbf16>, vector<32x64xbf16>, vector<2x64xf32> -> vector<2x64xf32>
    %c0_5 = arith.constant 0 : index
    %c0_6 = arith.constant 0 : index
    %6 = vector.load %arg4[%c0_5, %c0_6] : memref<1x64xf32, #tpu.memory_space<vmem>>, vector<1x64xf32>
    %7 = vector.broadcast %6 : vector<1x64xf32> to vector<2x64xf32>
    %8 = arith.addf %5, %7 : vector<2x64xf32>
    %cst_7 = arith.constant dense<0.000000e+00> : vector<2xf32>
    %9 = vector.multi_reduction <add>, %8, %cst_7 [1] : vector<2x64xf32> to vector<2xf32>
    %10 = vector.shape_cast %9 : vector<2xf32> to vector<2x1xf32>
    %cst_8 = arith.constant 6.400000e+01 : f32
    %11 = vector.broadcast %cst_8 : f32 to vector<2x1xf32>
    %12 = arith.divf %10, %11 : vector<2x1xf32>
    %13 = vector.broadcast %12 : vector<2x1xf32> to vector<2x64xf32>
    %14 = arith.subf %8, %13 : vector<2x64xf32>
    %15 = arith.mulf %14, %14 : vector<2x64xf32>
    %cst_9 = arith.constant dense<0.000000e+00> : vector<2xf32>
    %16 = vector.multi_reduction <add>, %15, %cst_9 [1] : vector<2x64xf32> to vector<2xf32>
    %17 = vector.shape_cast %16 : vector<2xf32> to vector<2x1xf32>
    %cst_10 = arith.constant 6.400000e+01 : f32
    %18 = vector.broadcast %cst_10 : f32 to vector<2x1xf32>
    %19 = arith.divf %17, %18 : vector<2x1xf32>
    %cst_11 = arith.constant 9.99999974E-6 : f32
    %20 = vector.broadcast %cst_11 : f32 to vector<2x1xf32>
    %21 = arith.addf %19, %20 : vector<2x1xf32>
    %22 = math.rsqrt %21 : vector<2x1xf32>
    %23 = vector.broadcast %22 : vector<2x1xf32> to vector<2x64xf32>
    %24 = arith.mulf %14, %23 : vector<2x64xf32>
    %c0_12 = arith.constant 0 : index
    %c0_13 = arith.constant 0 : index
    %25 = vector.load %arg5[%c0_12, %c0_13] : memref<1x64xf32, #tpu.memory_space<vmem>>, vector<1x64xf32>
    %26 = vector.broadcast %25 : vector<1x64xf32> to vector<2x64xf32>
    %27 = arith.mulf %24, %26 : vector<2x64xf32>
    %c0_14 = arith.constant 0 : index
    %c0_15 = arith.constant 0 : index
    %28 = vector.load %arg6[%c0_14, %c0_15] : memref<1x64xf32, #tpu.memory_space<vmem>>, vector<1x64xf32>
    %29 = vector.broadcast %28 : vector<1x64xf32> to vector<2x64xf32>
    %30 = arith.addf %27, %29 : vector<2x64xf32>
    %31 = arith.truncf %30 : vector<2x64xf32> to vector<2x64xbf16>
    %c0_16 = arith.constant 0 : index
    %c0_17 = arith.constant 0 : index
    %32 = vector.load %arg7[%c0_16, %c0_17] : memref<64x64xbf16, #tpu.memory_space<vmem>>, vector<64x64xbf16>
    %cst_18 = arith.constant dense<0.000000e+00> : vector<2x64xf32>
    %33 = tpu.matmul %31, %32, %cst_18 {dimension_numbers = #tpu.dot_dimension_numbers<[1], [0], [0], [1], [0, 0, 1, 1], [], []>} : vector<2x64xbf16>, vector<64x64xbf16>, vector<2x64xf32> -> vector<2x64xf32>
    %cst_19 = arith.constant 2.500000e-01 : f32
    %34 = vector.broadcast %cst_19 : f32 to vector<2x64xf32>
    %35 = arith.mulf %33, %34 : vector<2x64xf32>
    %c0_20 = arith.constant 0 : index
    %c0_21 = arith.constant 0 : index
    %36 = vector.load %arg8[%c0_20, %c0_21] : memref<64x64xbf16, #tpu.memory_space<vmem>>, vector<64x64xbf16>
    %cst_22 = arith.constant dense<0.000000e+00> : vector<2x64xf32>
    %37 = tpu.matmul %31, %36, %cst_22 {dimension_numbers = #tpu.dot_dimension_numbers<[1], [0], [0], [1], [0, 0, 1, 1], [], []>} : vector<2x64xbf16>, vector<64x64xbf16>, vector<2x64xf32> -> vector<2x64xf32>
    %c0_23 = arith.constant 0 : index
    %c0_24 = arith.constant 0 : index
    %38 = vector.load %arg9[%c0_23, %c0_24] : memref<64x64xbf16, #tpu.memory_space<vmem>>, vector<64x64xbf16>
    %cst_25 = arith.constant dense<0.000000e+00> : vector<2x64xf32>
    %39 = tpu.matmul %31, %38, %cst_25 {dimension_numbers = #tpu.dot_dimension_numbers<[1], [0], [0], [1], [0, 0, 1, 1], [], []>} : vector<2x64xbf16>, vector<64x64xbf16>, vector<2x64xf32> -> vector<2x64xf32>
    %c0_26 = arith.constant 0 : index
    %c0_27 = arith.constant 0 : index
    %40 = vector.load %arg8[%c0_26, %c0_27] : memref<64x64xbf16, #tpu.memory_space<vmem>>, vector<64x64xbf16>
    %cst_28 = arith.constant dense<0.000000e+00> : vector<32x64xf32>
    %41 = tpu.matmul %2, %40, %cst_28 {dimension_numbers = #tpu.dot_dimension_numbers<[1], [0], [0], [1], [0, 0, 1, 1], [], []>} : vector<32x64xbf16>, vector<64x64xbf16>, vector<32x64xf32> -> vector<32x64xf32>
    %c0_29 = arith.constant 0 : index
    %c0_30 = arith.constant 0 : index
    %42 = vector.load %arg9[%c0_29, %c0_30] : memref<64x64xbf16, #tpu.memory_space<vmem>>, vector<64x64xbf16>
    %cst_31 = arith.constant dense<0.000000e+00> : vector<32x64xf32>
    %43 = tpu.matmul %2, %42, %cst_31 {dimension_numbers = #tpu.dot_dimension_numbers<[1], [0], [0], [1], [0, 0, 1, 1], [], []>} : vector<32x64xbf16>, vector<64x64xbf16>, vector<32x64xf32> -> vector<32x64xf32>
    %c0_32 = arith.constant 0 : index
    %c0_33 = arith.constant 0 : index
    %44 = vector.load %arg14[%c0_32, %c0_33] : memref<64x4xf32, #tpu.memory_space<vmem>>, vector<64x4xf32>
    %c0_34 = arith.constant 0 : index
    %c0_35 = arith.constant 0 : index
    %45 = vector.load %arg15[%c0_34, %c0_35] : memref<4x64xf32, #tpu.memory_space<vmem>>, vector<4x64xf32>
    %c0_36 = arith.constant 0 : index
    %c0_37 = arith.constant 0 : index
    %46 = vector.load %arg16[%c0_36, %c0_37] : memref<32x2xf32, #tpu.memory_space<vmem>>, vector<32x2xf32>
    %c0_38 = arith.constant 0 : index
    %c0_39 = arith.constant 0 : index
    %47 = vector.load %arg17[%c0_38, %c0_39] : memref<2x32xf32, #tpu.memory_space<vmem>>, vector<2x32xf32>
    %cst_40 = arith.constant dense<0.000000e+00> : vector<32x64xf32>
    %48 = tpu.matmul %46, %35, %cst_40 {dimension_numbers = #tpu.dot_dimension_numbers<[1], [0], [0], [1], [0, 0, 1, 1], [], []>} : vector<32x2xf32>, vector<2x64xf32>, vector<32x64xf32> -> vector<32x64xf32>
    %49 = arith.mulf %48, %41 : vector<32x64xf32>
    %cst_41 = arith.constant dense<0.000000e+00> : vector<32x4xf32>
    %50 = tpu.matmul %49, %44, %cst_41 {dimension_numbers = #tpu.dot_dimension_numbers<[1], [0], [0], [1], [0, 0, 1, 1], [], []>} : vector<32x64xf32>, vector<64x4xf32>, vector<32x4xf32> -> vector<32x4xf32>
    %51 = arith.mulf %35, %37 : vector<2x64xf32>
    %cst_42 = arith.constant dense<0.000000e+00> : vector<2x4xf32>
    %52 = tpu.matmul %51, %44, %cst_42 {dimension_numbers = #tpu.dot_dimension_numbers<[1], [0], [0], [1], [0, 0, 1, 1], [], []>} : vector<2x64xf32>, vector<64x4xf32>, vector<2x4xf32> -> vector<2x4xf32>
    %cst_43 = arith.constant dense<0xFF800000> : vector<4xf32>
    %53 = vector.multi_reduction <maximumf>, %50, %cst_43 [0] : vector<32x4xf32> to vector<4xf32>
    %54 = vector.shape_cast %53 : vector<4xf32> to vector<1x4xf32>
    %cst_44 = arith.constant dense<0xFF800000> : vector<4xf32>
    %55 = vector.multi_reduction <maximumf>, %52, %cst_44 [0] : vector<2x4xf32> to vector<4xf32>
    %56 = vector.shape_cast %55 : vector<4xf32> to vector<1x4xf32>
    %57 = arith.maximumf %54, %56 : vector<1x4xf32>
    %58 = vector.broadcast %57 : vector<1x4xf32> to vector<32x4xf32>
    %59 = arith.subf %50, %58 : vector<32x4xf32>
    %60 = math.exp %59 : vector<32x4xf32>
    %61 = vector.broadcast %57 : vector<1x4xf32> to vector<2x4xf32>
    %62 = arith.subf %52, %61 : vector<2x4xf32>
    %63 = math.exp %62 : vector<2x4xf32>
    %cst_45 = arith.constant dense<0.000000e+00> : vector<2x4xf32>
    %64 = tpu.matmul %47, %60, %cst_45 {dimension_numbers = #tpu.dot_dimension_numbers<[1], [0], [0], [1], [0, 0, 1, 1], [], []>} : vector<2x32xf32>, vector<32x4xf32>, vector<2x4xf32> -> vector<2x4xf32>
    %65 = arith.addf %64, %63 : vector<2x4xf32>
    %66 = tpu.reciprocal %65 {approx = true} : vector<2x4xf32> -> vector<2x4xf32>
    %cst_46 = arith.constant dense<0.000000e+00> : vector<32x4xf32>
    %67 = tpu.matmul %46, %66, %cst_46 {dimension_numbers = #tpu.dot_dimension_numbers<[1], [0], [0], [1], [0, 0, 1, 1], [], []>} : vector<32x2xf32>, vector<2x4xf32>, vector<32x4xf32> -> vector<32x4xf32>
    %68 = arith.mulf %60, %67 : vector<32x4xf32>
    %69 = arith.mulf %63, %66 : vector<2x4xf32>
    %cst_47 = arith.constant dense<0.000000e+00> : vector<32x64xf32>
    %70 = tpu.matmul %68, %45, %cst_47 {dimension_numbers = #tpu.dot_dimension_numbers<[1], [0], [0], [1], [0, 0, 1, 1], [], []>} : vector<32x4xf32>, vector<4x64xf32>, vector<32x64xf32> -> vector<32x64xf32>
    %71 = arith.mulf %70, %43 : vector<32x64xf32>
    %cst_48 = arith.constant dense<0.000000e+00> : vector<2x64xf32>
    %72 = tpu.matmul %69, %45, %cst_48 {dimension_numbers = #tpu.dot_dimension_numbers<[1], [0], [0], [1], [0, 0, 1, 1], [], []>} : vector<2x4xf32>, vector<4x64xf32>, vector<2x64xf32> -> vector<2x64xf32>
    %73 = arith.mulf %72, %39 : vector<2x64xf32>
    %cst_49 = arith.constant dense<0.000000e+00> : vector<2x64xf32>
    %74 = tpu.matmul %47, %71, %cst_49 {dimension_numbers = #tpu.dot_dimension_numbers<[1], [0], [0], [1], [0, 0, 1, 1], [], []>} : vector<2x32xf32>, vector<32x64xf32>, vector<2x64xf32> -> vector<2x64xf32>
    %75 = arith.addf %74, %73 : vector<2x64xf32>
    %76 = arith.truncf %75 : vector<2x64xf32> to vector<2x64xbf16>
    %c0_50 = arith.constant 0 : index
    %c0_51 = arith.constant 0 : index
    %77 = vector.load %arg10[%c0_50, %c0_51] : memref<64x64xbf16, #tpu.memory_space<vmem>>, vector<64x64xbf16>
    %cst_52 = arith.constant dense<0.000000e+00> : vector<2x64xf32>
    %78 = tpu.matmul %76, %77, %cst_52 {dimension_numbers = #tpu.dot_dimension_numbers<[1], [0], [0], [1], [0, 0, 1, 1], [], []>} : vector<2x64xbf16>, vector<64x64xbf16>, vector<2x64xf32> -> vector<2x64xf32>
    %c0_53 = arith.constant 0 : index
    %c0_54 = arith.constant 0 : index
    %79 = vector.load %arg11[%c0_53, %c0_54] : memref<1x64xf32, #tpu.memory_space<vmem>>, vector<1x64xf32>
    %80 = vector.broadcast %79 : vector<1x64xf32> to vector<2x64xf32>
    %81 = arith.addf %78, %80 : vector<2x64xf32>
    %82 = arith.truncf %81 : vector<2x64xf32> to vector<2x64xbf16>
    %c0_55 = arith.constant 0 : index
    %c0_56 = arith.constant 0 : index
    %83 = vector.load %arg12[%c0_55, %c0_56] : memref<64x32xbf16, #tpu.memory_space<vmem>>, vector<64x32xbf16>
    %cst_57 = arith.constant dense<0.000000e+00> : vector<2x32xf32>
    %84 = tpu.matmul %82, %83, %cst_57 {dimension_numbers = #tpu.dot_dimension_numbers<[1], [0], [0], [1], [0, 0, 1, 1], [], []>} : vector<2x64xbf16>, vector<64x32xbf16>, vector<2x32xf32> -> vector<2x32xf32>
    %c0_58 = arith.constant 0 : index
    %c0_59 = arith.constant 0 : index
    %85 = vector.load %arg13[%c0_58, %c0_59] : memref<1x32xf32, #tpu.memory_space<vmem>>, vector<1x32xf32>
    %86 = vector.broadcast %85 : vector<1x32xf32> to vector<2x32xf32>
    %87 = arith.addf %84, %86 : vector<2x32xf32>
    %88 = arith.addf %87, %0 : vector<2x32xf32>
    %c0_60 = arith.constant 0 : index
    %c0_61 = arith.constant 0 : index
    %89 = vector.load %arg18[%c0_60, %c0_61] : memref<2x32xf32, #tpu.memory_space<vmem>>, vector<2x32xf32>
    tpu.vector_store %arg18[%c0_60, %c0_61], %88 {strides = array<i32>} : memref<2x32xf32, #tpu.memory_space<vmem>>, vector<2x32xf32>,
    return
  }
  func.func @transform_0(%arg0: i32) -> (i32, i32) {
    %c0_i32 = arith.constant 0 : i32
    %c0_i32_0 = arith.constant 0 : i32
    return %arg0, %c0_i32 : i32, i32
  }
  func.func @transform_1(%arg0: i32) -> (i32, i32) {
    %c0_i32 = arith.constant 0 : i32
    %c0_i32_0 = arith.constant 0 : i32
    return %arg0, %c0_i32 : i32, i32
  }
  func.func @transform_2(%arg0: i32) -> (i32, i32) {
    %c0_i32 = arith.constant 0 : i32
    %c0_i32_0 = arith.constant 0 : i32
    %c0_i32_1 = arith.constant 0 : i32
    return %c0_i32, %c0_i32_0 : i32, i32
  }
  func.func @transform_3(%arg0: i32) -> (i32, i32) {
    %c0_i32 = arith.constant 0 : i32
    %c0_i32_0 = arith.constant 0 : i32
    %c0_i32_1 = arith.constant 0 : i32
    return %c0_i32, %c0_i32_0 : i32, i32
  }
  func.func @transform_4(%arg0: i32) -> (i32, i32) {
    %c0_i32 = arith.constant 0 : i32
    %c0_i32_0 = arith.constant 0 : i32
    %c0_i32_1 = arith.constant 0 : i32
    return %c0_i32, %c0_i32_0 : i32, i32
  }
  func.func @transform_5(%arg0: i32) -> (i32, i32) {
    %c0_i32 = arith.constant 0 : i32
    %c0_i32_0 = arith.constant 0 : i32
    %c0_i32_1 = arith.constant 0 : i32
    return %c0_i32, %c0_i32_0 : i32, i32
  }
  func.func @transform_6(%arg0: i32) -> (i32, i32) {
    %c0_i32 = arith.constant 0 : i32
    %c0_i32_0 = arith.constant 0 : i32
    %c0_i32_1 = arith.constant 0 : i32
    return %c0_i32, %c0_i32_0 : i32, i32
  }
  func.func @transform_7(%arg0: i32) -> (i32, i32) {
    %c0_i32 = arith.constant 0 : i32
    %c0_i32_0 = arith.constant 0 : i32
    %c0_i32_1 = arith.constant 0 : i32
    return %c0_i32, %c0_i32_0 : i32, i32
  }
  func.func @transform_8(%arg0: i32) -> (i32, i32) {
    %c0_i32 = arith.constant 0 : i32
    %c0_i32_0 = arith.constant 0 : i32
    %c0_i32_1 = arith.constant 0 : i32
    return %c0_i32, %c0_i32_0 : i32, i32
  }
  func.func @transform_9(%arg0: i32) -> (i32, i32) {
    %c0_i32 = arith.constant 0 : i32
    %c0_i32_0 = arith.constant 0 : i32
    %c0_i32_1 = arith.constant 0 : i32
    return %c0_i32, %c0_i32_0 : i32, i32
  }
  func.func @transform_10(%arg0: i32) -> (i32, i32) {
    %c0_i32 = arith.constant 0 : i32
    %c0_i32_0 = arith.constant 0 : i32
    %c0_i32_1 = arith.constant 0 : i32
    return %c0_i32, %c0_i32_0 : i32, i32
  }
  func.func @transform_11(%arg0: i32) -> (i32, i32) {
    %c0_i32 = arith.constant 0 : i32
    %c0_i32_0 = arith.constant 0 : i32
    %c0_i32_1 = arith.constant 0 : i32
    return %c0_i32, %c0_i32_0 : i32, i32
  }
  func.func @transform_12(%arg0: i32) -> (i32, i32) {
    %c0_i32 = arith.constant 0 : i32
    %c0_i32_0 = arith.constant 0 : i32
    %c0_i32_1 = arith.constant 0 : i32
    return %c0_i32, %c0_i32_0 : i32, i32
  }
  func.func @transform_13(%arg0: i32) -> (i32, i32) {
    %c0_i32 = arith.constant 0 : i32
    %c0_i32_0 = arith.constant 0 : i32
    %c0_i32_1 = arith.constant 0 : i32
    return %c0_i32, %c0_i32_0 : i32, i32
  }
  func.func @transform_14(%arg0: i32) -> (i32, i32) {
    %c0_i32 = arith.constant 0 : i32
    %c0_i32_0 = arith.constant 0 : i32
    %c0_i32_1 = arith.constant 0 : i32
    return %c0_i32, %c0_i32_0 : i32, i32
  }
  func.func @transform_15(%arg0: i32) -> (i32, i32) {
    %c0_i32 = arith.constant 0 : i32
    %c0_i32_0 = arith.constant 0 : i32
    %c0_i32_1 = arith.constant 0 : i32
    return %c0_i32, %c0_i32_0 : i32, i32
  }
  func.func @transform_16(%arg0: i32) -> (i32, i32) {
    %c0_i32 = arith.constant 0 : i32
    %c0_i32_0 = arith.constant 0 : i32
    %c0_i32_1 = arith.constant 0 : i32
    return %c0_i32, %c0_i32_0 : i32, i32
  }
  func.func @transform_17(%arg0: i32) -> (i32, i32) {
    %c0_i32 = arith.constant 0 : i32
    %c0_i32_0 = arith.constant 0 : i32
    return %arg0, %c0_i32 : i32, i32
  }
}

module attributes {stable_mosaic.version = 11 : i64} {
  func.func @_fused_branch_kernel(%arg0: i32, %arg1: memref<2x64xf32, #tpu.memory_space<vmem>>, %arg2: memref<16x32xf32, #tpu.memory_space<vmem>>, %arg3: memref<64x32xbf16, #tpu.memory_space<vmem>>, %arg4: memref<1x32xf32, #tpu.memory_space<vmem>>, %arg5: memref<1x32xf32, #tpu.memory_space<vmem>>, %arg6: memref<1x32xf32, #tpu.memory_space<vmem>>, %arg7: memref<32x64xbf16, #tpu.memory_space<vmem>>, %arg8: memref<32x64xbf16, #tpu.memory_space<vmem>>, %arg9: memref<32x64xbf16, #tpu.memory_space<vmem>>, %arg10: memref<64x32xbf16, #tpu.memory_space<vmem>>, %arg11: memref<1x32xf32, #tpu.memory_space<vmem>>, %arg12: memref<32x64xbf16, #tpu.memory_space<vmem>>, %arg13: memref<1x64xf32, #tpu.memory_space<vmem>>, %arg14: memref<64x4xf32, #tpu.memory_space<vmem>>, %arg15: memref<4x64xf32, #tpu.memory_space<vmem>>, %arg16: memref<16x2xf32, #tpu.memory_space<vmem>>, %arg17: memref<2x16xf32, #tpu.memory_space<vmem>>, %arg18: memref<2x64xf32, #tpu.memory_space<vmem>>) attributes {dimension_semantics = [#tpu.dimension_semantics<parallel>], iteration_bounds = array<i64: 1>, scalar_prefetch = 0 : i64, scratch_operands = 0 : i64, tpu.core_type = #tpu.core_type<tc>, window_params = [{transform_indices = @transform_0, window_bounds = array<i64: 2, 64>}, {transform_indices = @transform_1, window_bounds = array<i64: 16, 32>}, {pipeline_mode = #tpu.pipeline_mode<synchronous>, transform_indices = @transform_2, window_bounds = array<i64: 64, 32>}, {pipeline_mode = #tpu.pipeline_mode<synchronous>, transform_indices = @transform_3, window_bounds = array<i64: 1, 32>}, {pipeline_mode = #tpu.pipeline_mode<synchronous>, transform_indices = @transform_4, window_bounds = array<i64: 1, 32>}, {pipeline_mode = #tpu.pipeline_mode<synchronous>, transform_indices = @transform_5, window_bounds = array<i64: 1, 32>}, {pipeline_mode = #tpu.pipeline_mode<synchronous>, transform_indices = @transform_6, window_bounds = array<i64: 32, 64>}, {pipeline_mode = #tpu.pipeline_mode<synchronous>, transform_indices = @transform_7, window_bounds = array<i64: 32, 64>}, {pipeline_mode = #tpu.pipeline_mode<synchronous>, transform_indices = @transform_8, window_bounds = array<i64: 32, 64>}, {pipeline_mode = #tpu.pipeline_mode<synchronous>, transform_indices = @transform_9, window_bounds = array<i64: 64, 32>}, {pipeline_mode = #tpu.pipeline_mode<synchronous>, transform_indices = @transform_10, window_bounds = array<i64: 1, 32>}, {pipeline_mode = #tpu.pipeline_mode<synchronous>, transform_indices = @transform_11, window_bounds = array<i64: 32, 64>}, {pipeline_mode = #tpu.pipeline_mode<synchronous>, transform_indices = @transform_12, window_bounds = array<i64: 1, 64>}, {pipeline_mode = #tpu.pipeline_mode<synchronous>, transform_indices = @transform_13, window_bounds = array<i64: 64, 4>}, {pipeline_mode = #tpu.pipeline_mode<synchronous>, transform_indices = @transform_14, window_bounds = array<i64: 4, 64>}, {pipeline_mode = #tpu.pipeline_mode<synchronous>, transform_indices = @transform_15, window_bounds = array<i64: 16, 2>}, {pipeline_mode = #tpu.pipeline_mode<synchronous>, transform_indices = @transform_16, window_bounds = array<i64: 2, 16>}, {transform_indices = @transform_17, window_bounds = array<i64: 2, 64>}]} {
    %c0 = arith.constant 0 : index
    %c0_0 = arith.constant 0 : index
    %0 = vector.load %arg1[%c0, %c0_0] : memref<2x64xf32, #tpu.memory_space<vmem>>, vector<2x64xf32>
    %c0_1 = arith.constant 0 : index
    %c0_2 = arith.constant 0 : index
    %1 = vector.load %arg2[%c0_1, %c0_2] : memref<16x32xf32, #tpu.memory_space<vmem>>, vector<16x32xf32>
    %2 = arith.truncf %1 : vector<16x32xf32> to vector<16x32xbf16>
    %3 = arith.truncf %0 : vector<2x64xf32> to vector<2x64xbf16>
    %c0_3 = arith.constant 0 : index
    %c0_4 = arith.constant 0 : index
    %4 = vector.load %arg3[%c0_3, %c0_4] : memref<64x32xbf16, #tpu.memory_space<vmem>>, vector<64x32xbf16>
    %cst = arith.constant dense<0.000000e+00> : vector<2x32xf32>
    %5 = tpu.matmul %3, %4, %cst {dimension_numbers = #tpu.dot_dimension_numbers<[1], [0], [0], [1], [0, 0, 1, 1], [], []>} : vector<2x64xbf16>, vector<64x32xbf16>, vector<2x32xf32> -> vector<2x32xf32>
    %c0_5 = arith.constant 0 : index
    %c0_6 = arith.constant 0 : index
    %6 = vector.load %arg4[%c0_5, %c0_6] : memref<1x32xf32, #tpu.memory_space<vmem>>, vector<1x32xf32>
    %7 = vector.broadcast %6 : vector<1x32xf32> to vector<2x32xf32>
    %8 = arith.addf %5, %7 : vector<2x32xf32>
    %cst_7 = arith.constant dense<0.000000e+00> : vector<2xf32>
    %9 = vector.multi_reduction <add>, %8, %cst_7 [1] : vector<2x32xf32> to vector<2xf32>
    %10 = vector.shape_cast %9 : vector<2xf32> to vector<2x1xf32>
    %cst_8 = arith.constant 3.200000e+01 : f32
    %11 = vector.broadcast %cst_8 : f32 to vector<2x1xf32>
    %12 = arith.divf %10, %11 : vector<2x1xf32>
    %13 = vector.broadcast %12 : vector<2x1xf32> to vector<2x32xf32>
    %14 = arith.subf %8, %13 : vector<2x32xf32>
    %15 = arith.mulf %14, %14 : vector<2x32xf32>
    %cst_9 = arith.constant dense<0.000000e+00> : vector<2xf32>
    %16 = vector.multi_reduction <add>, %15, %cst_9 [1] : vector<2x32xf32> to vector<2xf32>
    %17 = vector.shape_cast %16 : vector<2xf32> to vector<2x1xf32>
    %cst_10 = arith.constant 3.200000e+01 : f32
    %18 = vector.broadcast %cst_10 : f32 to vector<2x1xf32>
    %19 = arith.divf %17, %18 : vector<2x1xf32>
    %cst_11 = arith.constant 9.99999974E-6 : f32
    %20 = vector.broadcast %cst_11 : f32 to vector<2x1xf32>
    %21 = arith.addf %19, %20 : vector<2x1xf32>
    %22 = math.rsqrt %21 : vector<2x1xf32>
    %23 = vector.broadcast %22 : vector<2x1xf32> to vector<2x32xf32>
    %24 = arith.mulf %14, %23 : vector<2x32xf32>
    %c0_12 = arith.constant 0 : index
    %c0_13 = arith.constant 0 : index
    %25 = vector.load %arg5[%c0_12, %c0_13] : memref<1x32xf32, #tpu.memory_space<vmem>>, vector<1x32xf32>
    %26 = vector.broadcast %25 : vector<1x32xf32> to vector<2x32xf32>
    %27 = arith.mulf %24, %26 : vector<2x32xf32>
    %c0_14 = arith.constant 0 : index
    %c0_15 = arith.constant 0 : index
    %28 = vector.load %arg6[%c0_14, %c0_15] : memref<1x32xf32, #tpu.memory_space<vmem>>, vector<1x32xf32>
    %29 = vector.broadcast %28 : vector<1x32xf32> to vector<2x32xf32>
    %30 = arith.addf %27, %29 : vector<2x32xf32>
    %31 = arith.truncf %30 : vector<2x32xf32> to vector<2x32xbf16>
    %c0_16 = arith.constant 0 : index
    %c0_17 = arith.constant 0 : index
    %32 = vector.load %arg7[%c0_16, %c0_17] : memref<32x64xbf16, #tpu.memory_space<vmem>>, vector<32x64xbf16>
    %cst_18 = arith.constant dense<0.000000e+00> : vector<2x64xf32>
    %33 = tpu.matmul %31, %32, %cst_18 {dimension_numbers = #tpu.dot_dimension_numbers<[1], [0], [0], [1], [0, 0, 1, 1], [], []>} : vector<2x32xbf16>, vector<32x64xbf16>, vector<2x64xf32> -> vector<2x64xf32>
    %cst_19 = arith.constant 2.500000e-01 : f32
    %34 = vector.broadcast %cst_19 : f32 to vector<2x64xf32>
    %35 = arith.mulf %33, %34 : vector<2x64xf32>
    %c0_20 = arith.constant 0 : index
    %c0_21 = arith.constant 0 : index
    %36 = vector.load %arg8[%c0_20, %c0_21] : memref<32x64xbf16, #tpu.memory_space<vmem>>, vector<32x64xbf16>
    %cst_22 = arith.constant dense<0.000000e+00> : vector<2x64xf32>
    %37 = tpu.matmul %31, %36, %cst_22 {dimension_numbers = #tpu.dot_dimension_numbers<[1], [0], [0], [1], [0, 0, 1, 1], [], []>} : vector<2x32xbf16>, vector<32x64xbf16>, vector<2x64xf32> -> vector<2x64xf32>
    %c0_23 = arith.constant 0 : index
    %c0_24 = arith.constant 0 : index
    %38 = vector.load %arg9[%c0_23, %c0_24] : memref<32x64xbf16, #tpu.memory_space<vmem>>, vector<32x64xbf16>
    %cst_25 = arith.constant dense<0.000000e+00> : vector<2x64xf32>
    %39 = tpu.matmul %31, %38, %cst_25 {dimension_numbers = #tpu.dot_dimension_numbers<[1], [0], [0], [1], [0, 0, 1, 1], [], []>} : vector<2x32xbf16>, vector<32x64xbf16>, vector<2x64xf32> -> vector<2x64xf32>
    %c0_26 = arith.constant 0 : index
    %c0_27 = arith.constant 0 : index
    %40 = vector.load %arg8[%c0_26, %c0_27] : memref<32x64xbf16, #tpu.memory_space<vmem>>, vector<32x64xbf16>
    %cst_28 = arith.constant dense<0.000000e+00> : vector<16x64xf32>
    %41 = tpu.matmul %2, %40, %cst_28 {dimension_numbers = #tpu.dot_dimension_numbers<[1], [0], [0], [1], [0, 0, 1, 1], [], []>} : vector<16x32xbf16>, vector<32x64xbf16>, vector<16x64xf32> -> vector<16x64xf32>
    %c0_29 = arith.constant 0 : index
    %c0_30 = arith.constant 0 : index
    %42 = vector.load %arg9[%c0_29, %c0_30] : memref<32x64xbf16, #tpu.memory_space<vmem>>, vector<32x64xbf16>
    %cst_31 = arith.constant dense<0.000000e+00> : vector<16x64xf32>
    %43 = tpu.matmul %2, %42, %cst_31 {dimension_numbers = #tpu.dot_dimension_numbers<[1], [0], [0], [1], [0, 0, 1, 1], [], []>} : vector<16x32xbf16>, vector<32x64xbf16>, vector<16x64xf32> -> vector<16x64xf32>
    %c0_32 = arith.constant 0 : index
    %c0_33 = arith.constant 0 : index
    %44 = vector.load %arg14[%c0_32, %c0_33] : memref<64x4xf32, #tpu.memory_space<vmem>>, vector<64x4xf32>
    %c0_34 = arith.constant 0 : index
    %c0_35 = arith.constant 0 : index
    %45 = vector.load %arg15[%c0_34, %c0_35] : memref<4x64xf32, #tpu.memory_space<vmem>>, vector<4x64xf32>
    %c0_36 = arith.constant 0 : index
    %c0_37 = arith.constant 0 : index
    %46 = vector.load %arg16[%c0_36, %c0_37] : memref<16x2xf32, #tpu.memory_space<vmem>>, vector<16x2xf32>
    %c0_38 = arith.constant 0 : index
    %c0_39 = arith.constant 0 : index
    %47 = vector.load %arg17[%c0_38, %c0_39] : memref<2x16xf32, #tpu.memory_space<vmem>>, vector<2x16xf32>
    %cst_40 = arith.constant dense<0.000000e+00> : vector<16x64xf32>
    %48 = tpu.matmul %46, %35, %cst_40 {dimension_numbers = #tpu.dot_dimension_numbers<[1], [0], [0], [1], [0, 0, 1, 1], [], []>} : vector<16x2xf32>, vector<2x64xf32>, vector<16x64xf32> -> vector<16x64xf32>
    %49 = arith.mulf %48, %41 : vector<16x64xf32>
    %cst_41 = arith.constant dense<0.000000e+00> : vector<16x4xf32>
    %50 = tpu.matmul %49, %44, %cst_41 {dimension_numbers = #tpu.dot_dimension_numbers<[1], [0], [0], [1], [0, 0, 1, 1], [], []>} : vector<16x64xf32>, vector<64x4xf32>, vector<16x4xf32> -> vector<16x4xf32>
    %51 = arith.mulf %35, %37 : vector<2x64xf32>
    %cst_42 = arith.constant dense<0.000000e+00> : vector<2x4xf32>
    %52 = tpu.matmul %51, %44, %cst_42 {dimension_numbers = #tpu.dot_dimension_numbers<[1], [0], [0], [1], [0, 0, 1, 1], [], []>} : vector<2x64xf32>, vector<64x4xf32>, vector<2x4xf32> -> vector<2x4xf32>
    %cst_43 = arith.constant dense<0xFF800000> : vector<4xf32>
    %53 = vector.multi_reduction <maximumf>, %50, %cst_43 [0] : vector<16x4xf32> to vector<4xf32>
    %54 = vector.shape_cast %53 : vector<4xf32> to vector<1x4xf32>
    %cst_44 = arith.constant dense<0xFF800000> : vector<4xf32>
    %55 = vector.multi_reduction <maximumf>, %52, %cst_44 [0] : vector<2x4xf32> to vector<4xf32>
    %56 = vector.shape_cast %55 : vector<4xf32> to vector<1x4xf32>
    %57 = arith.maximumf %54, %56 : vector<1x4xf32>
    %58 = vector.broadcast %57 : vector<1x4xf32> to vector<16x4xf32>
    %59 = arith.subf %50, %58 : vector<16x4xf32>
    %60 = math.exp %59 : vector<16x4xf32>
    %61 = vector.broadcast %57 : vector<1x4xf32> to vector<2x4xf32>
    %62 = arith.subf %52, %61 : vector<2x4xf32>
    %63 = math.exp %62 : vector<2x4xf32>
    %cst_45 = arith.constant dense<0.000000e+00> : vector<2x4xf32>
    %64 = tpu.matmul %47, %60, %cst_45 {dimension_numbers = #tpu.dot_dimension_numbers<[1], [0], [0], [1], [0, 0, 1, 1], [], []>} : vector<2x16xf32>, vector<16x4xf32>, vector<2x4xf32> -> vector<2x4xf32>
    %65 = arith.addf %64, %63 : vector<2x4xf32>
    %66 = tpu.reciprocal %65 {approx = true} : vector<2x4xf32> -> vector<2x4xf32>
    %cst_46 = arith.constant dense<0.000000e+00> : vector<16x4xf32>
    %67 = tpu.matmul %46, %66, %cst_46 {dimension_numbers = #tpu.dot_dimension_numbers<[1], [0], [0], [1], [0, 0, 1, 1], [], []>} : vector<16x2xf32>, vector<2x4xf32>, vector<16x4xf32> -> vector<16x4xf32>
    %68 = arith.mulf %60, %67 : vector<16x4xf32>
    %69 = arith.mulf %63, %66 : vector<2x4xf32>
    %cst_47 = arith.constant dense<0.000000e+00> : vector<16x64xf32>
    %70 = tpu.matmul %68, %45, %cst_47 {dimension_numbers = #tpu.dot_dimension_numbers<[1], [0], [0], [1], [0, 0, 1, 1], [], []>} : vector<16x4xf32>, vector<4x64xf32>, vector<16x64xf32> -> vector<16x64xf32>
    %71 = arith.mulf %70, %43 : vector<16x64xf32>
    %cst_48 = arith.constant dense<0.000000e+00> : vector<2x64xf32>
    %72 = tpu.matmul %69, %45, %cst_48 {dimension_numbers = #tpu.dot_dimension_numbers<[1], [0], [0], [1], [0, 0, 1, 1], [], []>} : vector<2x4xf32>, vector<4x64xf32>, vector<2x64xf32> -> vector<2x64xf32>
    %73 = arith.mulf %72, %39 : vector<2x64xf32>
    %cst_49 = arith.constant dense<0.000000e+00> : vector<2x64xf32>
    %74 = tpu.matmul %47, %71, %cst_49 {dimension_numbers = #tpu.dot_dimension_numbers<[1], [0], [0], [1], [0, 0, 1, 1], [], []>} : vector<2x16xf32>, vector<16x64xf32>, vector<2x64xf32> -> vector<2x64xf32>
    %75 = arith.addf %74, %73 : vector<2x64xf32>
    %76 = arith.truncf %75 : vector<2x64xf32> to vector<2x64xbf16>
    %c0_50 = arith.constant 0 : index
    %c0_51 = arith.constant 0 : index
    %77 = vector.load %arg10[%c0_50, %c0_51] : memref<64x32xbf16, #tpu.memory_space<vmem>>, vector<64x32xbf16>
    %cst_52 = arith.constant dense<0.000000e+00> : vector<2x32xf32>
    %78 = tpu.matmul %76, %77, %cst_52 {dimension_numbers = #tpu.dot_dimension_numbers<[1], [0], [0], [1], [0, 0, 1, 1], [], []>} : vector<2x64xbf16>, vector<64x32xbf16>, vector<2x32xf32> -> vector<2x32xf32>
    %c0_53 = arith.constant 0 : index
    %c0_54 = arith.constant 0 : index
    %79 = vector.load %arg11[%c0_53, %c0_54] : memref<1x32xf32, #tpu.memory_space<vmem>>, vector<1x32xf32>
    %80 = vector.broadcast %79 : vector<1x32xf32> to vector<2x32xf32>
    %81 = arith.addf %78, %80 : vector<2x32xf32>
    %82 = arith.truncf %81 : vector<2x32xf32> to vector<2x32xbf16>
    %c0_55 = arith.constant 0 : index
    %c0_56 = arith.constant 0 : index
    %83 = vector.load %arg12[%c0_55, %c0_56] : memref<32x64xbf16, #tpu.memory_space<vmem>>, vector<32x64xbf16>
    %cst_57 = arith.constant dense<0.000000e+00> : vector<2x64xf32>
    %84 = tpu.matmul %82, %83, %cst_57 {dimension_numbers = #tpu.dot_dimension_numbers<[1], [0], [0], [1], [0, 0, 1, 1], [], []>} : vector<2x32xbf16>, vector<32x64xbf16>, vector<2x64xf32> -> vector<2x64xf32>
    %c0_58 = arith.constant 0 : index
    %c0_59 = arith.constant 0 : index
    %85 = vector.load %arg13[%c0_58, %c0_59] : memref<1x64xf32, #tpu.memory_space<vmem>>, vector<1x64xf32>
    %86 = vector.broadcast %85 : vector<1x64xf32> to vector<2x64xf32>
    %87 = arith.addf %84, %86 : vector<2x64xf32>
    %88 = arith.addf %87, %0 : vector<2x64xf32>
    %c0_60 = arith.constant 0 : index
    %c0_61 = arith.constant 0 : index
    %89 = vector.load %arg18[%c0_60, %c0_61] : memref<2x64xf32, #tpu.memory_space<vmem>>, vector<2x64xf32>
    tpu.vector_store %arg18[%c0_60, %c0_61], %88 {strides = array<i32>} : memref<2x64xf32, #tpu.memory_space<vmem>>, vector<2x64xf32>,
    return
  }
  func.func @transform_0(%arg0: i32) -> (i32, i32) {
    %c0_i32 = arith.constant 0 : i32
    %c0_i32_0 = arith.constant 0 : i32
    return %arg0, %c0_i32 : i32, i32
  }
  func.func @transform_1(%arg0: i32) -> (i32, i32) {
    %c0_i32 = arith.constant 0 : i32
    %c0_i32_0 = arith.constant 0 : i32
    return %arg0, %c0_i32 : i32, i32
  }
  func.func @transform_2(%arg0: i32) -> (i32, i32) {
    %c0_i32 = arith.constant 0 : i32
    %c0_i32_0 = arith.constant 0 : i32
    %c0_i32_1 = arith.constant 0 : i32
    return %c0_i32, %c0_i32_0 : i32, i32
  }
  func.func @transform_3(%arg0: i32) -> (i32, i32) {
    %c0_i32 = arith.constant 0 : i32
    %c0_i32_0 = arith.constant 0 : i32
    %c0_i32_1 = arith.constant 0 : i32
    return %c0_i32, %c0_i32_0 : i32, i32
  }
  func.func @transform_4(%arg0: i32) -> (i32, i32) {
    %c0_i32 = arith.constant 0 : i32
    %c0_i32_0 = arith.constant 0 : i32
    %c0_i32_1 = arith.constant 0 : i32
    return %c0_i32, %c0_i32_0 : i32, i32
  }
  func.func @transform_5(%arg0: i32) -> (i32, i32) {
    %c0_i32 = arith.constant 0 : i32
    %c0_i32_0 = arith.constant 0 : i32
    %c0_i32_1 = arith.constant 0 : i32
    return %c0_i32, %c0_i32_0 : i32, i32
  }
  func.func @transform_6(%arg0: i32) -> (i32, i32) {
    %c0_i32 = arith.constant 0 : i32
    %c0_i32_0 = arith.constant 0 : i32
    %c0_i32_1 = arith.constant 0 : i32
    return %c0_i32, %c0_i32_0 : i32, i32
  }
  func.func @transform_7(%arg0: i32) -> (i32, i32) {
    %c0_i32 = arith.constant 0 : i32
    %c0_i32_0 = arith.constant 0 : i32
    %c0_i32_1 = arith.constant 0 : i32
    return %c0_i32, %c0_i32_0 : i32, i32
  }
  func.func @transform_8(%arg0: i32) -> (i32, i32) {
    %c0_i32 = arith.constant 0 : i32
    %c0_i32_0 = arith.constant 0 : i32
    %c0_i32_1 = arith.constant 0 : i32
    return %c0_i32, %c0_i32_0 : i32, i32
  }
  func.func @transform_9(%arg0: i32) -> (i32, i32) {
    %c0_i32 = arith.constant 0 : i32
    %c0_i32_0 = arith.constant 0 : i32
    %c0_i32_1 = arith.constant 0 : i32
    return %c0_i32, %c0_i32_0 : i32, i32
  }
  func.func @transform_10(%arg0: i32) -> (i32, i32) {
    %c0_i32 = arith.constant 0 : i32
    %c0_i32_0 = arith.constant 0 : i32
    %c0_i32_1 = arith.constant 0 : i32
    return %c0_i32, %c0_i32_0 : i32, i32
  }
  func.func @transform_11(%arg0: i32) -> (i32, i32) {
    %c0_i32 = arith.constant 0 : i32
    %c0_i32_0 = arith.constant 0 : i32
    %c0_i32_1 = arith.constant 0 : i32
    return %c0_i32, %c0_i32_0 : i32, i32
  }
  func.func @transform_12(%arg0: i32) -> (i32, i32) {
    %c0_i32 = arith.constant 0 : i32
    %c0_i32_0 = arith.constant 0 : i32
    %c0_i32_1 = arith.constant 0 : i32
    return %c0_i32, %c0_i32_0 : i32, i32
  }
  func.func @transform_13(%arg0: i32) -> (i32, i32) {
    %c0_i32 = arith.constant 0 : i32
    %c0_i32_0 = arith.constant 0 : i32
    %c0_i32_1 = arith.constant 0 : i32
    return %c0_i32, %c0_i32_0 : i32, i32
  }
  func.func @transform_14(%arg0: i32) -> (i32, i32) {
    %c0_i32 = arith.constant 0 : i32
    %c0_i32_0 = arith.constant 0 : i32
    %c0_i32_1 = arith.constant 0 : i32
    return %c0_i32, %c0_i32_0 : i32, i32
  }
  func.func @transform_15(%arg0: i32) -> (i32, i32) {
    %c0_i32 = arith.constant 0 : i32
    %c0_i32_0 = arith.constant 0 : i32
    %c0_i32_1 = arith.constant 0 : i32
    return %c0_i32, %c0_i32_0 : i32, i32
  }
  func.func @transform_16(%arg0: i32) -> (i32, i32) {
    %c0_i32 = arith.constant 0 : i32
    %c0_i32_0 = arith.constant 0 : i32
    %c0_i32_1 = arith.constant 0 : i32
    return %c0_i32, %c0_i32_0 : i32, i32
  }
  func.func @transform_17(%arg0: i32) -> (i32, i32) {
    %c0_i32 = arith.constant 0 : i32
    %c0_i32_0 = arith.constant 0 : i32
    return %arg0, %c0_i32 : i32, i32
  }
}

</mosaic_0001>

<llo_original>
// kernel: _lambda_.5
$region0: #{_lambda_.5}
  #allocation0 [shape = 'u32[]', space=smem, size = 0x4, offset = 0x4, fixed_abs, tag = 'smem constant byte address 0x4 - core index']
  #allocation1 [shape = 'u32[144,128]{1,0:T(1,128)}', space=vmem, size = 0x12000, scoped, tag = 'internal scratch']
  %s0 = inlined_call_operand.vmem [shape: f32[2,64], index: 0, kind: input, shape index: {}]
  %s1 = inlined_call_operand.vmem [shape: f32[16,32], index: 1, kind: input, shape index: {}]
  %s2 = inlined_call_operand.vmem [shape: bf16[64,32], index: 2, kind: input, shape index: {}]
  %s3 = inlined_call_operand.vmem [shape: f32[1,32], index: 3, kind: input, shape index: {}]
  %s4 = inlined_call_operand.vmem [shape: f32[1,32], index: 4, kind: input, shape index: {}]
  %s5 = inlined_call_operand.vmem [shape: f32[1,32], index: 5, kind: input, shape index: {}]
  %s6 = inlined_call_operand.vmem [shape: bf16[32,64], index: 6, kind: input, shape index: {}]
  %s7 = inlined_call_operand.vmem [shape: bf16[32,64], index: 7, kind: input, shape index: {}]
  %s8 = inlined_call_operand.vmem [shape: bf16[32,64], index: 8, kind: input, shape index: {}]
  %s9 = inlined_call_operand.vmem [shape: bf16[64,32], index: 9, kind: input, shape index: {}]
  %s10 = inlined_call_operand.vmem [shape: f32[1,32], index: 10, kind: input, shape index: {}]
  %s11 = inlined_call_operand.vmem [shape: bf16[32,64], index: 11, kind: input, shape index: {}]
  %s12 = inlined_call_operand.vmem [shape: f32[1,64], index: 12, kind: input, shape index: {}]
  %s13 = inlined_call_operand.vmem [shape: f32[64,4], index: 13, kind: input, shape index: {}]
  %s14 = inlined_call_operand.vmem [shape: f32[4,64], index: 14, kind: input, shape index: {}]
  %s15 = inlined_call_operand.vmem [shape: f32[16,2], index: 15, kind: input, shape index: {}]
  %s16 = inlined_call_operand.vmem [shape: f32[2,16], index: 16, kind: input, shape index: {}]
  %s17 = inlined_call_operand.vmem [shape: f32[2,64], index: 17, kind: output, shape index: {}]
  %s18 = sld [smem:[#allocation0]]
  $region78: #{_lambda_.5} parent=0
    _
  %s20 = ssub.s32 1, %s18
  %s21 = scalar_select 0, %s20, %s18
  // Predicated region
  $region2: #{_lambda_.5} parent=0 // pred_check
    _
  $region3: #{_lambda_.5} parent=0 // pred_check_branch
    %23 = sbr.rel (0) target = $region5
  $region4: #{_lambda_.5} parent=0 // pred_region
    _
  $region5: #{_lambda_.5} parent=0 // pred_fallthru
    _
  // Predicated region
  $region6: #{_lambda_.5} parent=0 // pred_check
    _
  $region7: #{_lambda_.5} parent=0 // pred_check_branch
    %25 = sbr.rel (0) target = $region9
  $region8: #{_lambda_.5} parent=0 // pred_region
    _
  $region9: #{_lambda_.5} parent=0 // pred_fallthru
    _
  // Predicated region
  $region10: #{_lambda_.5} parent=0 // pred_check
    _
  $region11: #{_lambda_.5} parent=0 // pred_check_branch
    %27 = sbr.rel (0) target = $region13
  $region12: #{_lambda_.5} parent=0 // pred_region
    _
  $region13: #{_lambda_.5} parent=0 // pred_fallthru
    _
  // Predicated region
  $region14: #{_lambda_.5} parent=0 // pred_check
    _
  $region15: #{_lambda_.5} parent=0 // pred_check_branch
    %29 = sbr.rel (0) target = $region17
  $region16: #{_lambda_.5} parent=0 // pred_region
    _
  $region17: #{_lambda_.5} parent=0 // pred_fallthru
    _
  // Predicated region
  $region18: #{_lambda_.5} parent=0 // pred_check
    _
  $region19: #{_lambda_.5} parent=0 // pred_check_branch
    %31 = sbr.rel (0) target = $region21
  $region20: #{_lambda_.5} parent=0 // pred_region
    _
  $region21: #{_lambda_.5} parent=0 // pred_fallthru
    _
  // Predicated region
  $region22: #{_lambda_.5} parent=0 // pred_check
    _
  $region23: #{_lambda_.5} parent=0 // pred_check_branch
    %33 = sbr.rel (0) target = $region25
  $region24: #{_lambda_.5} parent=0 // pred_region
    _
  $region25: #{_lambda_.5} parent=0 // pred_fallthru
    _
  // Predicated region
  $region26: #{_lambda_.5} parent=0 // pred_check
    _
  $region27: #{_lambda_.5} parent=0 // pred_check_branch
    %35 = sbr.rel (0) target = $region29
  $region28: #{_lambda_.5} parent=0 // pred_region
    _
  $region29: #{_lambda_.5} parent=0 // pred_fallthru
    _
  // Predicated region
  $region30: #{_lambda_.5} parent=0 // pred_check
    _
  $region31: #{_lambda_.5} parent=0 // pred_check_branch
    %37 = sbr.rel (0) target = $region33
  $region32: #{_lambda_.5} parent=0 // pred_region
    _
  $region33: #{_lambda_.5} parent=0 // pred_fallthru
    _
  // Predicated region
  $region34: #{_lambda_.5} parent=0 // pred_check
    _
  $region35: #{_lambda_.5} parent=0 // pred_check_branch
    %39 = sbr.rel (0) target = $region37
  $region36: #{_lambda_.5} parent=0 // pred_region
    _
  $region37: #{_lambda_.5} parent=0 // pred_fallthru
    _
  // Predicated region
  $region38: #{_lambda_.5} parent=0 // pred_check
    _
  $region39: #{_lambda_.5} parent=0 // pred_check_branch
    %41 = sbr.rel (0) target = $region41
  $region40: #{_lambda_.5} parent=0 // pred_region
    _
  $region41: #{_lambda_.5} parent=0 // pred_fallthru
    _
  // Predicated region
  $region42: #{_lambda_.5} parent=0 // pred_check
    _
  $region43: #{_lambda_.5} parent=0 // pred_check_branch
    %43 = sbr.rel (0) target = $region45
  $region44: #{_lambda_.5} parent=0 // pred_region
    _
  $region45: #{_lambda_.5} parent=0 // pred_fallthru
    _
  // Predicated region
  $region46: #{_lambda_.5} parent=0 // pred_check
    _
  $region47: #{_lambda_.5} parent=0 // pred_check_branch
    %45 = sbr.rel (0) target = $region49
  $region48: #{_lambda_.5} parent=0 // pred_region
    _
  $region49: #{_lambda_.5} parent=0 // pred_fallthru
    _
  // Predicated region
  $region50: #{_lambda_.5} parent=0 // pred_check
    _
  $region51: #{_lambda_.5} parent=0 // pred_check_branch
    %47 = sbr.rel (0) target = $region53
  $region52: #{_lambda_.5} parent=0 // pred_region
    _
  $region53: #{_lambda_.5} parent=0 // pred_fallthru
    _
  // Predicated region
  $region54: #{_lambda_.5} parent=0 // pred_check
    _
  $region55: #{_lambda_.5} parent=0 // pred_check_branch
    %49 = sbr.rel (0) target = $region57
  $region56: #{_lambda_.5} parent=0 // pred_region
    _
  $region57: #{_lambda_.5} parent=0 // pred_fallthru
    _
  // Predicated region
  $region58: #{_lambda_.5} parent=0 // pred_check
    _
  $region59: #{_lambda_.5} parent=0 // pred_check_branch
    %51 = sbr.rel (0) target = $region61
  $region60: #{_lambda_.5} parent=0 // pred_region
    _
  $region61: #{_lambda_.5} parent=0 // pred_fallthru
    _
  // Predicated region
  $region62: #{_lambda_.5} parent=0 // pred_check
    _
  $region63: #{_lambda_.5} parent=0 // pred_check_branch
    %53 = sbr.rel (0) target = $region65
  $region64: #{_lambda_.5} parent=0 // pred_region
    _
  $region65: #{_lambda_.5} parent=0 // pred_fallthru
    _
  // Predicated region
  $region66: #{_lambda_.5} parent=0 // pred_check
    _
  $region67: #{_lambda_.5} parent=0 // pred_check_branch
    %55 = sbr.rel (0) target = $region69
  $region68: #{_lambda_.5} parent=0 // pred_region
    _
  $region69: #{_lambda_.5} parent=0 // pred_fallthru
    _
  %v57 = vld [vmem:[%s0] sm:$0x3]
  %v58 = vld [vmem:[%s1] sm:$0xff]
  %v59 = vld [vmem:[%s1 + $0x8] sm:$0xff]
  %v60 = vpack.c.bf16 %v59, %v58
  %v61 = vpack.c.bf16 %v57, %v57
  %v62 = vld [vmem:[%s2] sm:$0xf]
  %v63 = vld [vmem:[%s2 + $0x4] sm:$0xf]
  %v64 = vld [vmem:[%s2 + $0x8] sm:$0xf]
  %v65 = vld [vmem:[%s2 + $0xc] sm:$0xf]
  %v66 = vld [vmem:[%s2 + $0x10] sm:$0xf]
  %v67 = vld [vmem:[%s2 + $0x14] sm:$0xf]
  %v68 = vld [vmem:[%s2 + $0x18] sm:$0xf]
  %v69 = vld [vmem:[%s2 + $0x1c] sm:$0xf]
  %v70 = vld [vmem:[%s3] sm:$0x1]
  %v72 = vlaneseq
  %v73 = vshrl.u32 %v72, 7
  %v74 = vsub.s32 0, %v73
  %v75 = vrot.slane %v70, %v74
  %v85 = vunpack.c.l.b16 %v62
  %v86 = vunpack.c.l.b16 %v63
  %v87 = vunpack.c.l.b16 %v64
  %v88 = vunpack.c.l.b16 %v65
  %v89 = vunpack.c.l.b16 %v66
  %v90 = vunpack.c.l.b16 %v67
  %v91 = vunpack.c.l.b16 %v68
  %v92 = vunpack.c.l.b16 %v69
  %v93 = vpack.c.b16 %v86, %v85
  %v94 = vpack.c.b16 %v88, %v87
  %v95 = vpack.c.b16 %v90, %v89
  %v96 = vpack.c.b16 %v92, %v91
  %vm101 = vcmask 523264
  %v103 = vsel %vm101, %v61, 0
  %105 = vmatprep.subr.bf16.mxu0 0
  %106 = vmatpush1.bf16.msra.mxu0 %v93
  %107 = vmatprep.subr.bf16.mxu0 0
  %108 = vmatpush1.bf16.msra.mxu0 %v94
  %109 = vmatprep.subr.bf16.mxu0 0
  %110 = vmatpush1.bf16.msra.mxu0 %v95
  %111 = vmatprep.subr.bf16.mxu0 0
  %112 = vmatpush1.bf16.msra.mxu0 %v96
  %113 = vmatprep.subr.bf16.mxu0 0
  %114 = vmatpush1.bf16.msra.mxu0 0
  %115 = vmatprep.subr.bf16.mxu0 0
  %116 = vmatpush1.bf16.msra.mxu0 0
  %117 = vmatprep.subr.bf16.mxu0 0
  %118 = vmatpush1.bf16.msra.mxu0 0
  %119 = vmatprep.subr.bf16.mxu0 0
  %120 = vmatpush1.bf16.msra.mxu0 0
  %121 = vmatprep.subr.bf16.mxu0 0
  %122 = vmatpush1.bf16.msra.mxu0 0
  %123 = vmatprep.subr.bf16.mxu0 0
  %124 = vmatpush1.bf16.msra.mxu0 0
  %125 = vmatprep.subr.bf16.mxu0 0
  %126 = vmatpush1.bf16.msra.mxu0 0
  %127 = vmatprep.subr.bf16.mxu0 0
  %128 = vmatpush1.bf16.msra.mxu0 0
  %129 = vmatprep.subr.bf16.mxu0 0
  %130 = vmatpush1.bf16.msra.mxu0 0
  %131 = vmatprep.subr.bf16.mxu0 0
  %132 = vmatpush1.bf16.msra.mxu0 0
  %133 = vmatprep.subr.bf16.mxu0 0
  %134 = vmatpush1.bf16.msra.mxu0 0
  %135 = vmatprep.subr.bf16.mxu0 0
  %136 = vmatpush1.bf16.msra.mxu0 0
  %137 = vmatprep.mubr.bf16.mxu0 0
  %138 = vmatmul.mubr.bf16.gmra.mrb[0].mxu0 %v103
  %v139 = vpop.f32.mrb[0].mxu0
  %v140 = vadd.f32 %v75, %v139
  %v141 = vpop.f32.mrb[0].mxu0
  %v142 = vpop.f32.mrb[0].mxu0
  %v143 = vpop.f32.mrb[0].mxu0
  %144 = vdwg.mxu0
  %vm145 = vcmask 254976
  %v146 = vsel %vm145, %v140, 0.0
  %147 = vadd.xlane.f32.xlu0 %v146
  %v148 = vpop.xlane.xlu0 %147
  %v149 = vrcp.pop 32.0
  %v150 = vmul.f32 %v148, %v149
  %v151 = vsub.f32 %v140, %v150
  %v152 = vmul.f32 %v151, %v151
  %v153 = vsel %vm145, %v152, 0.0
  %154 = vadd.xlane.f32.xlu0 %v153
  %v155 = vpop.xlane.xlu0 %154
  %v156 = vmul.f32 %v155, %v149
  %v157 = vadd.f32 %v156, 1e-05
  %v158 = vrsqrt.pop %v157
  %v159 = vmul.f32 %v151, %v158
  %v160 = vld [vmem:[%s4] sm:$0x1]
  %v162 = vlaneseq
  %v163 = vshrl.u32 %v162, 7
  %v164 = vsub.s32 0, %v163
  %v165 = vrot.slane %v160, %v164
  %v167 = vmul.f32 %v159, %v165
  %v168 = vld [vmem:[%s5] sm:$0x1]
  %v170 = vlaneseq
  %v171 = vshrl.u32 %v170, 7
  %v172 = vsub.s32 0, %v171
  %v173 = vrot.slane %v168, %v172
  %v175 = vadd.f32 %v167, %v173
  %v176 = vpack.c.bf16 %v175, %v175
  %v177 = vld [vmem:[%s6] sm:$0xf]
  %v178 = vld [vmem:[%s6 + $0x4] sm:$0xf]
  %v179 = vld [vmem:[%s6 + $0x8] sm:$0xf]
  %v180 = vld [vmem:[%s6 + $0xc] sm:$0xf]
  %v185 = vunpack.c.l.b16 %v177
  %v186 = vunpack.c.l.b16 %v178
  %v187 = vunpack.c.l.b16 %v179
  %v188 = vunpack.c.l.b16 %v180
  %v189 = vpack.c.b16 %v186, %v185
  %v190 = vpack.c.b16 %v188, %v187
  %vm193 = vcmask 261120
  %v195 = vsel %vm193, %v176, 0
  %197 = vmatprep.subr.bf16.mxu0 0
  %198 = vmatpush1.bf16.msra.mxu0 %v189
  %199 = vmatprep.subr.bf16.mxu0 0
  %200 = vmatpush1.bf16.msra.mxu0 %v190
  %201 = vmatprep.subr.bf16.mxu0 0
  %202 = vmatpush1.bf16.msra.mxu0 0
  %203 = vmatprep.subr.bf16.mxu0 0
  %204 = vmatpush1.bf16.msra.mxu0 0
  %205 = vmatprep.subr.bf16.mxu0 0
  %206 = vmatpush1.bf16.msra.mxu0 0
  %207 = vmatprep.subr.bf16.mxu0 0
  %208 = vmatpush1.bf16.msra.mxu0 0
  %209 = vmatprep.subr.bf16.mxu0 0
  %210 = vmatpush1.bf16.msra.mxu0 0
  %211 = vmatprep.subr.bf16.mxu0 0
  %212 = vmatpush1.bf16.msra.mxu0 0
  %213 = vmatprep.subr.bf16.mxu0 0
  %214 = vmatpush1.bf16.msra.mxu0 0
  %215 = vmatprep.subr.bf16.mxu0 0
  %216 = vmatpush1.bf16.msra.mxu0 0
  %217 = vmatprep.subr.bf16.mxu0 0
  %218 = vmatpush1.bf16.msra.mxu0 0
  %219 = vmatprep.subr.bf16.mxu0 0
  %220 = vmatpush1.bf16.msra.mxu0 0
  %221 = vmatprep.subr.bf16.mxu0 0
  %222 = vmatpush1.bf16.msra.mxu0 0
  %223 = vmatprep.subr.bf16.mxu0 0
  %224 = vmatpush1.bf16.msra.mxu0 0
  %225 = vmatprep.subr.bf16.mxu0 0
  %226 = vmatpush1.bf16.msra.mxu0 0
  %227 = vmatprep.subr.bf16.mxu0 0
  %228 = vmatpush1.bf16.msra.mxu0 0
  %229 = vmatprep.mubr.bf16.mxu0 0
  %230 = vmatmul.mubr.bf16.gmra.mrb[0].mxu0 %v195
  %v231 = vpop.f32.mrb[0].mxu0
  %v232 = vadd.f32 0.0, %v231
  %v233 = vpop.f32.mrb[0].mxu0
  %v234 = vpop.f32.mrb[0].mxu0
  %v235 = vpop.f32.mrb[0].mxu0
  %236 = vdwg.mxu0
  %v237 = vmul.f32 %v232, 0.25
  %v238 = vld [vmem:[%s7] sm:$0xf]
  %v239 = vld [vmem:[%s7 + $0x4] sm:$0xf]
  %v240 = vld [vmem:[%s7 + $0x8] sm:$0xf]
  %v241 = vld [vmem:[%s7 + $0xc] sm:$0xf]
  %v246 = vunpack.c.l.b16 %v238
  %v247 = vunpack.c.l.b16 %v239
  %v248 = vunpack.c.l.b16 %v240
  %v249 = vunpack.c.l.b16 %v241
  %v250 = vpack.c.b16 %v247, %v246
  %v251 = vpack.c.b16 %v249, %v248
  %254 = vmatprep.subr.bf16.mxu0 0
  %255 = vmatpush1.bf16.msra.mxu0 %v250
  %256 = vmatprep.subr.bf16.mxu0 0
  %257 = vmatpush1.bf16.msra.mxu0 %v251
  %258 = vmatprep.subr.bf16.mxu0 0
  %259 = vmatpush1.bf16.msra.mxu0 0
  %260 = vmatprep.subr.bf16.mxu0 0
  %261 = vmatpush1.bf16.msra.mxu0 0
  %262 = vmatprep.subr.bf16.mxu0 0
  %263 = vmatpush1.bf16.msra.mxu0 0
  %264 = vmatprep.subr.bf16.mxu0 0
  %265 = vmatpush1.bf16.msra.mxu0 0
  %266 = vmatprep.subr.bf16.mxu0 0
  %267 = vmatpush1.bf16.msra.mxu0 0
  %268 = vmatprep.subr.bf16.mxu0 0
  %269 = vmatpush1.bf16.msra.mxu0 0
  %270 = vmatprep.subr.bf16.mxu0 0
  %271 = vmatpush1.bf16.msra.mxu0 0
  %272 = vmatprep.subr.bf16.mxu0 0
  %273 = vmatpush1.bf16.msra.mxu0 0
  %274 = vmatprep.subr.bf16.mxu0 0
  %275 = vmatpush1.bf16.msra.mxu0 0
  %276 = vmatprep.subr.bf16.mxu0 0
  %277 = vmatpush1.bf16.msra.mxu0 0
  %278 = vmatprep.subr.bf16.mxu0 0
  %279 = vmatpush1.bf16.msra.mxu0 0
  %280 = vmatprep.subr.bf16.mxu0 0
  %281 = vmatpush1.bf16.msra.mxu0 0
  %282 = vmatprep.subr.bf16.mxu0 0
  %283 = vmatpush1.bf16.msra.mxu0 0
  %284 = vmatprep.subr.bf16.mxu0 0
  %285 = vmatpush1.bf16.msra.mxu0 0
  %286 = vmatprep.mubr.bf16.mxu0 0
  %287 = vmatmul.mubr.bf16.gmra.mrb[0].mxu0 %v195
  %v288 = vpop.f32.mrb[0].mxu0
  %v289 = vadd.f32 0.0, %v288
  %v290 = vpop.f32.mrb[0].mxu0
  %v291 = vpop.f32.mrb[0].mxu0
  %v292 = vpop.f32.mrb[0].mxu0
  %293 = vdwg.mxu0
  %v294 = vld [vmem:[%s8] sm:$0xf]
  %v295 = vld [vmem:[%s8 + $0x4] sm:$0xf]
  %v296 = vld [vmem:[%s8 + $0x8] sm:$0xf]
  %v297 = vld [vmem:[%s8 + $0xc] sm:$0xf]
  %v302 = vunpack.c.l.b16 %v294
  %v303 = vunpack.c.l.b16 %v295
  %v304 = vunpack.c.l.b16 %v296
  %v305 = vunpack.c.l.b16 %v297
  %v306 = vpack.c.b16 %v303, %v302
  %v307 = vpack.c.b16 %v305, %v304
  %310 = vmatprep.subr.bf16.mxu0 0
  %311 = vmatpush1.bf16.msra.mxu0 %v306
  %312 = vmatprep.subr.bf16.mxu0 0
  %313 = vmatpush1.bf16.msra.mxu0 %v307
  %314 = vmatprep.subr.bf16.mxu0 0
  %315 = vmatpush1.bf16.msra.mxu0 0
  %316 = vmatprep.subr.bf16.mxu0 0
  %317 = vmatpush1.bf16.msra.mxu0 0
  %318 = vmatprep.subr.bf16.mxu0 0
  %319 = vmatpush1.bf16.msra.mxu0 0
  %320 = vmatprep.subr.bf16.mxu0 0
  %321 = vmatpush1.bf16.msra.mxu0 0
  %322 = vmatprep.subr.bf16.mxu0 0
  %323 = vmatpush1.bf16.msra.mxu0 0
  %324 = vmatprep.subr.bf16.mxu0 0
  %325 = vmatpush1.bf16.msra.mxu0 0
  %326 = vmatprep.subr.bf16.mxu0 0
  %327 = vmatpush1.bf16.msra.mxu0 0
  %328 = vmatprep.subr.bf16.mxu0 0
  %329 = vmatpush1.bf16.msra.mxu0 0
  %330 = vmatprep.subr.bf16.mxu0 0
  %331 = vmatpush1.bf16.msra.mxu0 0
  %332 = vmatprep.subr.bf16.mxu0 0
  %333 = vmatpush1.bf16.msra.mxu0 0
  %334 = vmatprep.subr.bf16.mxu0 0
  %335 = vmatpush1.bf16.msra.mxu0 0
  %336 = vmatprep.subr.bf16.mxu0 0
  %337 = vmatpush1.bf16.msra.mxu0 0
  %338 = vmatprep.subr.bf16.mxu0 0
  %339 = vmatpush1.bf16.msra.mxu0 0
  %340 = vmatprep.subr.bf16.mxu0 0
  %341 = vmatpush1.bf16.msra.mxu0 0
  %342 = vmatprep.mubr.bf16.mxu0 0
  %343 = vmatmul.mubr.bf16.gmra.mrb[0].mxu0 %v195
  %v344 = vpop.f32.mrb[0].mxu0
  %v345 = vadd.f32 0.0, %v344
  %v346 = vpop.f32.mrb[0].mxu0
  %v347 = vpop.f32.mrb[0].mxu0
  %v348 = vpop.f32.mrb[0].mxu0
  %349 = vdwg.mxu0
  %v351 = vsel %vm193, %v60, 0
  %353 = vmatprep.subr.bf16.mxu0 0
  %354 = vmatpush1.bf16.msra.mxu0 %v250
  %355 = vmatprep.subr.bf16.mxu0 0
  %356 = vmatpush1.bf16.msra.mxu0 %v251
  %357 = vmatprep.subr.bf16.mxu0 0
  %358 = vmatpush1.bf16.msra.mxu0 0
  %359 = vmatprep.subr.bf16.mxu0 0
  %360 = vmatpush1.bf16.msra.mxu0 0
  %361 = vmatprep.subr.bf16.mxu0 0
  %362 = vmatpush1.bf16.msra.mxu0 0
  %363 = vmatprep.subr.bf16.mxu0 0
  %364 = vmatpush1.bf16.msra.mxu0 0
  %365 = vmatprep.subr.bf16.mxu0 0
  %366 = vmatpush1.bf16.msra.mxu0 0
  %367 = vmatprep.subr.bf16.mxu0 0
  %368 = vmatpush1.bf16.msra.mxu0 0
  %369 = vmatprep.subr.bf16.mxu0 0
  %370 = vmatpush1.bf16.msra.mxu0 0
  %371 = vmatprep.subr.bf16.mxu0 0
  %372 = vmatpush1.bf16.msra.mxu0 0
  %373 = vmatprep.subr.bf16.mxu0 0
  %374 = vmatpush1.bf16.msra.mxu0 0
  %375 = vmatprep.subr.bf16.mxu0 0
  %376 = vmatpush1.bf16.msra.mxu0 0
  %377 = vmatprep.subr.bf16.mxu0 0
  %378 = vmatpush1.bf16.msra.mxu0 0
  %379 = vmatprep.subr.bf16.mxu0 0
  %380 = vmatpush1.bf16.msra.mxu0 0
  %381 = vmatprep.subr.bf16.mxu0 0
  %382 = vmatpush1.bf16.msra.mxu0 0
  %383 = vmatprep.subr.bf16.mxu0 0
  %384 = vmatpush1.bf16.msra.mxu0 0
  %385 = vmatprep.mubr.bf16.mxu0 0
  %386 = vmatmul.mubr.bf16.gmra.mrb[0].mxu0 %v351
  %v387 = vpop.f32.mrb[0].mxu0
  %v388 = vadd.f32 0.0, %v387
  %v389 = vpop.f32.mrb[0].mxu0
  %v390 = vpop.f32.mrb[0].mxu0
  %v391 = vadd.f32 0.0, %v390
  %v392 = vpop.f32.mrb[0].mxu0
  %393 = vdwg.mxu0
  %394 = vmatprep.subr.bf16.mxu0 0
  %395 = vmatpush1.bf16.msra.mxu0 %v306
  %396 = vmatprep.subr.bf16.mxu0 0
  %397 = vmatpush1.bf16.msra.mxu0 %v307
  %398 = vmatprep.subr.bf16.mxu0 0
  %399 = vmatpush1.bf16.msra.mxu0 0
  %400 = vmatprep.subr.bf16.mxu0 0
  %401 = vmatpush1.bf16.msra.mxu0 0
  %402 = vmatprep.subr.bf16.mxu0 0
  %403 = vmatpush1.bf16.msra.mxu0 0
  %404 = vmatprep.subr.bf16.mxu0 0
  %405 = vmatpush1.bf16.msra.mxu0 0
  %406 = vmatprep.subr.bf16.mxu0 0
  %407 = vmatpush1.bf16.msra.mxu0 0
  %408 = vmatprep.subr.bf16.mxu0 0
  %409 = vmatpush1.bf16.msra.mxu0 0
  %410 = vmatprep.subr.bf16.mxu0 0
  %411 = vmatpush1.bf16.msra.mxu0 0
  %412 = vmatprep.subr.bf16.mxu0 0
  %413 = vmatpush1.bf16.msra.mxu0 0
  %414 = vmatprep.subr.bf16.mxu0 0
  %415 = vmatpush1.bf16.msra.mxu0 0
  %416 = vmatprep.subr.bf16.mxu0 0
  %417 = vmatpush1.bf16.msra.mxu0 0
  %418 = vmatprep.subr.bf16.mxu0 0
  %419 = vmatpush1.bf16.msra.mxu0 0
  %420 = vmatprep.subr.bf16.mxu0 0
  %421 = vmatpush1.bf16.msra.mxu0 0
  %422 = vmatprep.subr.bf16.mxu0 0
  %423 = vmatpush1.bf16.msra.mxu0 0
  %424 = vmatprep.subr.bf16.mxu0 0
  %425 = vmatpush1.bf16.msra.mxu0 0
  %426 = vmatprep.mubr.bf16.mxu0 0
  %427 = vmatmul.mubr.bf16.gmra.mrb[0].mxu0 %v351
  %v428 = vpop.f32.mrb[0].mxu0
  %v429 = vadd.f32 0.0, %v428
  %v430 = vpop.f32.mrb[0].mxu0
  %v431 = vpop.f32.mrb[0].mxu0
  %v432 = vadd.f32 0.0, %v431
  %v433 = vpop.f32.mrb[0].mxu0
  %434 = vdwg.mxu0
  %v435 = vld [vmem:[%s13] sm:$0xff]
  %v436 = vld [vmem:[%s13 + $0x8] sm:$0xff]
  %v437 = vld [vmem:[%s13 + $0x10] sm:$0xff]
  %v438 = vld [vmem:[%s13 + $0x18] sm:$0xff]
  %v439 = vld [vmem:[%s13 + $0x20] sm:$0xff]
  %v440 = vld [vmem:[%s13 + $0x28] sm:$0xff]
  %v441 = vld [vmem:[%s13 + $0x30] sm:$0xff]
  %v442 = vld [vmem:[%s13 + $0x38] sm:$0xff]
  %v443 = vld [vmem:[%s14] sm:$0xf]
  %v444 = vld [vmem:[%s15] sm:$0xff]
  %v445 = vld [vmem:[%s15 + $0x8] sm:$0xff]
  %v446 = vld [vmem:[%s16] sm:$0x3]
  %vm447 = vcmask 15360
  %v449 = vsel %vm447, %v444, 0
  %v452 = vsel %vm447, %v445, 0
  %vm454 = vcmask 1041408
  %v456 = vsel %vm454, %v237, 0
  %458 = vmatprep.subr.mxu0 0.0
  %459 = vmatpush1.msra.mxu0 %v456
  %460 = vmatprep.subr.mxu0 0.0
  %461 = vmatpush1.msra.mxu0 0.0
  %462 = vmatprep.subr.mxu0 0.0
  %463 = vmatpush1.msra.mxu0 0.0
  %464 = vmatprep.subr.mxu0 0.0
  %465 = vmatpush1.msra.mxu0 0.0
  %466 = vmatprep.subr.mxu0 0.0
  %467 = vmatpush1.msra.mxu0 0.0
  %468 = vmatprep.subr.mxu0 0.0
  %469 = vmatpush1.msra.mxu0 0.0
  %470 = vmatprep.subr.mxu0 0.0
  %471 = vmatpush1.msra.mxu0 0.0
  %472 = vmatprep.subr.mxu0 0.0
  %473 = vmatpush1.msra.mxu0 0.0
  %474 = vmatprep.subr.mxu0 0.0
  %475 = vmatpush1.msra.mxu0 0.0
  %476 = vmatprep.subr.mxu0 0.0
  %477 = vmatpush1.msra.mxu0 0.0
  %478 = vmatprep.subr.mxu0 0.0
  %479 = vmatpush1.msra.mxu0 0.0
  %480 = vmatprep.subr.mxu0 0.0
  %481 = vmatpush1.msra.mxu0 0.0
  %482 = vmatprep.subr.mxu0 0.0
  %483 = vmatpush1.msra.mxu0 0.0
  %484 = vmatprep.subr.mxu0 0.0
  %485 = vmatpush1.msra.mxu0 0.0
  %486 = vmatprep.subr.mxu0 0.0
  %487 = vmatpush1.msra.mxu0 0.0
  %488 = vmatprep.subr.mxu0 0.0
  %489 = vmatpush1.msra.mxu0 0.0
  %490 = vmatprep.subr.mxu0 0.0
  %491 = vmatpush1.msra.mxu0 0.0
  %492 = vmatprep.subr.mxu0 0.0
  %493 = vmatpush1.msra.mxu0 0.0
  %494 = vmatprep.subr.mxu0 0.0
  %495 = vmatpush1.msra.mxu0 0.0
  %496 = vmatprep.subr.mxu0 0.0
  %497 = vmatpush1.msra.mxu0 0.0
  %498 = vmatprep.subr.mxu0 0.0
  %499 = vmatpush1.msra.mxu0 0.0
  %500 = vmatprep.subr.mxu0 0.0
  %501 = vmatpush1.msra.mxu0 0.0
  %502 = vmatprep.subr.mxu0 0.0
  %503 = vmatpush1.msra.mxu0 0.0
  %504 = vmatprep.subr.mxu0 0.0
  %505 = vmatpush1.msra.mxu0 0.0
  %506 = vmatprep.subr.mxu0 0.0
  %507 = vmatpush1.msra.mxu0 0.0
  %508 = vmatprep.subr.mxu0 0.0
  %509 = vmatpush1.msra.mxu0 0.0
  %510 = vmatprep.subr.mxu0 0.0
  %511 = vmatpush1.msra.mxu0 0.0
  %512 = vmatprep.subr.mxu0 0.0
  %513 = vmatpush1.msra.mxu0 0.0
  %514 = vmatprep.subr.mxu0 0.0
  %515 = vmatpush1.msra.mxu0 0.0
  %516 = vmatprep.subr.mxu0 0.0
  %517 = vmatpush1.msra.mxu0 0.0
  %518 = vmatprep.subr.mxu0 0.0
  %519 = vmatpush1.msra.mxu0 0.0
  %520 = vmatprep.subr.mxu0 0.0
  %521 = vmatpush1.msra.mxu0 0.0
  %522 = vmatprep.mubr.f32.mxu0 0.0
  %523 = vmatmul.mubr.f32.gmra.mrb[0].mxu0 %v449
  %v524 = vpop.f32.mrb[0].mxu0
  %v525 = vadd.f32 0.0, %v524
  %v526 = vpop.f32.mrb[0].mxu0
  %527 = vmatprep.mubr.f32.mxu0 0.0
  %528 = vmatmul.mubr.f32.gmra.mrb[0].mxu0 %v452
  %v529 = vpop.f32.mrb[0].mxu0
  %v530 = vadd.f32 0.0, %v529
  %v531 = vpop.f32.mrb[0].mxu0
  %532 = vdwg.mxu0
  %v533 = vmul.f32 %v525, %v388
  %v534 = vmul.f32 %v530, %v391
  %v536 = vsel %vm101, %v533, 0
  %v539 = vsel %vm101, %v534, 0
  %541 = vmatprep.subr.mxu0 0.0
  %542 = vmatpush1.msra.mxu0 %v435
  %543 = vmatprep.subr.mxu0 0.0
  %544 = vmatpush1.msra.mxu0 %v436
  %545 = vmatprep.subr.mxu0 0.0
  %546 = vmatpush1.msra.mxu0 %v437
  %547 = vmatprep.subr.mxu0 0.0
  %548 = vmatpush1.msra.mxu0 %v438
  %549 = vmatprep.subr.mxu0 0.0
  %550 = vmatpush1.msra.mxu0 %v439
  %551 = vmatprep.subr.mxu0 0.0
  %552 = vmatpush1.msra.mxu0 %v440
  %553 = vmatprep.subr.mxu0 0.0
  %554 = vmatpush1.msra.mxu0 %v441
  %555 = vmatprep.subr.mxu0 0.0
  %556 = vmatpush1.msra.mxu0 %v442
  %557 = vmatprep.subr.mxu0 0.0
  %558 = vmatpush1.msra.mxu0 0.0
  %559 = vmatprep.subr.mxu0 0.0
  %560 = vmatpush1.msra.mxu0 0.0
  %561 = vmatprep.subr.mxu0 0.0
  %562 = vmatpush1.msra.mxu0 0.0
  %563 = vmatprep.subr.mxu0 0.0
  %564 = vmatpush1.msra.mxu0 0.0
  %565 = vmatprep.subr.mxu0 0.0
  %566 = vmatpush1.msra.mxu0 0.0
  %567 = vmatprep.subr.mxu0 0.0
  %568 = vmatpush1.msra.mxu0 0.0
  %569 = vmatprep.subr.mxu0 0.0
  %570 = vmatpush1.msra.mxu0 0.0
  %571 = vmatprep.subr.mxu0 0.0
  %572 = vmatpush1.msra.mxu0 0.0
  %573 = vmatprep.subr.mxu0 0.0
  %574 = vmatpush1.msra.mxu0 0.0
  %575 = vmatprep.subr.mxu0 0.0
  %576 = vmatpush1.msra.mxu0 0.0
  %577 = vmatprep.subr.mxu0 0.0
  %578 = vmatpush1.msra.mxu0 0.0
  %579 = vmatprep.subr.mxu0 0.0
  %580 = vmatpush1.msra.mxu0 0.0
  %581 = vmatprep.subr.mxu0 0.0
  %582 = vmatpush1.msra.mxu0 0.0
  %583 = vmatprep.subr.mxu0 0.0
  %584 = vmatpush1.msra.mxu0 0.0
  %585 = vmatprep.subr.mxu0 0.0
  %586 = vmatpush1.msra.mxu0 0.0
  %587 = vmatprep.subr.mxu0 0.0
  %588 = vmatpush1.msra.mxu0 0.0
  %589 = vmatprep.subr.mxu0 0.0
  %590 = vmatpush1.msra.mxu0 0.0
  %591 = vmatprep.subr.mxu0 0.0
  %592 = vmatpush1.msra.mxu0 0.0
  %593 = vmatprep.subr.mxu0 0.0
  %594 = vmatpush1.msra.mxu0 0.0
  %595 = vmatprep.subr.mxu0 0.0
  %596 = vmatpush1.msra.mxu0 0.0
  %597 = vmatprep.subr.mxu0 0.0
  %598 = vmatpush1.msra.mxu0 0.0
  %599 = vmatprep.subr.mxu0 0.0
  %600 = vmatpush1.msra.mxu0 0.0
  %601 = vmatprep.subr.mxu0 0.0
  %602 = vmatpush1.msra.mxu0 0.0
  %603 = vmatprep.subr.mxu0 0.0
  %604 = vmatpush1.msra.mxu0 0.0
  %605 = vmatprep.mubr.f32.mxu0 0.0
  %606 = vmatmul.mubr.f32.gmra.mrb[0].mxu0 %v536
  %v607 = vpop.f32.mrb[0].mxu0
  %v608 = vadd.f32 0.0, %v607
  %v609 = vpop.f32.mrb[0].mxu0
  %610 = vmatprep.mubr.f32.mxu0 0.0
  %611 = vmatmul.mubr.f32.gmra.mrb[0].mxu0 %v539
  %v612 = vpop.f32.mrb[0].mxu0
  %v613 = vadd.f32 0.0, %v612
  %v614 = vpop.f32.mrb[0].mxu0
  %615 = vdwg.mxu0
  %v616 = vmul.f32 %v237, %v289
  %v618 = vsel %vm101, %v616, 0
  %620 = vmatprep.subr.mxu0 0.0
  %621 = vmatpush1.msra.mxu0 %v435
  %622 = vmatprep.subr.mxu0 0.0
  %623 = vmatpush1.msra.mxu0 %v436
  %624 = vmatprep.subr.mxu0 0.0
  %625 = vmatpush1.msra.mxu0 %v437
  %626 = vmatprep.subr.mxu0 0.0
  %627 = vmatpush1.msra.mxu0 %v438
  %628 = vmatprep.subr.mxu0 0.0
  %629 = vmatpush1.msra.mxu0 %v439
  %630 = vmatprep.subr.mxu0 0.0
  %631 = vmatpush1.msra.mxu0 %v440
  %632 = vmatprep.subr.mxu0 0.0
  %633 = vmatpush1.msra.mxu0 %v441
  %634 = vmatprep.subr.mxu0 0.0
  %635 = vmatpush1.msra.mxu0 %v442
  %636 = vmatprep.subr.mxu0 0.0
  %637 = vmatpush1.msra.mxu0 0.0
  %638 = vmatprep.subr.mxu0 0.0
  %639 = vmatpush1.msra.mxu0 0.0
  %640 = vmatprep.subr.mxu0 0.0
  %641 = vmatpush1.msra.mxu0 0.0
  %642 = vmatprep.subr.mxu0 0.0
  %643 = vmatpush1.msra.mxu0 0.0
  %644 = vmatprep.subr.mxu0 0.0
  %645 = vmatpush1.msra.mxu0 0.0
  %646 = vmatprep.subr.mxu0 0.0
  %647 = vmatpush1.msra.mxu0 0.0
  %648 = vmatprep.subr.mxu0 0.0
  %649 = vmatpush1.msra.mxu0 0.0
  %650 = vmatprep.subr.mxu0 0.0
  %651 = vmatpush1.msra.mxu0 0.0
  %652 = vmatprep.subr.mxu0 0.0
  %653 = vmatpush1.msra.mxu0 0.0
  %654 = vmatprep.subr.mxu0 0.0
  %655 = vmatpush1.msra.mxu0 0.0
  %656 = vmatprep.subr.mxu0 0.0
  %657 = vmatpush1.msra.mxu0 0.0
  %658 = vmatprep.subr.mxu0 0.0
  %659 = vmatpush1.msra.mxu0 0.0
  %660 = vmatprep.subr.mxu0 0.0
  %661 = vmatpush1.msra.mxu0 0.0
  %662 = vmatprep.subr.mxu0 0.0
  %663 = vmatpush1.msra.mxu0 0.0
  %664 = vmatprep.subr.mxu0 0.0
  %665 = vmatpush1.msra.mxu0 0.0
  %666 = vmatprep.subr.mxu0 0.0
  %667 = vmatpush1.msra.mxu0 0.0
  %668 = vmatprep.subr.mxu0 0.0
  %669 = vmatpush1.msra.mxu0 0.0
  %670 = vmatprep.subr.mxu0 0.0
  %671 = vmatpush1.msra.mxu0 0.0
  %672 = vmatprep.subr.mxu0 0.0
  %673 = vmatpush1.msra.mxu0 0.0
  %674 = vmatprep.subr.mxu0 0.0
  %675 = vmatpush1.msra.mxu0 0.0
  %676 = vmatprep.subr.mxu0 0.0
  %677 = vmatpush1.msra.mxu0 0.0
  %678 = vmatprep.subr.mxu0 0.0
  %679 = vmatpush1.msra.mxu0 0.0
  %680 = vmatprep.subr.mxu0 0.0
  %681 = vmatpush1.msra.mxu0 0.0
  %682 = vmatprep.subr.mxu0 0.0
  %683 = vmatpush1.msra.mxu0 0.0
  %684 = vmatprep.mubr.f32.mxu0 0.0
  %685 = vmatmul.mubr.f32.gmra.mrb[0].mxu0 %v618
  %v686 = vpop.f32.mrb[0].mxu0
  %v687 = vadd.f32 0.0, %v686
  %v688 = vpop.f32.mrb[0].mxu0
  %689 = vdwg.mxu0
  %vm690 = vcmask 31744
  %v691 = vsel %vm690, %v608, -inf
  %v692 = vsel %vm690, %v613, -inf
  %v693 = vmax.f32 %v691, %v692
  %v694 = vrot.slane %v693, 4
  %v695 = vmax.f32 %v693, %v694
  %v696 = vrot.slane %v695, 2
  %v697 = vmax.f32 %v695, %v696
  %v698 = vrot.slane %v697, 1
  %v699 = vmax.f32 %v697, %v698
  %vm700 = vcmask 25600
  %v701 = vsel %vm700, %v687, -inf
  %v702 = vrot.slane %v701, 4
  %v703 = vmax.f32 %v701, %v702
  %v704 = vrot.slane %v703, 2
  %v705 = vmax.f32 %v703, %v704
  %v706 = vrot.slane %v705, 1
  %v707 = vmax.f32 %v705, %v706
  %v708 = vmax.f32 %v699, %v707
  %v709 = vsub.f32 %v608, %v708
  %v710 = vsub.f32 %v613, %v708
  %v711 = vmul.f32 %v709, 1.442695
  %v712 = vpow.pop %v711
  %v713 = vmul.f32 %v710, 1.442695
  %v714 = vpow.pop %v713
  %v715 = vsub.f32 %v687, %v708
  %v716 = vmul.f32 %v715, 1.442695
  %v717 = vpow.pop %v716
  %vm718 = vcmask 130048
  %v720 = vsel %vm718, %v446, 0
  %722 = vmatprep.subr.mxu0 0.0
  %723 = vmatpush1.msra.mxu0 %v712
  %724 = vmatprep.subr.mxu0 0.0
  %725 = vmatpush1.msra.mxu0 %v714
  %726 = vmatprep.subr.mxu0 0.0
  %727 = vmatpush1.msra.mxu0 0.0
  %728 = vmatprep.subr.mxu0 0.0
  %729 = vmatpush1.msra.mxu0 0.0
  %730 = vmatprep.subr.mxu0 0.0
  %731 = vmatpush1.msra.mxu0 0.0
  %732 = vmatprep.subr.mxu0 0.0
  %733 = vmatpush1.msra.mxu0 0.0
  %734 = vmatprep.subr.mxu0 0.0
  %735 = vmatpush1.msra.mxu0 0.0
  %736 = vmatprep.subr.mxu0 0.0
  %737 = vmatpush1.msra.mxu0 0.0
  %738 = vmatprep.subr.mxu0 0.0
  %739 = vmatpush1.msra.mxu0 0.0
  %740 = vmatprep.subr.mxu0 0.0
  %741 = vmatpush1.msra.mxu0 0.0
  %742 = vmatprep.subr.mxu0 0.0
  %743 = vmatpush1.msra.mxu0 0.0
  %744 = vmatprep.subr.mxu0 0.0
  %745 = vmatpush1.msra.mxu0 0.0
  %746 = vmatprep.subr.mxu0 0.0
  %747 = vmatpush1.msra.mxu0 0.0
  %748 = vmatprep.subr.mxu0 0.0
  %749 = vmatpush1.msra.mxu0 0.0
  %750 = vmatprep.subr.mxu0 0.0
  %751 = vmatpush1.msra.mxu0 0.0
  %752 = vmatprep.subr.mxu0 0.0
  %753 = vmatpush1.msra.mxu0 0.0
  %754 = vmatprep.subr.mxu0 0.0
  %755 = vmatpush1.msra.mxu0 0.0
  %756 = vmatprep.subr.mxu0 0.0
  %757 = vmatpush1.msra.mxu0 0.0
  %758 = vmatprep.subr.mxu0 0.0
  %759 = vmatpush1.msra.mxu0 0.0
  %760 = vmatprep.subr.mxu0 0.0
  %761 = vmatpush1.msra.mxu0 0.0
  %762 = vmatprep.subr.mxu0 0.0
  %763 = vmatpush1.msra.mxu0 0.0
  %764 = vmatprep.subr.mxu0 0.0
  %765 = vmatpush1.msra.mxu0 0.0
  %766 = vmatprep.subr.mxu0 0.0
  %767 = vmatpush1.msra.mxu0 0.0
  %768 = vmatprep.subr.mxu0 0.0
  %769 = vmatpush1.msra.mxu0 0.0
  %770 = vmatprep.subr.mxu0 0.0
  %771 = vmatpush1.msra.mxu0 0.0
  %772 = vmatprep.subr.mxu0 0.0
  %773 = vmatpush1.msra.mxu0 0.0
  %774 = vmatprep.subr.mxu0 0.0
  %775 = vmatpush1.msra.mxu0 0.0
  %776 = vmatprep.subr.mxu0 0.0
  %777 = vmatpush1.msra.mxu0 0.0
  %778 = vmatprep.subr.mxu0 0.0
  %779 = vmatpush1.msra.mxu0 0.0
  %780 = vmatprep.subr.mxu0 0.0
  %781 = vmatpush1.msra.mxu0 0.0
  %782 = vmatprep.subr.mxu0 0.0
  %783 = vmatpush1.msra.mxu0 0.0
  %784 = vmatprep.subr.mxu0 0.0
  %785 = vmatpush1.msra.mxu0 0.0
  %786 = vmatprep.mubr.f32.mxu0 0.0
  %787 = vmatmul.mubr.f32.gmra.mrb[0].mxu0 %v720
  %v788 = vpop.f32.mrb[0].mxu0
  %v789 = vadd.f32 %v717, %v788
  %v790 = vpop.f32.mrb[0].mxu0
  %791 = vdwg.mxu0
  %v792 = vrcp.pop %v789
  %v794 = vsel %vm454, %v792, 0
  %796 = vmatprep.subr.mxu0 0.0
  %797 = vmatpush1.msra.mxu0 %v794
  %798 = vmatprep.subr.mxu0 0.0
  %799 = vmatpush1.msra.mxu0 0.0
  %800 = vmatprep.subr.mxu0 0.0
  %801 = vmatpush1.msra.mxu0 0.0
  %802 = vmatprep.subr.mxu0 0.0
  %803 = vmatpush1.msra.mxu0 0.0
  %804 = vmatprep.subr.mxu0 0.0
  %805 = vmatpush1.msra.mxu0 0.0
  %806 = vmatprep.subr.mxu0 0.0
  %807 = vmatpush1.msra.mxu0 0.0
  %808 = vmatprep.subr.mxu0 0.0
  %809 = vmatpush1.msra.mxu0 0.0
  %810 = vmatprep.subr.mxu0 0.0
  %811 = vmatpush1.msra.mxu0 0.0
  %812 = vmatprep.subr.mxu0 0.0
  %813 = vmatpush1.msra.mxu0 0.0
  %814 = vmatprep.subr.mxu0 0.0
  %815 = vmatpush1.msra.mxu0 0.0
  %816 = vmatprep.subr.mxu0 0.0
  %817 = vmatpush1.msra.mxu0 0.0
  %818 = vmatprep.subr.mxu0 0.0
  %819 = vmatpush1.msra.mxu0 0.0
  %820 = vmatprep.subr.mxu0 0.0
  %821 = vmatpush1.msra.mxu0 0.0
  %822 = vmatprep.subr.mxu0 0.0
  %823 = vmatpush1.msra.mxu0 0.0
  %824 = vmatprep.subr.mxu0 0.0
  %825 = vmatpush1.msra.mxu0 0.0
  %826 = vmatprep.subr.mxu0 0.0
  %827 = vmatpush1.msra.mxu0 0.0
  %828 = vmatprep.subr.mxu0 0.0
  %829 = vmatpush1.msra.mxu0 0.0
  %830 = vmatprep.subr.mxu0 0.0
  %831 = vmatpush1.msra.mxu0 0.0
  %832 = vmatprep.subr.mxu0 0.0
  %833 = vmatpush1.msra.mxu0 0.0
  %834 = vmatprep.subr.mxu0 0.0
  %835 = vmatpush1.msra.mxu0 0.0
  %836 = vmatprep.subr.mxu0 0.0
  %837 = vmatpush1.msra.mxu0 0.0
  %838 = vmatprep.subr.mxu0 0.0
  %839 = vmatpush1.msra.mxu0 0.0
  %840 = vmatprep.subr.mxu0 0.0
  %841 = vmatpush1.msra.mxu0 0.0
  %842 = vmatprep.subr.mxu0 0.0
  %843 = vmatpush1.msra.mxu0 0.0
  %844 = vmatprep.subr.mxu0 0.0
  %845 = vmatpush1.msra.mxu0 0.0
  %846 = vmatprep.subr.mxu0 0.0
  %847 = vmatpush1.msra.mxu0 0.0
  %848 = vmatprep.subr.mxu0 0.0
  %849 = vmatpush1.msra.mxu0 0.0
  %850 = vmatprep.subr.mxu0 0.0
  %851 = vmatpush1.msra.mxu0 0.0
  %852 = vmatprep.subr.mxu0 0.0
  %853 = vmatpush1.msra.mxu0 0.0
  %854 = vmatprep.subr.mxu0 0.0
  %855 = vmatpush1.msra.mxu0 0.0
  %856 = vmatprep.subr.mxu0 0.0
  %857 = vmatpush1.msra.mxu0 0.0
  %858 = vmatprep.subr.mxu0 0.0
  %859 = vmatpush1.msra.mxu0 0.0
  %860 = vmatprep.mubr.f32.mxu0 0.0
  %861 = vmatmul.mubr.f32.gmra.mrb[0].mxu0 %v449
  %v862 = vpop.f32.mrb[0].mxu0
  %v863 = vadd.f32 0.0, %v862
  %v864 = vpop.f32.mrb[0].mxu0
  %865 = vmatprep.mubr.f32.mxu0 0.0
  %866 = vmatmul.mubr.f32.gmra.mrb[0].mxu0 %v452
  %v867 = vpop.f32.mrb[0].mxu0
  %v868 = vadd.f32 0.0, %v867
  %v869 = vpop.f32.mrb[0].mxu0
  %870 = vdwg.mxu0
  %v871 = vmul.f32 %v712, %v863
  %v872 = vmul.f32 %v714, %v868
  %v873 = vmul.f32 %v717, %v792
  %v875 = vsel %vm690, %v871, 0
  %v878 = vsel %vm690, %v872, 0
  %vm880 = vcmask 1043456
  %v882 = vsel %vm880, %v443, 0
  %884 = vmatprep.subr.mxu0 0.0
  %885 = vmatpush1.msra.mxu0 %v882
  %886 = vmatprep.subr.mxu0 0.0
  %887 = vmatpush1.msra.mxu0 0.0
  %888 = vmatprep.subr.mxu0 0.0
  %889 = vmatpush1.msra.mxu0 0.0
  %890 = vmatprep.subr.mxu0 0.0
  %891 = vmatpush1.msra.mxu0 0.0
  %892 = vmatprep.subr.mxu0 0.0
  %893 = vmatpush1.msra.mxu0 0.0
  %894 = vmatprep.subr.mxu0 0.0
  %895 = vmatpush1.msra.mxu0 0.0
  %896 = vmatprep.subr.mxu0 0.0
  %897 = vmatpush1.msra.mxu0 0.0
  %898 = vmatprep.subr.mxu0 0.0
  %899 = vmatpush1.msra.mxu0 0.0
  %900 = vmatprep.subr.mxu0 0.0
  %901 = vmatpush1.msra.mxu0 0.0
  %902 = vmatprep.subr.mxu0 0.0
  %903 = vmatpush1.msra.mxu0 0.0
  %904 = vmatprep.subr.mxu0 0.0
  %905 = vmatpush1.msra.mxu0 0.0
  %906 = vmatprep.subr.mxu0 0.0
  %907 = vmatpush1.msra.mxu0 0.0
  %908 = vmatprep.subr.mxu0 0.0
  %909 = vmatpush1.msra.mxu0 0.0
  %910 = vmatprep.subr.mxu0 0.0
  %911 = vmatpush1.msra.mxu0 0.0
  %912 = vmatprep.subr.mxu0 0.0
  %913 = vmatpush1.msra.mxu0 0.0
  %914 = vmatprep.subr.mxu0 0.0
  %915 = vmatpush1.msra.mxu0 0.0
  %916 = vmatprep.subr.mxu0 0.0
  %917 = vmatpush1.msra.mxu0 0.0
  %918 = vmatprep.subr.mxu0 0.0
  %919 = vmatpush1.msra.mxu0 0.0
  %920 = vmatprep.subr.mxu0 0.0
  %921 = vmatpush1.msra.mxu0 0.0
  %922 = vmatprep.subr.mxu0 0.0
  %923 = vmatpush1.msra.mxu0 0.0
  %924 = vmatprep.subr.mxu0 0.0
  %925 = vmatpush1.msra.mxu0 0.0
  %926 = vmatprep.subr.mxu0 0.0
  %927 = vmatpush1.msra.mxu0 0.0
  %928 = vmatprep.subr.mxu0 0.0
  %929 = vmatpush1.msra.mxu0 0.0
  %930 = vmatprep.subr.mxu0 0.0
  %931 = vmatpush1.msra.mxu0 0.0
  %932 = vmatprep.subr.mxu0 0.0
  %933 = vmatpush1.msra.mxu0 0.0
  %934 = vmatprep.subr.mxu0 0.0
  %935 = vmatpush1.msra.mxu0 0.0
  %936 = vmatprep.subr.mxu0 0.0
  %937 = vmatpush1.msra.mxu0 0.0
  %938 = vmatprep.subr.mxu0 0.0
  %939 = vmatpush1.msra.mxu0 0.0
  %940 = vmatprep.subr.mxu0 0.0
  %941 = vmatpush1.msra.mxu0 0.0
  %942 = vmatprep.subr.mxu0 0.0
  %943 = vmatpush1.msra.mxu0 0.0
  %944 = vmatprep.subr.mxu0 0.0
  %945 = vmatpush1.msra.mxu0 0.0
  %946 = vmatprep.subr.mxu0 0.0
  %947 = vmatpush1.msra.mxu0 0.0
  %948 = vmatprep.mubr.f32.mxu0 0.0
  %949 = vmatmul.mubr.f32.gmra.mrb[0].mxu0 %v875
  %v950 = vpop.f32.mrb[0].mxu0
  %v951 = vadd.f32 0.0, %v950
  %v952 = vpop.f32.mrb[0].mxu0
  %953 = vmatprep.mubr.f32.mxu0 0.0
  %954 = vmatmul.mubr.f32.gmra.mrb[0].mxu0 %v878
  %v955 = vpop.f32.mrb[0].mxu0
  %v956 = vadd.f32 0.0, %v955
  %v957 = vpop.f32.mrb[0].mxu0
  %958 = vdwg.mxu0
  %v959 = vmul.f32 %v951, %v429
  %v960 = vmul.f32 %v956, %v432
  %v962 = vsel %vm690, %v873, 0
  %964 = vmatprep.subr.mxu0 0.0
  %965 = vmatpush1.msra.mxu0 %v882
  %966 = vmatprep.subr.mxu0 0.0
  %967 = vmatpush1.msra.mxu0 0.0
  %968 = vmatprep.subr.mxu0 0.0
  %969 = vmatpush1.msra.mxu0 0.0
  %970 = vmatprep.subr.mxu0 0.0
  %971 = vmatpush1.msra.mxu0 0.0
  %972 = vmatprep.subr.mxu0 0.0
  %973 = vmatpush1.msra.mxu0 0.0
  %974 = vmatprep.subr.mxu0 0.0
  %975 = vmatpush1.msra.mxu0 0.0
  %976 = vmatprep.subr.mxu0 0.0
  %977 = vmatpush1.msra.mxu0 0.0
  %978 = vmatprep.subr.mxu0 0.0
  %979 = vmatpush1.msra.mxu0 0.0
  %980 = vmatprep.subr.mxu0 0.0
  %981 = vmatpush1.msra.mxu0 0.0
  %982 = vmatprep.subr.mxu0 0.0
  %983 = vmatpush1.msra.mxu0 0.0
  %984 = vmatprep.subr.mxu0 0.0
  %985 = vmatpush1.msra.mxu0 0.0
  %986 = vmatprep.subr.mxu0 0.0
  %987 = vmatpush1.msra.mxu0 0.0
  %988 = vmatprep.subr.mxu0 0.0
  %989 = vmatpush1.msra.mxu0 0.0
  %990 = vmatprep.subr.mxu0 0.0
  %991 = vmatpush1.msra.mxu0 0.0
  %992 = vmatprep.subr.mxu0 0.0
  %993 = vmatpush1.msra.mxu0 0.0
  %994 = vmatprep.subr.mxu0 0.0
  %995 = vmatpush1.msra.mxu0 0.0
  %996 = vmatprep.subr.mxu0 0.0
  %997 = vmatpush1.msra.mxu0 0.0
  %998 = vmatprep.subr.mxu0 0.0
  %999 = vmatpush1.msra.mxu0 0.0
  %1000 = vmatprep.subr.mxu0 0.0
  %1001 = vmatpush1.msra.mxu0 0.0
  %1002 = vmatprep.subr.mxu0 0.0
  %1003 = vmatpush1.msra.mxu0 0.0
  %1004 = vmatprep.subr.mxu0 0.0
  %1005 = vmatpush1.msra.mxu0 0.0
  %1006 = vmatprep.subr.mxu0 0.0
  %1007 = vmatpush1.msra.mxu0 0.0
  %1008 = vmatprep.subr.mxu0 0.0
  %1009 = vmatpush1.msra.mxu0 0.0
  %1010 = vmatprep.subr.mxu0 0.0
  %1011 = vmatpush1.msra.mxu0 0.0
  %1012 = vmatprep.subr.mxu0 0.0
  %1013 = vmatpush1.msra.mxu0 0.0
  %1014 = vmatprep.subr.mxu0 0.0
  %1015 = vmatpush1.msra.mxu0 0.0
  %1016 = vmatprep.subr.mxu0 0.0
  %1017 = vmatpush1.msra.mxu0 0.0
  %1018 = vmatprep.subr.mxu0 0.0
  %1019 = vmatpush1.msra.mxu0 0.0
  %1020 = vmatprep.subr.mxu0 0.0
  %1021 = vmatpush1.msra.mxu0 0.0
  %1022 = vmatprep.subr.mxu0 0.0
  %1023 = vmatpush1.msra.mxu0 0.0
  %1024 = vmatprep.subr.mxu0 0.0
  %1025 = vmatpush1.msra.mxu0 0.0
  %1026 = vmatprep.subr.mxu0 0.0
  %1027 = vmatpush1.msra.mxu0 0.0
  %1028 = vmatprep.mubr.f32.mxu0 0.0
  %1029 = vmatmul.mubr.f32.gmra.mrb[0].mxu0 %v962
  %v1030 = vpop.f32.mrb[0].mxu0
  %v1031 = vadd.f32 0.0, %v1030
  %v1032 = vpop.f32.mrb[0].mxu0
  %1033 = vdwg.mxu0
  %v1034 = vmul.f32 %v1031, %v345
  %1035 = vmatprep.subr.mxu0 0.0
  %1036 = vmatpush1.msra.mxu0 %v959
  %1037 = vmatprep.subr.mxu0 0.0
  %1038 = vmatpush1.msra.mxu0 %v960
  %1039 = vmatprep.subr.mxu0 0.0
  %1040 = vmatpush1.msra.mxu0 0.0
  %1041 = vmatprep.subr.mxu0 0.0
  %1042 = vmatpush1.msra.mxu0 0.0
  %1043 = vmatprep.subr.mxu0 0.0
  %1044 = vmatpush1.msra.mxu0 0.0
  %1045 = vmatprep.subr.mxu0 0.0
  %1046 = vmatpush1.msra.mxu0 0.0
  %1047 = vmatprep.subr.mxu0 0.0
  %1048 = vmatpush1.msra.mxu0 0.0
  %1049 = vmatprep.subr.mxu0 0.0
  %1050 = vmatpush1.msra.mxu0 0.0
  %1051 = vmatprep.subr.mxu0 0.0
  %1052 = vmatpush1.msra.mxu0 0.0
  %1053 = vmatprep.subr.mxu0 0.0
  %1054 = vmatpush1.msra.mxu0 0.0
  %1055 = vmatprep.subr.mxu0 0.0
  %1056 = vmatpush1.msra.mxu0 0.0
  %1057 = vmatprep.subr.mxu0 0.0
  %1058 = vmatpush1.msra.mxu0 0.0
  %1059 = vmatprep.subr.mxu0 0.0
  %1060 = vmatpush1.msra.mxu0 0.0
  %1061 = vmatprep.subr.mxu0 0.0
  %1062 = vmatpush1.msra.mxu0 0.0
  %1063 = vmatprep.subr.mxu0 0.0
  %1064 = vmatpush1.msra.mxu0 0.0
  %1065 = vmatprep.subr.mxu0 0.0
  %1066 = vmatpush1.msra.mxu0 0.0
  %1067 = vmatprep.subr.mxu0 0.0
  %1068 = vmatpush1.msra.mxu0 0.0
  %1069 = vmatprep.subr.mxu0 0.0
  %1070 = vmatpush1.msra.mxu0 0.0
  %1071 = vmatprep.subr.mxu0 0.0
  %1072 = vmatpush1.msra.mxu0 0.0
  %1073 = vmatprep.subr.mxu0 0.0
  %1074 = vmatpush1.msra.mxu0 0.0
  %1075 = vmatprep.subr.mxu0 0.0
  %1076 = vmatpush1.msra.mxu0 0.0
  %1077 = vmatprep.subr.mxu0 0.0
  %1078 = vmatpush1.msra.mxu0 0.0
  %1079 = vmatprep.subr.mxu0 0.0
  %1080 = vmatpush1.msra.mxu0 0.0
  %1081 = vmatprep.subr.mxu0 0.0
  %1082 = vmatpush1.msra.mxu0 0.0
  %1083 = vmatprep.subr.mxu0 0.0
  %1084 = vmatpush1.msra.mxu0 0.0
  %1085 = vmatprep.subr.mxu0 0.0
  %1086 = vmatpush1.msra.mxu0 0.0
  %1087 = vmatprep.subr.mxu0 0.0
  %1088 = vmatpush1.msra.mxu0 0.0
  %1089 = vmatprep.subr.mxu0 0.0
  %1090 = vmatpush1.msra.mxu0 0.0
  %1091 = vmatprep.subr.mxu0 0.0
  %1092 = vmatpush1.msra.mxu0 0.0
  %1093 = vmatprep.subr.mxu0 0.0
  %1094 = vmatpush1.msra.mxu0 0.0
  %1095 = vmatprep.subr.mxu0 0.0
  %1096 = vmatpush1.msra.mxu0 0.0
  %1097 = vmatprep.subr.mxu0 0.0
  %1098 = vmatpush1.msra.mxu0 0.0
  %1099 = vmatprep.mubr.f32.mxu0 0.0
  %1100 = vmatmul.mubr.f32.gmra.mrb[0].mxu0 %v720
  %v1101 = vpop.f32.mrb[0].mxu0
  %v1102 = vadd.f32 %v1034, %v1101
  %v1103 = vpop.f32.mrb[0].mxu0
  %1104 = vdwg.mxu0
  %v1105 = vpack.c.bf16 %v1102, %v1102
  %v1106 = vld [vmem:[%s9] sm:$0xf]
  %v1107 = vld [vmem:[%s9 + $0x4] sm:$0xf]
  %v1108 = vld [vmem:[%s9 + $0x8] sm:$0xf]
  %v1109 = vld [vmem:[%s9 + $0xc] sm:$0xf]
  %v1110 = vld [vmem:[%s9 + $0x10] sm:$0xf]
  %v1111 = vld [vmem:[%s9 + $0x14] sm:$0xf]
  %v1112 = vld [vmem:[%s9 + $0x18] sm:$0xf]
  %v1113 = vld [vmem:[%s9 + $0x1c] sm:$0xf]
  %v1114 = vld [vmem:[%s10] sm:$0x1]
  %v1116 = vlaneseq
  %v1117 = vshrl.u32 %v1116, 7
  %v1118 = vsub.s32 0, %v1117
  %v1119 = vrot.slane %v1114, %v1118
  %v1129 = vunpack.c.l.b16 %v1106
  %v1130 = vunpack.c.l.b16 %v1107
  %v1131 = vunpack.c.l.b16 %v1108
  %v1132 = vunpack.c.l.b16 %v1109
  %v1133 = vunpack.c.l.b16 %v1110
  %v1134 = vunpack.c.l.b16 %v1111
  %v1135 = vunpack.c.l.b16 %v1112
  %v1136 = vunpack.c.l.b16 %v1113
  %v1137 = vpack.c.b16 %v1130, %v1129
  %v1138 = vpack.c.b16 %v1132, %v1131
  %v1139 = vpack.c.b16 %v1134, %v1133
  %v1140 = vpack.c.b16 %v1136, %v1135
  %v1146 = vsel %vm101, %v1105, 0
  %1148 = vmatprep.subr.bf16.mxu0 0
  %1149 = vmatpush1.bf16.msra.mxu0 %v1137
  %1150 = vmatprep.subr.bf16.mxu0 0
  %1151 = vmatpush1.bf16.msra.mxu0 %v1138
  %1152 = vmatprep.subr.bf16.mxu0 0
  %1153 = vmatpush1.bf16.msra.mxu0 %v1139
  %1154 = vmatprep.subr.bf16.mxu0 0
  %1155 = vmatpush1.bf16.msra.mxu0 %v1140
  %1156 = vmatprep.subr.bf16.mxu0 0
  %1157 = vmatpush1.bf16.msra.mxu0 0
  %1158 = vmatprep.subr.bf16.mxu0 0
  %1159 = vmatpush1.bf16.msra.mxu0 0
  %1160 = vmatprep.subr.bf16.mxu0 0
  %1161 = vmatpush1.bf16.msra.mxu0 0
  %1162 = vmatprep.subr.bf16.mxu0 0
  %1163 = vmatpush1.bf16.msra.mxu0 0
  %1164 = vmatprep.subr.bf16.mxu0 0
  %1165 = vmatpush1.bf16.msra.mxu0 0
  %1166 = vmatprep.subr.bf16.mxu0 0
  %1167 = vmatpush1.bf16.msra.mxu0 0
  %1168 = vmatprep.subr.bf16.mxu0 0
  %1169 = vmatpush1.bf16.msra.mxu0 0
  %1170 = vmatprep.subr.bf16.mxu0 0
  %1171 = vmatpush1.bf16.msra.mxu0 0
  %1172 = vmatprep.subr.bf16.mxu0 0
  %1173 = vmatpush1.bf16.msra.mxu0 0
  %1174 = vmatprep.subr.bf16.mxu0 0
  %1175 = vmatpush1.bf16.msra.mxu0 0
  %1176 = vmatprep.subr.bf16.mxu0 0
  %1177 = vmatpush1.bf16.msra.mxu0 0
  %1178 = vmatprep.subr.bf16.mxu0 0
  %1179 = vmatpush1.bf16.msra.mxu0 0
  %1180 = vmatprep.mubr.bf16.mxu0 0
  %1181 = vmatmul.mubr.bf16.gmra.mrb[0].mxu0 %v1146
  %v1182 = vpop.f32.mrb[0].mxu0
  %v1183 = vadd.f32 %v1119, %v1182
  %v1184 = vpop.f32.mrb[0].mxu0
  %v1185 = vpop.f32.mrb[0].mxu0
  %v1186 = vpop.f32.mrb[0].mxu0
  %1187 = vdwg.mxu0
  %v1188 = vpack.c.bf16 %v1183, %v1183
  %v1189 = vld [vmem:[%s11] sm:$0xf]
  %v1190 = vld [vmem:[%s11 + $0x4] sm:$0xf]
  %v1191 = vld [vmem:[%s11 + $0x8] sm:$0xf]
  %v1192 = vld [vmem:[%s11 + $0xc] sm:$0xf]
  %v1193 = vld [vmem:[%s12] sm:$0x1]
  %v1195 = vlaneseq
  %v1196 = vshrl.u32 %v1195, 7
  %v1197 = vsub.s32 0, %v1196
  %v1198 = vrot.slane %v1193, %v1197
  %v1204 = vunpack.c.l.b16 %v1189
  %v1205 = vunpack.c.l.b16 %v1190
  %v1206 = vunpack.c.l.b16 %v1191
  %v1207 = vunpack.c.l.b16 %v1192
  %v1208 = vpack.c.b16 %v1205, %v1204
  %v1209 = vpack.c.b16 %v1207, %v1206
  %v1213 = vsel %vm193, %v1188, 0
  %1215 = vmatprep.subr.bf16.mxu0 0
  %1216 = vmatpush1.bf16.msra.mxu0 %v1208
  %1217 = vmatprep.subr.bf16.mxu0 0
  %1218 = vmatpush1.bf16.msra.mxu0 %v1209
  %1219 = vmatprep.subr.bf16.mxu0 0
  %1220 = vmatpush1.bf16.msra.mxu0 0
  %1221 = vmatprep.subr.bf16.mxu0 0
  %1222 = vmatpush1.bf16.msra.mxu0 0
  %1223 = vmatprep.subr.bf16.mxu0 0
  %1224 = vmatpush1.bf16.msra.mxu0 0
  %1225 = vmatprep.subr.bf16.mxu0 0
  %1226 = vmatpush1.bf16.msra.mxu0 0
  %1227 = vmatprep.subr.bf16.mxu0 0
  %1228 = vmatpush1.bf16.msra.mxu0 0
  %1229 = vmatprep.subr.bf16.mxu0 0
  %1230 = vmatpush1.bf16.msra.mxu0 0
  %1231 = vmatprep.subr.bf16.mxu0 0
  %1232 = vmatpush1.bf16.msra.mxu0 0
  %1233 = vmatprep.subr.bf16.mxu0 0
  %1234 = vmatpush1.bf16.msra.mxu0 0
  %1235 = vmatprep.subr.bf16.mxu0 0
  %1236 = vmatpush1.bf16.msra.mxu0 0
  %1237 = vmatprep.subr.bf16.mxu0 0
  %1238 = vmatpush1.bf16.msra.mxu0 0
  %1239 = vmatprep.subr.bf16.mxu0 0
  %1240 = vmatpush1.bf16.msra.mxu0 0
  %1241 = vmatprep.subr.bf16.mxu0 0
  %1242 = vmatpush1.bf16.msra.mxu0 0
  %1243 = vmatprep.subr.bf16.mxu0 0
  %1244 = vmatpush1.bf16.msra.mxu0 0
  %1245 = vmatprep.subr.bf16.mxu0 0
  %1246 = vmatpush1.bf16.msra.mxu0 0
  %1247 = vmatprep.mubr.bf16.mxu0 0
  %1248 = vmatmul.mubr.bf16.gmra.mrb[0].mxu0 %v1213
  %v1249 = vpop.f32.mrb[0].mxu0
  %v1250 = vadd.f32 %v1198, %v1249
  %v1251 = vpop.f32.mrb[0].mxu0
  %v1252 = vpop.f32.mrb[0].mxu0
  %v1253 = vpop.f32.mrb[0].mxu0
  %1254 = vdwg.mxu0
  %v1255 = vadd.f32 %v1250, %v57
  %vm1256 = vcmask 517120
  %1257 = vst.msk [vmem:[%s17] sm:$0x3] %vm1256, %v1255
  // Predicated region
  $region70: #{_lambda_.5} parent=0 // pred_check
    _
  $region71: #{_lambda_.5} parent=0 // pred_check_branch
    %1259 = sbr.rel (0) target = $region73
  $region72: #{_lambda_.5} parent=0 // pred_region
    _
  $region73: #{_lambda_.5} parent=0 // pred_fallthru
    _
  // Predicated region
  $region74: #{_lambda_.5} parent=0 // pred_check
    _
  $region75: #{_lambda_.5} parent=0 // pred_check_branch
    %1261 = sbr.rel (0) target = $region77
  $region76: #{_lambda_.5} parent=0 // pred_region
    _
  $region77: #{_lambda_.5} parent=0 // pred_fallthru
    _

// kernel: _lambda_.4
$region0: #{_lambda_.4}
  #allocation0 [shape = 'u32[]', space=smem, size = 0x4, offset = 0x4, fixed_abs, tag = 'smem constant byte address 0x4 - core index']
  #allocation1 [shape = 'u32[144,128]{1,0:T(1,128)}', space=vmem, size = 0x12000, scoped, tag = 'internal scratch']
  %s0 = inlined_call_operand.vmem [shape: f32[2,32], index: 0, kind: input, shape index: {}]
  %s1 = inlined_call_operand.vmem [shape: f32[32,64], index: 1, kind: input, shape index: {}]
  %s2 = inlined_call_operand.vmem [shape: bf16[32,64], index: 2, kind: input, shape index: {}]
  %s3 = inlined_call_operand.vmem [shape: f32[1,64], index: 3, kind: input, shape index: {}]
  %s4 = inlined_call_operand.vmem [shape: f32[1,64], index: 4, kind: input, shape index: {}]
  %s5 = inlined_call_operand.vmem [shape: f32[1,64], index: 5, kind: input, shape index: {}]
  %s6 = inlined_call_operand.vmem [shape: bf16[64,64], index: 6, kind: input, shape index: {}]
  %s7 = inlined_call_operand.vmem [shape: bf16[64,64], index: 7, kind: input, shape index: {}]
  %s8 = inlined_call_operand.vmem [shape: bf16[64,64], index: 8, kind: input, shape index: {}]
  %s9 = inlined_call_operand.vmem [shape: bf16[64,64], index: 9, kind: input, shape index: {}]
  %s10 = inlined_call_operand.vmem [shape: f32[1,64], index: 10, kind: input, shape index: {}]
  %s11 = inlined_call_operand.vmem [shape: bf16[64,32], index: 11, kind: input, shape index: {}]
  %s12 = inlined_call_operand.vmem [shape: f32[1,32], index: 12, kind: input, shape index: {}]
  %s13 = inlined_call_operand.vmem [shape: f32[64,4], index: 13, kind: input, shape index: {}]
  %s14 = inlined_call_operand.vmem [shape: f32[4,64], index: 14, kind: input, shape index: {}]
  %s15 = inlined_call_operand.vmem [shape: f32[32,2], index: 15, kind: input, shape index: {}]
  %s16 = inlined_call_operand.vmem [shape: f32[2,32], index: 16, kind: input, shape index: {}]
  %s17 = inlined_call_operand.vmem [shape: f32[2,32], index: 17, kind: output, shape index: {}]
  %s18 = sld [smem:[#allocation0]]
  $region78: #{_lambda_.4} parent=0
    _
  %s20 = ssub.s32 1, %s18
  %s21 = scalar_select 0, %s20, %s18
  // Predicated region
  $region2: #{_lambda_.4} parent=0 // pred_check
    _
  $region3: #{_lambda_.4} parent=0 // pred_check_branch
    %23 = sbr.rel (0) target = $region5
  $region4: #{_lambda_.4} parent=0 // pred_region
    _
  $region5: #{_lambda_.4} parent=0 // pred_fallthru
    _
  // Predicated region
  $region6: #{_lambda_.4} parent=0 // pred_check
    _
  $region7: #{_lambda_.4} parent=0 // pred_check_branch
    %25 = sbr.rel (0) target = $region9
  $region8: #{_lambda_.4} parent=0 // pred_region
    _
  $region9: #{_lambda_.4} parent=0 // pred_fallthru
    _
  // Predicated region
  $region10: #{_lambda_.4} parent=0 // pred_check
    _
  $region11: #{_lambda_.4} parent=0 // pred_check_branch
    %27 = sbr.rel (0) target = $region13
  $region12: #{_lambda_.4} parent=0 // pred_region
    _
  $region13: #{_lambda_.4} parent=0 // pred_fallthru
    _
  // Predicated region
  $region14: #{_lambda_.4} parent=0 // pred_check
    _
  $region15: #{_lambda_.4} parent=0 // pred_check_branch
    %29 = sbr.rel (0) target = $region17
  $region16: #{_lambda_.4} parent=0 // pred_region
    _
  $region17: #{_lambda_.4} parent=0 // pred_fallthru
    _
  // Predicated region
  $region18: #{_lambda_.4} parent=0 // pred_check
    _
  $region19: #{_lambda_.4} parent=0 // pred_check_branch
    %31 = sbr.rel (0) target = $region21
  $region20: #{_lambda_.4} parent=0 // pred_region
    _
  $region21: #{_lambda_.4} parent=0 // pred_fallthru
    _
  // Predicated region
  $region22: #{_lambda_.4} parent=0 // pred_check
    _
  $region23: #{_lambda_.4} parent=0 // pred_check_branch
    %33 = sbr.rel (0) target = $region25
  $region24: #{_lambda_.4} parent=0 // pred_region
    _
  $region25: #{_lambda_.4} parent=0 // pred_fallthru
    _
  // Predicated region
  $region26: #{_lambda_.4} parent=0 // pred_check
    _
  $region27: #{_lambda_.4} parent=0 // pred_check_branch
    %35 = sbr.rel (0) target = $region29
  $region28: #{_lambda_.4} parent=0 // pred_region
    _
  $region29: #{_lambda_.4} parent=0 // pred_fallthru
    _
  // Predicated region
  $region30: #{_lambda_.4} parent=0 // pred_check
    _
  $region31: #{_lambda_.4} parent=0 // pred_check_branch
    %37 = sbr.rel (0) target = $region33
  $region32: #{_lambda_.4} parent=0 // pred_region
    _
  $region33: #{_lambda_.4} parent=0 // pred_fallthru
    _
  // Predicated region
  $region34: #{_lambda_.4} parent=0 // pred_check
    _
  $region35: #{_lambda_.4} parent=0 // pred_check_branch
    %39 = sbr.rel (0) target = $region37
  $region36: #{_lambda_.4} parent=0 // pred_region
    _
  $region37: #{_lambda_.4} parent=0 // pred_fallthru
    _
  // Predicated region
  $region38: #{_lambda_.4} parent=0 // pred_check
    _
  $region39: #{_lambda_.4} parent=0 // pred_check_branch
    %41 = sbr.rel (0) target = $region41
  $region40: #{_lambda_.4} parent=0 // pred_region
    _
  $region41: #{_lambda_.4} parent=0 // pred_fallthru
    _
  // Predicated region
  $region42: #{_lambda_.4} parent=0 // pred_check
    _
  $region43: #{_lambda_.4} parent=0 // pred_check_branch
    %43 = sbr.rel (0) target = $region45
  $region44: #{_lambda_.4} parent=0 // pred_region
    _
  $region45: #{_lambda_.4} parent=0 // pred_fallthru
    _
  // Predicated region
  $region46: #{_lambda_.4} parent=0 // pred_check
    _
  $region47: #{_lambda_.4} parent=0 // pred_check_branch
    %45 = sbr.rel (0) target = $region49
  $region48: #{_lambda_.4} parent=0 // pred_region
    _
  $region49: #{_lambda_.4} parent=0 // pred_fallthru
    _
  // Predicated region
  $region50: #{_lambda_.4} parent=0 // pred_check
    _
  $region51: #{_lambda_.4} parent=0 // pred_check_branch
    %47 = sbr.rel (0) target = $region53
  $region52: #{_lambda_.4} parent=0 // pred_region
    _
  $region53: #{_lambda_.4} parent=0 // pred_fallthru
    _
  // Predicated region
  $region54: #{_lambda_.4} parent=0 // pred_check
    _
  $region55: #{_lambda_.4} parent=0 // pred_check_branch
    %49 = sbr.rel (0) target = $region57
  $region56: #{_lambda_.4} parent=0 // pred_region
    _
  $region57: #{_lambda_.4} parent=0 // pred_fallthru
    _
  // Predicated region
  $region58: #{_lambda_.4} parent=0 // pred_check
    _
  $region59: #{_lambda_.4} parent=0 // pred_check_branch
    %51 = sbr.rel (0) target = $region61
  $region60: #{_lambda_.4} parent=0 // pred_region
    _
  $region61: #{_lambda_.4} parent=0 // pred_fallthru
    _
  // Predicated region
  $region62: #{_lambda_.4} parent=0 // pred_check
    _
  $region63: #{_lambda_.4} parent=0 // pred_check_branch
    %53 = sbr.rel (0) target = $region65
  $region64: #{_lambda_.4} parent=0 // pred_region
    _
  $region65: #{_lambda_.4} parent=0 // pred_fallthru
    _
  // Predicated region
  $region66: #{_lambda_.4} parent=0 // pred_check
    _
  $region67: #{_lambda_.4} parent=0 // pred_check_branch
    %55 = sbr.rel (0) target = $region69
  $region68: #{_lambda_.4} parent=0 // pred_region
    _
  $region69: #{_lambda_.4} parent=0 // pred_fallthru
    _
  %v57 = vld [vmem:[%s0] sm:$0x3]
  %v58 = vld [vmem:[%s1] sm:$0xff]
  %v59 = vld [vmem:[%s1 + $0x8] sm:$0xff]
  %v60 = vld [vmem:[%s1 + $0x10] sm:$0xff]
  %v61 = vld [vmem:[%s1 + $0x18] sm:$0xff]
  %v62 = vpack.c.bf16 %v59, %v58
  %v63 = vpack.c.bf16 %v61, %v60
  %v64 = vpack.c.bf16 %v57, %v57
  %v65 = vld [vmem:[%s2] sm:$0xf]
  %v66 = vld [vmem:[%s2 + $0x4] sm:$0xf]
  %v67 = vld [vmem:[%s2 + $0x8] sm:$0xf]
  %v68 = vld [vmem:[%s2 + $0xc] sm:$0xf]
  %v69 = vld [vmem:[%s3] sm:$0x1]
  %v71 = vlaneseq
  %v72 = vshrl.u32 %v71, 7
  %v73 = vsub.s32 0, %v72
  %v74 = vrot.slane %v69, %v73
  %v80 = vunpack.c.l.b16 %v65
  %v81 = vunpack.c.l.b16 %v66
  %v82 = vunpack.c.l.b16 %v67
  %v83 = vunpack.c.l.b16 %v68
  %v84 = vpack.c.b16 %v81, %v80
  %v85 = vpack.c.b16 %v83, %v82
  %vm88 = vcmask 261120
  %v90 = vsel %vm88, %v64, 0
  %92 = vmatprep.subr.bf16.mxu0 0
  %93 = vmatpush1.bf16.msra.mxu0 %v84
  %94 = vmatprep.subr.bf16.mxu0 0
  %95 = vmatpush1.bf16.msra.mxu0 %v85
  %96 = vmatprep.subr.bf16.mxu0 0
  %97 = vmatpush1.bf16.msra.mxu0 0
  %98 = vmatprep.subr.bf16.mxu0 0
  %99 = vmatpush1.bf16.msra.mxu0 0
  %100 = vmatprep.subr.bf16.mxu0 0
  %101 = vmatpush1.bf16.msra.mxu0 0
  %102 = vmatprep.subr.bf16.mxu0 0
  %103 = vmatpush1.bf16.msra.mxu0 0
  %104 = vmatprep.subr.bf16.mxu0 0
  %105 = vmatpush1.bf16.msra.mxu0 0
  %106 = vmatprep.subr.bf16.mxu0 0
  %107 = vmatpush1.bf16.msra.mxu0 0
  %108 = vmatprep.subr.bf16.mxu0 0
  %109 = vmatpush1.bf16.msra.mxu0 0
  %110 = vmatprep.subr.bf16.mxu0 0
  %111 = vmatpush1.bf16.msra.mxu0 0
  %112 = vmatprep.subr.bf16.mxu0 0
  %113 = vmatpush1.bf16.msra.mxu0 0
  %114 = vmatprep.subr.bf16.mxu0 0
  %115 = vmatpush1.bf16.msra.mxu0 0
  %116 = vmatprep.subr.bf16.mxu0 0
  %117 = vmatpush1.bf16.msra.mxu0 0
  %118 = vmatprep.subr.bf16.mxu0 0
  %119 = vmatpush1.bf16.msra.mxu0 0
  %120 = vmatprep.subr.bf16.mxu0 0
  %121 = vmatpush1.bf16.msra.mxu0 0
  %122 = vmatprep.subr.bf16.mxu0 0
  %123 = vmatpush1.bf16.msra.mxu0 0
  %124 = vmatprep.mubr.bf16.mxu0 0
  %125 = vmatmul.mubr.bf16.gmra.mrb[0].mxu0 %v90
  %v126 = vpop.f32.mrb[0].mxu0
  %v127 = vadd.f32 %v74, %v126
  %v128 = vpop.f32.mrb[0].mxu0
  %v129 = vpop.f32.mrb[0].mxu0
  %v130 = vpop.f32.mrb[0].mxu0
  %131 = vdwg.mxu0
  %vm132 = vcmask 517120
  %v133 = vsel %vm132, %v127, 0.0
  %134 = vadd.xlane.f32.xlu0 %v133
  %v135 = vpop.xlane.xlu0 %134
  %v136 = vrcp.pop 64.0
  %v137 = vmul.f32 %v135, %v136
  %v138 = vsub.f32 %v127, %v137
  %v139 = vmul.f32 %v138, %v138
  %v140 = vsel %vm132, %v139, 0.0
  %141 = vadd.xlane.f32.xlu0 %v140
  %v142 = vpop.xlane.xlu0 %141
  %v143 = vmul.f32 %v142, %v136
  %v144 = vadd.f32 %v143, 1e-05
  %v145 = vrsqrt.pop %v144
  %v146 = vmul.f32 %v138, %v145
  %v147 = vld [vmem:[%s4] sm:$0x1]
  %v149 = vlaneseq
  %v150 = vshrl.u32 %v149, 7
  %v151 = vsub.s32 0, %v150
  %v152 = vrot.slane %v147, %v151
  %v154 = vmul.f32 %v146, %v152
  %v155 = vld [vmem:[%s5] sm:$0x1]
  %v157 = vlaneseq
  %v158 = vshrl.u32 %v157, 7
  %v159 = vsub.s32 0, %v158
  %v160 = vrot.slane %v155, %v159
  %v162 = vadd.f32 %v154, %v160
  %v163 = vpack.c.bf16 %v162, %v162
  %v164 = vld [vmem:[%s6] sm:$0xf]
  %v165 = vld [vmem:[%s6 + $0x4] sm:$0xf]
  %v166 = vld [vmem:[%s6 + $0x8] sm:$0xf]
  %v167 = vld [vmem:[%s6 + $0xc] sm:$0xf]
  %v168 = vld [vmem:[%s6 + $0x10] sm:$0xf]
  %v169 = vld [vmem:[%s6 + $0x14] sm:$0xf]
  %v170 = vld [vmem:[%s6 + $0x18] sm:$0xf]
  %v171 = vld [vmem:[%s6 + $0x1c] sm:$0xf]
  %v180 = vunpack.c.l.b16 %v164
  %v181 = vunpack.c.l.b16 %v165
  %v182 = vunpack.c.l.b16 %v166
  %v183 = vunpack.c.l.b16 %v167
  %v184 = vunpack.c.l.b16 %v168
  %v185 = vunpack.c.l.b16 %v169
  %v186 = vunpack.c.l.b16 %v170
  %v187 = vunpack.c.l.b16 %v171
  %v188 = vpack.c.b16 %v181, %v180
  %v189 = vpack.c.b16 %v183, %v182
  %v190 = vpack.c.b16 %v185, %v184
  %v191 = vpack.c.b16 %v187, %v186
  %vm196 = vcmask 523264
  %v198 = vsel %vm196, %v163, 0
  %200 = vmatprep.subr.bf16.mxu0 0
  %201 = vmatpush1.bf16.msra.mxu0 %v188
  %202 = vmatprep.subr.bf16.mxu0 0
  %203 = vmatpush1.bf16.msra.mxu0 %v189
  %204 = vmatprep.subr.bf16.mxu0 0
  %205 = vmatpush1.bf16.msra.mxu0 %v190
  %206 = vmatprep.subr.bf16.mxu0 0
  %207 = vmatpush1.bf16.msra.mxu0 %v191
  %208 = vmatprep.subr.bf16.mxu0 0
  %209 = vmatpush1.bf16.msra.mxu0 0
  %210 = vmatprep.subr.bf16.mxu0 0
  %211 = vmatpush1.bf16.msra.mxu0 0
  %212 = vmatprep.subr.bf16.mxu0 0
  %213 = vmatpush1.bf16.msra.mxu0 0
  %214 = vmatprep.subr.bf16.mxu0 0
  %215 = vmatpush1.bf16.msra.mxu0 0
  %216 = vmatprep.subr.bf16.mxu0 0
  %217 = vmatpush1.bf16.msra.mxu0 0
  %218 = vmatprep.subr.bf16.mxu0 0
  %219 = vmatpush1.bf16.msra.mxu0 0
  %220 = vmatprep.subr.bf16.mxu0 0
  %221 = vmatpush1.bf16.msra.mxu0 0
  %222 = vmatprep.subr.bf16.mxu0 0
  %223 = vmatpush1.bf16.msra.mxu0 0
  %224 = vmatprep.subr.bf16.mxu0 0
  %225 = vmatpush1.bf16.msra.mxu0 0
  %226 = vmatprep.subr.bf16.mxu0 0
  %227 = vmatpush1.bf16.msra.mxu0 0
  %228 = vmatprep.subr.bf16.mxu0 0
  %229 = vmatpush1.bf16.msra.mxu0 0
  %230 = vmatprep.subr.bf16.mxu0 0
  %231 = vmatpush1.bf16.msra.mxu0 0
  %232 = vmatprep.mubr.bf16.mxu0 0
  %233 = vmatmul.mubr.bf16.gmra.mrb[0].mxu0 %v198
  %v234 = vpop.f32.mrb[0].mxu0
  %v235 = vadd.f32 0.0, %v234
  %v236 = vpop.f32.mrb[0].mxu0
  %v237 = vpop.f32.mrb[0].mxu0
  %v238 = vpop.f32.mrb[0].mxu0
  %239 = vdwg.mxu0
  %v240 = vmul.f32 %v235, 0.25
  %v241 = vld [vmem:[%s7] sm:$0xf]
  %v242 = vld [vmem:[%s7 + $0x4] sm:$0xf]
  %v243 = vld [vmem:[%s7 + $0x8] sm:$0xf]
  %v244 = vld [vmem:[%s7 + $0xc] sm:$0xf]
  %v245 = vld [vmem:[%s7 + $0x10] sm:$0xf]
  %v246 = vld [vmem:[%s7 + $0x14] sm:$0xf]
  %v247 = vld [vmem:[%s7 + $0x18] sm:$0xf]
  %v248 = vld [vmem:[%s7 + $0x1c] sm:$0xf]
  %v257 = vunpack.c.l.b16 %v241
  %v258 = vunpack.c.l.b16 %v242
  %v259 = vunpack.c.l.b16 %v243
  %v260 = vunpack.c.l.b16 %v244
  %v261 = vunpack.c.l.b16 %v245
  %v262 = vunpack.c.l.b16 %v246
  %v263 = vunpack.c.l.b16 %v247
  %v264 = vunpack.c.l.b16 %v248
  %v265 = vpack.c.b16 %v258, %v257
  %v266 = vpack.c.b16 %v260, %v259
  %v267 = vpack.c.b16 %v262, %v261
  %v268 = vpack.c.b16 %v264, %v263
  %273 = vmatprep.subr.bf16.mxu0 0
  %274 = vmatpush1.bf16.msra.mxu0 %v265
  %275 = vmatprep.subr.bf16.mxu0 0
  %276 = vmatpush1.bf16.msra.mxu0 %v266
  %277 = vmatprep.subr.bf16.mxu0 0
  %278 = vmatpush1.bf16.msra.mxu0 %v267
  %279 = vmatprep.subr.bf16.mxu0 0
  %280 = vmatpush1.bf16.msra.mxu0 %v268
  %281 = vmatprep.subr.bf16.mxu0 0
  %282 = vmatpush1.bf16.msra.mxu0 0
  %283 = vmatprep.subr.bf16.mxu0 0
  %284 = vmatpush1.bf16.msra.mxu0 0
  %285 = vmatprep.subr.bf16.mxu0 0
  %286 = vmatpush1.bf16.msra.mxu0 0
  %287 = vmatprep.subr.bf16.mxu0 0
  %288 = vmatpush1.bf16.msra.mxu0 0
  %289 = vmatprep.subr.bf16.mxu0 0
  %290 = vmatpush1.bf16.msra.mxu0 0
  %291 = vmatprep.subr.bf16.mxu0 0
  %292 = vmatpush1.bf16.msra.mxu0 0
  %293 = vmatprep.subr.bf16.mxu0 0
  %294 = vmatpush1.bf16.msra.mxu0 0
  %295 = vmatprep.subr.bf16.mxu0 0
  %296 = vmatpush1.bf16.msra.mxu0 0
  %297 = vmatprep.subr.bf16.mxu0 0
  %298 = vmatpush1.bf16.msra.mxu0 0
  %299 = vmatprep.subr.bf16.mxu0 0
  %300 = vmatpush1.bf16.msra.mxu0 0
  %301 = vmatprep.subr.bf16.mxu0 0
  %302 = vmatpush1.bf16.msra.mxu0 0
  %303 = vmatprep.subr.bf16.mxu0 0
  %304 = vmatpush1.bf16.msra.mxu0 0
  %305 = vmatprep.mubr.bf16.mxu0 0
  %306 = vmatmul.mubr.bf16.gmra.mrb[0].mxu0 %v198
  %v307 = vpop.f32.mrb[0].mxu0
  %v308 = vadd.f32 0.0, %v307
  %v309 = vpop.f32.mrb[0].mxu0
  %v310 = vpop.f32.mrb[0].mxu0
  %v311 = vpop.f32.mrb[0].mxu0
  %312 = vdwg.mxu0
  %v313 = vld [vmem:[%s8] sm:$0xf]
  %v314 = vld [vmem:[%s8 + $0x4] sm:$0xf]
  %v315 = vld [vmem:[%s8 + $0x8] sm:$0xf]
  %v316 = vld [vmem:[%s8 + $0xc] sm:$0xf]
  %v317 = vld [vmem:[%s8 + $0x10] sm:$0xf]
  %v318 = vld [vmem:[%s8 + $0x14] sm:$0xf]
  %v319 = vld [vmem:[%s8 + $0x18] sm:$0xf]
  %v320 = vld [vmem:[%s8 + $0x1c] sm:$0xf]
  %v329 = vunpack.c.l.b16 %v313
  %v330 = vunpack.c.l.b16 %v314
  %v331 = vunpack.c.l.b16 %v315
  %v332 = vunpack.c.l.b16 %v316
  %v333 = vunpack.c.l.b16 %v317
  %v334 = vunpack.c.l.b16 %v318
  %v335 = vunpack.c.l.b16 %v319
  %v336 = vunpack.c.l.b16 %v320
  %v337 = vpack.c.b16 %v330, %v329
  %v338 = vpack.c.b16 %v332, %v331
  %v339 = vpack.c.b16 %v334, %v333
  %v340 = vpack.c.b16 %v336, %v335
  %345 = vmatprep.subr.bf16.mxu0 0
  %346 = vmatpush1.bf16.msra.mxu0 %v337
  %347 = vmatprep.subr.bf16.mxu0 0
  %348 = vmatpush1.bf16.msra.mxu0 %v338
  %349 = vmatprep.subr.bf16.mxu0 0
  %350 = vmatpush1.bf16.msra.mxu0 %v339
  %351 = vmatprep.subr.bf16.mxu0 0
  %352 = vmatpush1.bf16.msra.mxu0 %v340
  %353 = vmatprep.subr.bf16.mxu0 0
  %354 = vmatpush1.bf16.msra.mxu0 0
  %355 = vmatprep.subr.bf16.mxu0 0
  %356 = vmatpush1.bf16.msra.mxu0 0
  %357 = vmatprep.subr.bf16.mxu0 0
  %358 = vmatpush1.bf16.msra.mxu0 0
  %359 = vmatprep.subr.bf16.mxu0 0
  %360 = vmatpush1.bf16.msra.mxu0 0
  %361 = vmatprep.subr.bf16.mxu0 0
  %362 = vmatpush1.bf16.msra.mxu0 0
  %363 = vmatprep.subr.bf16.mxu0 0
  %364 = vmatpush1.bf16.msra.mxu0 0
  %365 = vmatprep.subr.bf16.mxu0 0
  %366 = vmatpush1.bf16.msra.mxu0 0
  %367 = vmatprep.subr.bf16.mxu0 0
  %368 = vmatpush1.bf16.msra.mxu0 0
  %369 = vmatprep.subr.bf16.mxu0 0
  %370 = vmatpush1.bf16.msra.mxu0 0
  %371 = vmatprep.subr.bf16.mxu0 0
  %372 = vmatpush1.bf16.msra.mxu0 0
  %373 = vmatprep.subr.bf16.mxu0 0
  %374 = vmatpush1.bf16.msra.mxu0 0
  %375 = vmatprep.subr.bf16.mxu0 0
  %376 = vmatpush1.bf16.msra.mxu0 0
  %377 = vmatprep.mubr.bf16.mxu0 0
  %378 = vmatmul.mubr.bf16.gmra.mrb[0].mxu0 %v198
  %v379 = vpop.f32.mrb[0].mxu0
  %v380 = vadd.f32 0.0, %v379
  %v381 = vpop.f32.mrb[0].mxu0
  %v382 = vpop.f32.mrb[0].mxu0
  %v383 = vpop.f32.mrb[0].mxu0
  %384 = vdwg.mxu0
  %v386 = vsel %vm196, %v62, 0
  %v389 = vsel %vm196, %v63, 0
  %391 = vmatprep.subr.bf16.mxu0 0
  %392 = vmatpush1.bf16.msra.mxu0 %v265
  %393 = vmatprep.subr.bf16.mxu0 0
  %394 = vmatpush1.bf16.msra.mxu0 %v266
  %395 = vmatprep.subr.bf16.mxu0 0
  %396 = vmatpush1.bf16.msra.mxu0 %v267
  %397 = vmatprep.subr.bf16.mxu0 0
  %398 = vmatpush1.bf16.msra.mxu0 %v268
  %399 = vmatprep.subr.bf16.mxu0 0
  %400 = vmatpush1.bf16.msra.mxu0 0
  %401 = vmatprep.subr.bf16.mxu0 0
  %402 = vmatpush1.bf16.msra.mxu0 0
  %403 = vmatprep.subr.bf16.mxu0 0
  %404 = vmatpush1.bf16.msra.mxu0 0
  %405 = vmatprep.subr.bf16.mxu0 0
  %406 = vmatpush1.bf16.msra.mxu0 0
  %407 = vmatprep.subr.bf16.mxu0 0
  %408 = vmatpush1.bf16.msra.mxu0 0
  %409 = vmatprep.subr.bf16.mxu0 0
  %410 = vmatpush1.bf16.msra.mxu0 0
  %411 = vmatprep.subr.bf16.mxu0 0
  %412 = vmatpush1.bf16.msra.mxu0 0
  %413 = vmatprep.subr.bf16.mxu0 0
  %414 = vmatpush1.bf16.msra.mxu0 0
  %415 = vmatprep.subr.bf16.mxu0 0
  %416 = vmatpush1.bf16.msra.mxu0 0
  %417 = vmatprep.subr.bf16.mxu0 0
  %418 = vmatpush1.bf16.msra.mxu0 0
  %419 = vmatprep.subr.bf16.mxu0 0
  %420 = vmatpush1.bf16.msra.mxu0 0
  %421 = vmatprep.subr.bf16.mxu0 0
  %422 = vmatpush1.bf16.msra.mxu0 0
  %423 = vmatprep.mubr.bf16.mxu0 0
  %424 = vmatmul.mubr.bf16.gmra.mrb[0].mxu0 %v386
  %v425 = vpop.f32.mrb[0].mxu0
  %v426 = vadd.f32 0.0, %v425
  %v427 = vpop.f32.mrb[0].mxu0
  %v428 = vpop.f32.mrb[0].mxu0
  %v429 = vadd.f32 0.0, %v428
  %v430 = vpop.f32.mrb[0].mxu0
  %431 = vmatprep.mubr.bf16.mxu0 0
  %432 = vmatmul.mubr.bf16.gmra.mrb[0].mxu0 %v389
  %v433 = vpop.f32.mrb[0].mxu0
  %v434 = vadd.f32 0.0, %v433
  %v435 = vpop.f32.mrb[0].mxu0
  %v436 = vpop.f32.mrb[0].mxu0
  %v437 = vadd.f32 0.0, %v436
  %v438 = vpop.f32.mrb[0].mxu0
  %439 = vdwg.mxu0
  %440 = vmatprep.subr.bf16.mxu0 0
  %441 = vmatpush1.bf16.msra.mxu0 %v337
  %442 = vmatprep.subr.bf16.mxu0 0
  %443 = vmatpush1.bf16.msra.mxu0 %v338
  %444 = vmatprep.subr.bf16.mxu0 0
  %445 = vmatpush1.bf16.msra.mxu0 %v339
  %446 = vmatprep.subr.bf16.mxu0 0
  %447 = vmatpush1.bf16.msra.mxu0 %v340
  %448 = vmatprep.subr.bf16.mxu0 0
  %449 = vmatpush1.bf16.msra.mxu0 0
  %450 = vmatprep.subr.bf16.mxu0 0
  %451 = vmatpush1.bf16.msra.mxu0 0
  %452 = vmatprep.subr.bf16.mxu0 0
  %453 = vmatpush1.bf16.msra.mxu0 0
  %454 = vmatprep.subr.bf16.mxu0 0
  %455 = vmatpush1.bf16.msra.mxu0 0
  %456 = vmatprep.subr.bf16.mxu0 0
  %457 = vmatpush1.bf16.msra.mxu0 0
  %458 = vmatprep.subr.bf16.mxu0 0
  %459 = vmatpush1.bf16.msra.mxu0 0
  %460 = vmatprep.subr.bf16.mxu0 0
  %461 = vmatpush1.bf16.msra.mxu0 0
  %462 = vmatprep.subr.bf16.mxu0 0
  %463 = vmatpush1.bf16.msra.mxu0 0
  %464 = vmatprep.subr.bf16.mxu0 0
  %465 = vmatpush1.bf16.msra.mxu0 0
  %466 = vmatprep.subr.bf16.mxu0 0
  %467 = vmatpush1.bf16.msra.mxu0 0
  %468 = vmatprep.subr.bf16.mxu0 0
  %469 = vmatpush1.bf16.msra.mxu0 0
  %470 = vmatprep.subr.bf16.mxu0 0
  %471 = vmatpush1.bf16.msra.mxu0 0
  %472 = vmatprep.mubr.bf16.mxu0 0
  %473 = vmatmul.mubr.bf16.gmra.mrb[0].mxu0 %v386
  %v474 = vpop.f32.mrb[0].mxu0
  %v475 = vadd.f32 0.0, %v474
  %v476 = vpop.f32.mrb[0].mxu0
  %v477 = vpop.f32.mrb[0].mxu0
  %v478 = vadd.f32 0.0, %v477
  %v479 = vpop.f32.mrb[0].mxu0
  %480 = vmatprep.mubr.bf16.mxu0 0
  %481 = vmatmul.mubr.bf16.gmra.mrb[0].mxu0 %v389
  %v482 = vpop.f32.mrb[0].mxu0
  %v483 = vadd.f32 0.0, %v482
  %v484 = vpop.f32.mrb[0].mxu0
  %v485 = vpop.f32.mrb[0].mxu0
  %v486 = vadd.f32 0.0, %v485
  %v487 = vpop.f32.mrb[0].mxu0
  %488 = vdwg.mxu0
  %v489 = vld [vmem:[%s13] sm:$0xff]
  %v490 = vld [vmem:[%s13 + $0x8] sm:$0xff]
  %v491 = vld [vmem:[%s13 + $0x10] sm:$0xff]
  %v492 = vld [vmem:[%s13 + $0x18] sm:$0xff]
  %v493 = vld [vmem:[%s13 + $0x20] sm:$0xff]
  %v494 = vld [vmem:[%s13 + $0x28] sm:$0xff]
  %v495 = vld [vmem:[%s13 + $0x30] sm:$0xff]
  %v496 = vld [vmem:[%s13 + $0x38] sm:$0xff]
  %v497 = vld [vmem:[%s14] sm:$0xf]
  %v498 = vld [vmem:[%s15] sm:$0xff]
  %v499 = vld [vmem:[%s15 + $0x8] sm:$0xff]
  %v500 = vld [vmem:[%s15 + $0x10] sm:$0xff]
  %v501 = vld [vmem:[%s15 + $0x18] sm:$0xff]
  %v502 = vld [vmem:[%s16] sm:$0x3]
  %vm503 = vcmask 15360
  %v505 = vsel %vm503, %v498, 0
  %v508 = vsel %vm503, %v499, 0
  %v511 = vsel %vm503, %v500, 0
  %v514 = vsel %vm503, %v501, 0
  %vm516 = vcmask 1041408
  %v518 = vsel %vm516, %v240, 0
  %520 = vmatprep.subr.mxu0 0.0
  %521 = vmatpush1.msra.mxu0 %v518
  %522 = vmatprep.subr.mxu0 0.0
  %523 = vmatpush1.msra.mxu0 0.0
  %524 = vmatprep.subr.mxu0 0.0
  %525 = vmatpush1.msra.mxu0 0.0
  %526 = vmatprep.subr.mxu0 0.0
  %527 = vmatpush1.msra.mxu0 0.0
  %528 = vmatprep.subr.mxu0 0.0
  %529 = vmatpush1.msra.mxu0 0.0
  %530 = vmatprep.subr.mxu0 0.0
  %531 = vmatpush1.msra.mxu0 0.0
  %532 = vmatprep.subr.mxu0 0.0
  %533 = vmatpush1.msra.mxu0 0.0
  %534 = vmatprep.subr.mxu0 0.0
  %535 = vmatpush1.msra.mxu0 0.0
  %536 = vmatprep.subr.mxu0 0.0
  %537 = vmatpush1.msra.mxu0 0.0
  %538 = vmatprep.subr.mxu0 0.0
  %539 = vmatpush1.msra.mxu0 0.0
  %540 = vmatprep.subr.mxu0 0.0
  %541 = vmatpush1.msra.mxu0 0.0
  %542 = vmatprep.subr.mxu0 0.0
  %543 = vmatpush1.msra.mxu0 0.0
  %544 = vmatprep.subr.mxu0 0.0
  %545 = vmatpush1.msra.mxu0 0.0
  %546 = vmatprep.subr.mxu0 0.0
  %547 = vmatpush1.msra.mxu0 0.0
  %548 = vmatprep.subr.mxu0 0.0
  %549 = vmatpush1.msra.mxu0 0.0
  %550 = vmatprep.subr.mxu0 0.0
  %551 = vmatpush1.msra.mxu0 0.0
  %552 = vmatprep.subr.mxu0 0.0
  %553 = vmatpush1.msra.mxu0 0.0
  %554 = vmatprep.subr.mxu0 0.0
  %555 = vmatpush1.msra.mxu0 0.0
  %556 = vmatprep.subr.mxu0 0.0
  %557 = vmatpush1.msra.mxu0 0.0
  %558 = vmatprep.subr.mxu0 0.0
  %559 = vmatpush1.msra.mxu0 0.0
  %560 = vmatprep.subr.mxu0 0.0
  %561 = vmatpush1.msra.mxu0 0.0
  %562 = vmatprep.subr.mxu0 0.0
  %563 = vmatpush1.msra.mxu0 0.0
  %564 = vmatprep.subr.mxu0 0.0
  %565 = vmatpush1.msra.mxu0 0.0
  %566 = vmatprep.subr.mxu0 0.0
  %567 = vmatpush1.msra.mxu0 0.0
  %568 = vmatprep.subr.mxu0 0.0
  %569 = vmatpush1.msra.mxu0 0.0
  %570 = vmatprep.subr.mxu0 0.0
  %571 = vmatpush1.msra.mxu0 0.0
  %572 = vmatprep.subr.mxu0 0.0
  %573 = vmatpush1.msra.mxu0 0.0
  %574 = vmatprep.subr.mxu0 0.0
  %575 = vmatpush1.msra.mxu0 0.0
  %576 = vmatprep.subr.mxu0 0.0
  %577 = vmatpush1.msra.mxu0 0.0
  %578 = vmatprep.subr.mxu0 0.0
  %579 = vmatpush1.msra.mxu0 0.0
  %580 = vmatprep.subr.mxu0 0.0
  %581 = vmatpush1.msra.mxu0 0.0
  %582 = vmatprep.subr.mxu0 0.0
  %583 = vmatpush1.msra.mxu0 0.0
  %584 = vmatprep.mubr.f32.mxu0 0.0
  %585 = vmatmul.mubr.f32.gmra.mrb[0].mxu0 %v505
  %v586 = vpop.f32.mrb[0].mxu0
  %v587 = vadd.f32 0.0, %v586
  %v588 = vpop.f32.mrb[0].mxu0
  %589 = vmatprep.mubr.f32.mxu0 0.0
  %590 = vmatmul.mubr.f32.gmra.mrb[0].mxu0 %v508
  %v591 = vpop.f32.mrb[0].mxu0
  %v592 = vadd.f32 0.0, %v591
  %v593 = vpop.f32.mrb[0].mxu0
  %594 = vmatprep.mubr.f32.mxu0 0.0
  %595 = vmatmul.mubr.f32.gmra.mrb[0].mxu0 %v511
  %v596 = vpop.f32.mrb[0].mxu0
  %v597 = vadd.f32 0.0, %v596
  %v598 = vpop.f32.mrb[0].mxu0
  %599 = vmatprep.mubr.f32.mxu0 0.0
  %600 = vmatmul.mubr.f32.gmra.mrb[0].mxu0 %v514
  %v601 = vpop.f32.mrb[0].mxu0
  %v602 = vadd.f32 0.0, %v601
  %v603 = vpop.f32.mrb[0].mxu0
  %604 = vdwg.mxu0
  %v605 = vmul.f32 %v587, %v426
  %v606 = vmul.f32 %v592, %v429
  %v607 = vmul.f32 %v597, %v434
  %v608 = vmul.f32 %v602, %v437
  %v610 = vsel %vm196, %v605, 0
  %v613 = vsel %vm196, %v606, 0
  %v616 = vsel %vm196, %v607, 0
  %v619 = vsel %vm196, %v608, 0
  %621 = vmatprep.subr.mxu0 0.0
  %622 = vmatpush1.msra.mxu0 %v489
  %623 = vmatprep.subr.mxu0 0.0
  %624 = vmatpush1.msra.mxu0 %v490
  %625 = vmatprep.subr.mxu0 0.0
  %626 = vmatpush1.msra.mxu0 %v491
  %627 = vmatprep.subr.mxu0 0.0
  %628 = vmatpush1.msra.mxu0 %v492
  %629 = vmatprep.subr.mxu0 0.0
  %630 = vmatpush1.msra.mxu0 %v493
  %631 = vmatprep.subr.mxu0 0.0
  %632 = vmatpush1.msra.mxu0 %v494
  %633 = vmatprep.subr.mxu0 0.0
  %634 = vmatpush1.msra.mxu0 %v495
  %635 = vmatprep.subr.mxu0 0.0
  %636 = vmatpush1.msra.mxu0 %v496
  %637 = vmatprep.subr.mxu0 0.0
  %638 = vmatpush1.msra.mxu0 0.0
  %639 = vmatprep.subr.mxu0 0.0
  %640 = vmatpush1.msra.mxu0 0.0
  %641 = vmatprep.subr.mxu0 0.0
  %642 = vmatpush1.msra.mxu0 0.0
  %643 = vmatprep.subr.mxu0 0.0
  %644 = vmatpush1.msra.mxu0 0.0
  %645 = vmatprep.subr.mxu0 0.0
  %646 = vmatpush1.msra.mxu0 0.0
  %647 = vmatprep.subr.mxu0 0.0
  %648 = vmatpush1.msra.mxu0 0.0
  %649 = vmatprep.subr.mxu0 0.0
  %650 = vmatpush1.msra.mxu0 0.0
  %651 = vmatprep.subr.mxu0 0.0
  %652 = vmatpush1.msra.mxu0 0.0
  %653 = vmatprep.subr.mxu0 0.0
  %654 = vmatpush1.msra.mxu0 0.0
  %655 = vmatprep.subr.mxu0 0.0
  %656 = vmatpush1.msra.mxu0 0.0
  %657 = vmatprep.subr.mxu0 0.0
  %658 = vmatpush1.msra.mxu0 0.0
  %659 = vmatprep.subr.mxu0 0.0
  %660 = vmatpush1.msra.mxu0 0.0
  %661 = vmatprep.subr.mxu0 0.0
  %662 = vmatpush1.msra.mxu0 0.0
  %663 = vmatprep.subr.mxu0 0.0
  %664 = vmatpush1.msra.mxu0 0.0
  %665 = vmatprep.subr.mxu0 0.0
  %666 = vmatpush1.msra.mxu0 0.0
  %667 = vmatprep.subr.mxu0 0.0
  %668 = vmatpush1.msra.mxu0 0.0
  %669 = vmatprep.subr.mxu0 0.0
  %670 = vmatpush1.msra.mxu0 0.0
  %671 = vmatprep.subr.mxu0 0.0
  %672 = vmatpush1.msra.mxu0 0.0
  %673 = vmatprep.subr.mxu0 0.0
  %674 = vmatpush1.msra.mxu0 0.0
  %675 = vmatprep.subr.mxu0 0.0
  %676 = vmatpush1.msra.mxu0 0.0
  %677 = vmatprep.subr.mxu0 0.0
  %678 = vmatpush1.msra.mxu0 0.0
  %679 = vmatprep.subr.mxu0 0.0
  %680 = vmatpush1.msra.mxu0 0.0
  %681 = vmatprep.subr.mxu0 0.0
  %682 = vmatpush1.msra.mxu0 0.0
  %683 = vmatprep.subr.mxu0 0.0
  %684 = vmatpush1.msra.mxu0 0.0
  %685 = vmatprep.mubr.f32.mxu0 0.0
  %686 = vmatmul.mubr.f32.gmra.mrb[0].mxu0 %v610
  %v687 = vpop.f32.mrb[0].mxu0
  %v688 = vadd.f32 0.0, %v687
  %v689 = vpop.f32.mrb[0].mxu0
  %690 = vmatprep.mubr.f32.mxu0 0.0
  %691 = vmatmul.mubr.f32.gmra.mrb[0].mxu0 %v613
  %v692 = vpop.f32.mrb[0].mxu0
  %v693 = vadd.f32 0.0, %v692
  %v694 = vpop.f32.mrb[0].mxu0
  %695 = vmatprep.mubr.f32.mxu0 0.0
  %696 = vmatmul.mubr.f32.gmra.mrb[0].mxu0 %v616
  %v697 = vpop.f32.mrb[0].mxu0
  %v698 = vadd.f32 0.0, %v697
  %v699 = vpop.f32.mrb[0].mxu0
  %700 = vmatprep.mubr.f32.mxu0 0.0
  %701 = vmatmul.mubr.f32.gmra.mrb[0].mxu0 %v619
  %v702 = vpop.f32.mrb[0].mxu0
  %v703 = vadd.f32 0.0, %v702
  %v704 = vpop.f32.mrb[0].mxu0
  %705 = vdwg.mxu0
  %v706 = vmul.f32 %v240, %v308
  %v708 = vsel %vm196, %v706, 0
  %710 = vmatprep.subr.mxu0 0.0
  %711 = vmatpush1.msra.mxu0 %v489
  %712 = vmatprep.subr.mxu0 0.0
  %713 = vmatpush1.msra.mxu0 %v490
  %714 = vmatprep.subr.mxu0 0.0
  %715 = vmatpush1.msra.mxu0 %v491
  %716 = vmatprep.subr.mxu0 0.0
  %717 = vmatpush1.msra.mxu0 %v492
  %718 = vmatprep.subr.mxu0 0.0
  %719 = vmatpush1.msra.mxu0 %v493
  %720 = vmatprep.subr.mxu0 0.0
  %721 = vmatpush1.msra.mxu0 %v494
  %722 = vmatprep.subr.mxu0 0.0
  %723 = vmatpush1.msra.mxu0 %v495
  %724 = vmatprep.subr.mxu0 0.0
  %725 = vmatpush1.msra.mxu0 %v496
  %726 = vmatprep.subr.mxu0 0.0
  %727 = vmatpush1.msra.mxu0 0.0
  %728 = vmatprep.subr.mxu0 0.0
  %729 = vmatpush1.msra.mxu0 0.0
  %730 = vmatprep.subr.mxu0 0.0
  %731 = vmatpush1.msra.mxu0 0.0
  %732 = vmatprep.subr.mxu0 0.0
  %733 = vmatpush1.msra.mxu0 0.0
  %734 = vmatprep.subr.mxu0 0.0
  %735 = vmatpush1.msra.mxu0 0.0
  %736 = vmatprep.subr.mxu0 0.0
  %737 = vmatpush1.msra.mxu0 0.0
  %738 = vmatprep.subr.mxu0 0.0
  %739 = vmatpush1.msra.mxu0 0.0
  %740 = vmatprep.subr.mxu0 0.0
  %741 = vmatpush1.msra.mxu0 0.0
  %742 = vmatprep.subr.mxu0 0.0
  %743 = vmatpush1.msra.mxu0 0.0
  %744 = vmatprep.subr.mxu0 0.0
  %745 = vmatpush1.msra.mxu0 0.0
  %746 = vmatprep.subr.mxu0 0.0
  %747 = vmatpush1.msra.mxu0 0.0
  %748 = vmatprep.subr.mxu0 0.0
  %749 = vmatpush1.msra.mxu0 0.0
  %750 = vmatprep.subr.mxu0 0.0
  %751 = vmatpush1.msra.mxu0 0.0
  %752 = vmatprep.subr.mxu0 0.0
  %753 = vmatpush1.msra.mxu0 0.0
  %754 = vmatprep.subr.mxu0 0.0
  %755 = vmatpush1.msra.mxu0 0.0
  %756 = vmatprep.subr.mxu0 0.0
  %757 = vmatpush1.msra.mxu0 0.0
  %758 = vmatprep.subr.mxu0 0.0
  %759 = vmatpush1.msra.mxu0 0.0
  %760 = vmatprep.subr.mxu0 0.0
  %761 = vmatpush1.msra.mxu0 0.0
  %762 = vmatprep.subr.mxu0 0.0
  %763 = vmatpush1.msra.mxu0 0.0
  %764 = vmatprep.subr.mxu0 0.0
  %765 = vmatpush1.msra.mxu0 0.0
  %766 = vmatprep.subr.mxu0 0.0
  %767 = vmatpush1.msra.mxu0 0.0
  %768 = vmatprep.subr.mxu0 0.0
  %769 = vmatpush1.msra.mxu0 0.0
  %770 = vmatprep.subr.mxu0 0.0
  %771 = vmatpush1.msra.mxu0 0.0
  %772 = vmatprep.subr.mxu0 0.0
  %773 = vmatpush1.msra.mxu0 0.0
  %774 = vmatprep.mubr.f32.mxu0 0.0
  %775 = vmatmul.mubr.f32.gmra.mrb[0].mxu0 %v708
  %v776 = vpop.f32.mrb[0].mxu0
  %v777 = vadd.f32 0.0, %v776
  %v778 = vpop.f32.mrb[0].mxu0
  %779 = vdwg.mxu0
  %vm780 = vcmask 31744
  %v781 = vsel %vm780, %v688, -inf
  %v782 = vsel %vm780, %v693, -inf
  %v783 = vsel %vm780, %v698, -inf
  %v784 = vsel %vm780, %v703, -inf
  %v785 = vmax.f32 %v781, %v782
  %v786 = vmax.f32 %v783, %v784
  %v787 = vmax.f32 %v785, %v786
  %v788 = vrot.slane %v787, 4
  %v789 = vmax.f32 %v787, %v788
  %v790 = vrot.slane %v789, 2
  %v791 = vmax.f32 %v789, %v790
  %v792 = vrot.slane %v791, 1
  %v793 = vmax.f32 %v791, %v792
  %vm794 = vcmask 25600
  %v795 = vsel %vm794, %v777, -inf
  %v796 = vrot.slane %v795, 4
  %v797 = vmax.f32 %v795, %v796
  %v798 = vrot.slane %v797, 2
  %v799 = vmax.f32 %v797, %v798
  %v800 = vrot.slane %v799, 1
  %v801 = vmax.f32 %v799, %v800
  %v802 = vmax.f32 %v793, %v801
  %v803 = vsub.f32 %v688, %v802
  %v804 = vsub.f32 %v693, %v802
  %v805 = vsub.f32 %v698, %v802
  %v806 = vsub.f32 %v703, %v802
  %v807 = vmul.f32 %v803, 1.442695
  %v808 = vpow.pop %v807
  %v809 = vmul.f32 %v804, 1.442695
  %v810 = vpow.pop %v809
  %v811 = vmul.f32 %v805, 1.442695
  %v812 = vpow.pop %v811
  %v813 = vmul.f32 %v806, 1.442695
  %v814 = vpow.pop %v813
  %v815 = vsub.f32 %v777, %v802
  %v816 = vmul.f32 %v815, 1.442695
  %v817 = vpow.pop %v816
  %v819 = vsel %vm88, %v502, 0
  %821 = vmatprep.subr.mxu0 0.0
  %822 = vmatpush1.msra.mxu0 %v808
  %823 = vmatprep.subr.mxu0 0.0
  %824 = vmatpush1.msra.mxu0 %v810
  %825 = vmatprep.subr.mxu0 0.0
  %826 = vmatpush1.msra.mxu0 %v812
  %827 = vmatprep.subr.mxu0 0.0
  %828 = vmatpush1.msra.mxu0 %v814
  %829 = vmatprep.subr.mxu0 0.0
  %830 = vmatpush1.msra.mxu0 0.0
  %831 = vmatprep.subr.mxu0 0.0
  %832 = vmatpush1.msra.mxu0 0.0
  %833 = vmatprep.subr.mxu0 0.0
  %834 = vmatpush1.msra.mxu0 0.0
  %835 = vmatprep.subr.mxu0 0.0
  %836 = vmatpush1.msra.mxu0 0.0
  %837 = vmatprep.subr.mxu0 0.0
  %838 = vmatpush1.msra.mxu0 0.0
  %839 = vmatprep.subr.mxu0 0.0
  %840 = vmatpush1.msra.mxu0 0.0
  %841 = vmatprep.subr.mxu0 0.0
  %842 = vmatpush1.msra.mxu0 0.0
  %843 = vmatprep.subr.mxu0 0.0
  %844 = vmatpush1.msra.mxu0 0.0
  %845 = vmatprep.subr.mxu0 0.0
  %846 = vmatpush1.msra.mxu0 0.0
  %847 = vmatprep.subr.mxu0 0.0
  %848 = vmatpush1.msra.mxu0 0.0
  %849 = vmatprep.subr.mxu0 0.0
  %850 = vmatpush1.msra.mxu0 0.0
  %851 = vmatprep.subr.mxu0 0.0
  %852 = vmatpush1.msra.mxu0 0.0
  %853 = vmatprep.subr.mxu0 0.0
  %854 = vmatpush1.msra.mxu0 0.0
  %855 = vmatprep.subr.mxu0 0.0
  %856 = vmatpush1.msra.mxu0 0.0
  %857 = vmatprep.subr.mxu0 0.0
  %858 = vmatpush1.msra.mxu0 0.0
  %859 = vmatprep.subr.mxu0 0.0
  %860 = vmatpush1.msra.mxu0 0.0
  %861 = vmatprep.subr.mxu0 0.0
  %862 = vmatpush1.msra.mxu0 0.0
  %863 = vmatprep.subr.mxu0 0.0
  %864 = vmatpush1.msra.mxu0 0.0
  %865 = vmatprep.subr.mxu0 0.0
  %866 = vmatpush1.msra.mxu0 0.0
  %867 = vmatprep.subr.mxu0 0.0
  %868 = vmatpush1.msra.mxu0 0.0
  %869 = vmatprep.subr.mxu0 0.0
  %870 = vmatpush1.msra.mxu0 0.0
  %871 = vmatprep.subr.mxu0 0.0
  %872 = vmatpush1.msra.mxu0 0.0
  %873 = vmatprep.subr.mxu0 0.0
  %874 = vmatpush1.msra.mxu0 0.0
  %875 = vmatprep.subr.mxu0 0.0
  %876 = vmatpush1.msra.mxu0 0.0
  %877 = vmatprep.subr.mxu0 0.0
  %878 = vmatpush1.msra.mxu0 0.0
  %879 = vmatprep.subr.mxu0 0.0
  %880 = vmatpush1.msra.mxu0 0.0
  %881 = vmatprep.subr.mxu0 0.0
  %882 = vmatpush1.msra.mxu0 0.0
  %883 = vmatprep.subr.mxu0 0.0
  %884 = vmatpush1.msra.mxu0 0.0
  %885 = vmatprep.mubr.f32.mxu0 0.0
  %886 = vmatmul.mubr.f32.gmra.mrb[0].mxu0 %v819
  %v887 = vpop.f32.mrb[0].mxu0
  %v888 = vadd.f32 %v817, %v887
  %v889 = vpop.f32.mrb[0].mxu0
  %890 = vdwg.mxu0
  %v891 = vrcp.pop %v888
  %v893 = vsel %vm516, %v891, 0
  %895 = vmatprep.subr.mxu0 0.0
  %896 = vmatpush1.msra.mxu0 %v893
  %897 = vmatprep.subr.mxu0 0.0
  %898 = vmatpush1.msra.mxu0 0.0
  %899 = vmatprep.subr.mxu0 0.0
  %900 = vmatpush1.msra.mxu0 0.0
  %901 = vmatprep.subr.mxu0 0.0
  %902 = vmatpush1.msra.mxu0 0.0
  %903 = vmatprep.subr.mxu0 0.0
  %904 = vmatpush1.msra.mxu0 0.0
  %905 = vmatprep.subr.mxu0 0.0
  %906 = vmatpush1.msra.mxu0 0.0
  %907 = vmatprep.subr.mxu0 0.0
  %908 = vmatpush1.msra.mxu0 0.0
  %909 = vmatprep.subr.mxu0 0.0
  %910 = vmatpush1.msra.mxu0 0.0
  %911 = vmatprep.subr.mxu0 0.0
  %912 = vmatpush1.msra.mxu0 0.0
  %913 = vmatprep.subr.mxu0 0.0
  %914 = vmatpush1.msra.mxu0 0.0
  %915 = vmatprep.subr.mxu0 0.0
  %916 = vmatpush1.msra.mxu0 0.0
  %917 = vmatprep.subr.mxu0 0.0
  %918 = vmatpush1.msra.mxu0 0.0
  %919 = vmatprep.subr.mxu0 0.0
  %920 = vmatpush1.msra.mxu0 0.0
  %921 = vmatprep.subr.mxu0 0.0
  %922 = vmatpush1.msra.mxu0 0.0
  %923 = vmatprep.subr.mxu0 0.0
  %924 = vmatpush1.msra.mxu0 0.0
  %925 = vmatprep.subr.mxu0 0.0
  %926 = vmatpush1.msra.mxu0 0.0
  %927 = vmatprep.subr.mxu0 0.0
  %928 = vmatpush1.msra.mxu0 0.0
  %929 = vmatprep.subr.mxu0 0.0
  %930 = vmatpush1.msra.mxu0 0.0
  %931 = vmatprep.subr.mxu0 0.0
  %932 = vmatpush1.msra.mxu0 0.0
  %933 = vmatprep.subr.mxu0 0.0
  %934 = vmatpush1.msra.mxu0 0.0
  %935 = vmatprep.subr.mxu0 0.0
  %936 = vmatpush1.msra.mxu0 0.0
  %937 = vmatprep.subr.mxu0 0.0
  %938 = vmatpush1.msra.mxu0 0.0
  %939 = vmatprep.subr.mxu0 0.0
  %940 = vmatpush1.msra.mxu0 0.0
  %941 = vmatprep.subr.mxu0 0.0
  %942 = vmatpush1.msra.mxu0 0.0
  %943 = vmatprep.subr.mxu0 0.0
  %944 = vmatpush1.msra.mxu0 0.0
  %945 = vmatprep.subr.mxu0 0.0
  %946 = vmatpush1.msra.mxu0 0.0
  %947 = vmatprep.subr.mxu0 0.0
  %948 = vmatpush1.msra.mxu0 0.0
  %949 = vmatprep.subr.mxu0 0.0
  %950 = vmatpush1.msra.mxu0 0.0
  %951 = vmatprep.subr.mxu0 0.0
  %952 = vmatpush1.msra.mxu0 0.0
  %953 = vmatprep.subr.mxu0 0.0
  %954 = vmatpush1.msra.mxu0 0.0
  %955 = vmatprep.subr.mxu0 0.0
  %956 = vmatpush1.msra.mxu0 0.0
  %957 = vmatprep.subr.mxu0 0.0
  %958 = vmatpush1.msra.mxu0 0.0
  %959 = vmatprep.mubr.f32.mxu0 0.0
  %960 = vmatmul.mubr.f32.gmra.mrb[0].mxu0 %v505
  %v961 = vpop.f32.mrb[0].mxu0
  %v962 = vadd.f32 0.0, %v961
  %v963 = vpop.f32.mrb[0].mxu0
  %964 = vmatprep.mubr.f32.mxu0 0.0
  %965 = vmatmul.mubr.f32.gmra.mrb[0].mxu0 %v508
  %v966 = vpop.f32.mrb[0].mxu0
  %v967 = vadd.f32 0.0, %v966
  %v968 = vpop.f32.mrb[0].mxu0
  %969 = vmatprep.mubr.f32.mxu0 0.0
  %970 = vmatmul.mubr.f32.gmra.mrb[0].mxu0 %v511
  %v971 = vpop.f32.mrb[0].mxu0
  %v972 = vadd.f32 0.0, %v971
  %v973 = vpop.f32.mrb[0].mxu0
  %974 = vmatprep.mubr.f32.mxu0 0.0
  %975 = vmatmul.mubr.f32.gmra.mrb[0].mxu0 %v514
  %v976 = vpop.f32.mrb[0].mxu0
  %v977 = vadd.f32 0.0, %v976
  %v978 = vpop.f32.mrb[0].mxu0
  %979 = vdwg.mxu0
  %v980 = vmul.f32 %v808, %v962
  %v981 = vmul.f32 %v810, %v967
  %v982 = vmul.f32 %v812, %v972
  %v983 = vmul.f32 %v814, %v977
  %v984 = vmul.f32 %v817, %v891
  %v986 = vsel %vm780, %v980, 0
  %v989 = vsel %vm780, %v981, 0
  %v992 = vsel %vm780, %v982, 0
  %v995 = vsel %vm780, %v983, 0
  %vm997 = vcmask 1043456
  %v999 = vsel %vm997, %v497, 0
  %1001 = vmatprep.subr.mxu0 0.0
  %1002 = vmatpush1.msra.mxu0 %v999
  %1003 = vmatprep.subr.mxu0 0.0
  %1004 = vmatpush1.msra.mxu0 0.0
  %1005 = vmatprep.subr.mxu0 0.0
  %1006 = vmatpush1.msra.mxu0 0.0
  %1007 = vmatprep.subr.mxu0 0.0
  %1008 = vmatpush1.msra.mxu0 0.0
  %1009 = vmatprep.subr.mxu0 0.0
  %1010 = vmatpush1.msra.mxu0 0.0
  %1011 = vmatprep.subr.mxu0 0.0
  %1012 = vmatpush1.msra.mxu0 0.0
  %1013 = vmatprep.subr.mxu0 0.0
  %1014 = vmatpush1.msra.mxu0 0.0
  %1015 = vmatprep.subr.mxu0 0.0
  %1016 = vmatpush1.msra.mxu0 0.0
  %1017 = vmatprep.subr.mxu0 0.0
  %1018 = vmatpush1.msra.mxu0 0.0
  %1019 = vmatprep.subr.mxu0 0.0
  %1020 = vmatpush1.msra.mxu0 0.0
  %1021 = vmatprep.subr.mxu0 0.0
  %1022 = vmatpush1.msra.mxu0 0.0
  %1023 = vmatprep.subr.mxu0 0.0
  %1024 = vmatpush1.msra.mxu0 0.0
  %1025 = vmatprep.subr.mxu0 0.0
  %1026 = vmatpush1.msra.mxu0 0.0
  %1027 = vmatprep.subr.mxu0 0.0
  %1028 = vmatpush1.msra.mxu0 0.0
  %1029 = vmatprep.subr.mxu0 0.0
  %1030 = vmatpush1.msra.mxu0 0.0
  %1031 = vmatprep.subr.mxu0 0.0
  %1032 = vmatpush1.msra.mxu0 0.0
  %1033 = vmatprep.subr.mxu0 0.0
  %1034 = vmatpush1.msra.mxu0 0.0
  %1035 = vmatprep.subr.mxu0 0.0
  %1036 = vmatpush1.msra.mxu0 0.0
  %1037 = vmatprep.subr.mxu0 0.0
  %1038 = vmatpush1.msra.mxu0 0.0
  %1039 = vmatprep.subr.mxu0 0.0
  %1040 = vmatpush1.msra.mxu0 0.0
  %1041 = vmatprep.subr.mxu0 0.0
  %1042 = vmatpush1.msra.mxu0 0.0
  %1043 = vmatprep.subr.mxu0 0.0
  %1044 = vmatpush1.msra.mxu0 0.0
  %1045 = vmatprep.subr.mxu0 0.0
  %1046 = vmatpush1.msra.mxu0 0.0
  %1047 = vmatprep.subr.mxu0 0.0
  %1048 = vmatpush1.msra.mxu0 0.0
  %1049 = vmatprep.subr.mxu0 0.0
  %1050 = vmatpush1.msra.mxu0 0.0
  %1051 = vmatprep.subr.mxu0 0.0
  %1052 = vmatpush1.msra.mxu0 0.0
  %1053 = vmatprep.subr.mxu0 0.0
  %1054 = vmatpush1.msra.mxu0 0.0
  %1055 = vmatprep.subr.mxu0 0.0
  %1056 = vmatpush1.msra.mxu0 0.0
  %1057 = vmatprep.subr.mxu0 0.0
  %1058 = vmatpush1.msra.mxu0 0.0
  %1059 = vmatprep.subr.mxu0 0.0
  %1060 = vmatpush1.msra.mxu0 0.0
  %1061 = vmatprep.subr.mxu0 0.0
  %1062 = vmatpush1.msra.mxu0 0.0
  %1063 = vmatprep.subr.mxu0 0.0
  %1064 = vmatpush1.msra.mxu0 0.0
  %1065 = vmatprep.mubr.f32.mxu0 0.0
  %1066 = vmatmul.mubr.f32.gmra.mrb[0].mxu0 %v986
  %v1067 = vpop.f32.mrb[0].mxu0
  %v1068 = vadd.f32 0.0, %v1067
  %v1069 = vpop.f32.mrb[0].mxu0
  %1070 = vmatprep.mubr.f32.mxu0 0.0
  %1071 = vmatmul.mubr.f32.gmra.mrb[0].mxu0 %v989
  %v1072 = vpop.f32.mrb[0].mxu0
  %v1073 = vadd.f32 0.0, %v1072
  %v1074 = vpop.f32.mrb[0].mxu0
  %1075 = vmatprep.mubr.f32.mxu0 0.0
  %1076 = vmatmul.mubr.f32.gmra.mrb[0].mxu0 %v992
  %v1077 = vpop.f32.mrb[0].mxu0
  %v1078 = vadd.f32 0.0, %v1077
  %v1079 = vpop.f32.mrb[0].mxu0
  %1080 = vmatprep.mubr.f32.mxu0 0.0
  %1081 = vmatmul.mubr.f32.gmra.mrb[0].mxu0 %v995
  %v1082 = vpop.f32.mrb[0].mxu0
  %v1083 = vadd.f32 0.0, %v1082
  %v1084 = vpop.f32.mrb[0].mxu0
  %1085 = vdwg.mxu0
  %v1086 = vmul.f32 %v1068, %v475
  %v1087 = vmul.f32 %v1073, %v478
  %v1088 = vmul.f32 %v1078, %v483
  %v1089 = vmul.f32 %v1083, %v486
  %v1091 = vsel %vm780, %v984, 0
  %1093 = vmatprep.subr.mxu0 0.0
  %1094 = vmatpush1.msra.mxu0 %v999
  %1095 = vmatprep.subr.mxu0 0.0
  %1096 = vmatpush1.msra.mxu0 0.0
  %1097 = vmatprep.subr.mxu0 0.0
  %1098 = vmatpush1.msra.mxu0 0.0
  %1099 = vmatprep.subr.mxu0 0.0
  %1100 = vmatpush1.msra.mxu0 0.0
  %1101 = vmatprep.subr.mxu0 0.0
  %1102 = vmatpush1.msra.mxu0 0.0
  %1103 = vmatprep.subr.mxu0 0.0
  %1104 = vmatpush1.msra.mxu0 0.0
  %1105 = vmatprep.subr.mxu0 0.0
  %1106 = vmatpush1.msra.mxu0 0.0
  %1107 = vmatprep.subr.mxu0 0.0
  %1108 = vmatpush1.msra.mxu0 0.0
  %1109 = vmatprep.subr.mxu0 0.0
  %1110 = vmatpush1.msra.mxu0 0.0
  %1111 = vmatprep.subr.mxu0 0.0
  %1112 = vmatpush1.msra.mxu0 0.0
  %1113 = vmatprep.subr.mxu0 0.0
  %1114 = vmatpush1.msra.mxu0 0.0
  %1115 = vmatprep.subr.mxu0 0.0
  %1116 = vmatpush1.msra.mxu0 0.0
  %1117 = vmatprep.subr.mxu0 0.0
  %1118 = vmatpush1.msra.mxu0 0.0
  %1119 = vmatprep.subr.mxu0 0.0
  %1120 = vmatpush1.msra.mxu0 0.0
  %1121 = vmatprep.subr.mxu0 0.0
  %1122 = vmatpush1.msra.mxu0 0.0
  %1123 = vmatprep.subr.mxu0 0.0
  %1124 = vmatpush1.msra.mxu0 0.0
  %1125 = vmatprep.subr.mxu0 0.0
  %1126 = vmatpush1.msra.mxu0 0.0
  %1127 = vmatprep.subr.mxu0 0.0
  %1128 = vmatpush1.msra.mxu0 0.0
  %1129 = vmatprep.subr.mxu0 0.0
  %1130 = vmatpush1.msra.mxu0 0.0
  %1131 = vmatprep.subr.mxu0 0.0
  %1132 = vmatpush1.msra.mxu0 0.0
  %1133 = vmatprep.subr.mxu0 0.0
  %1134 = vmatpush1.msra.mxu0 0.0
  %1135 = vmatprep.subr.mxu0 0.0
  %1136 = vmatpush1.msra.mxu0 0.0
  %1137 = vmatprep.subr.mxu0 0.0
  %1138 = vmatpush1.msra.mxu0 0.0
  %1139 = vmatprep.subr.mxu0 0.0
  %1140 = vmatpush1.msra.mxu0 0.0
  %1141 = vmatprep.subr.mxu0 0.0
  %1142 = vmatpush1.msra.mxu0 0.0
  %1143 = vmatprep.subr.mxu0 0.0
  %1144 = vmatpush1.msra.mxu0 0.0
  %1145 = vmatprep.subr.mxu0 0.0
  %1146 = vmatpush1.msra.mxu0 0.0
  %1147 = vmatprep.subr.mxu0 0.0
  %1148 = vmatpush1.msra.mxu0 0.0
  %1149 = vmatprep.subr.mxu0 0.0
  %1150 = vmatpush1.msra.mxu0 0.0
  %1151 = vmatprep.subr.mxu0 0.0
  %1152 = vmatpush1.msra.mxu0 0.0
  %1153 = vmatprep.subr.mxu0 0.0
  %1154 = vmatpush1.msra.mxu0 0.0
  %1155 = vmatprep.subr.mxu0 0.0
  %1156 = vmatpush1.msra.mxu0 0.0
  %1157 = vmatprep.mubr.f32.mxu0 0.0
  %1158 = vmatmul.mubr.f32.gmra.mrb[0].mxu0 %v1091
  %v1159 = vpop.f32.mrb[0].mxu0
  %v1160 = vadd.f32 0.0, %v1159
  %v1161 = vpop.f32.mrb[0].mxu0
  %1162 = vdwg.mxu0
  %v1163 = vmul.f32 %v1160, %v380
  %1164 = vmatprep.subr.mxu0 0.0
  %1165 = vmatpush1.msra.mxu0 %v1086
  %1166 = vmatprep.subr.mxu0 0.0
  %1167 = vmatpush1.msra.mxu0 %v1087
  %1168 = vmatprep.subr.mxu0 0.0
  %1169 = vmatpush1.msra.mxu0 %v1088
  %1170 = vmatprep.subr.mxu0 0.0
  %1171 = vmatpush1.msra.mxu0 %v1089
  %1172 = vmatprep.subr.mxu0 0.0
  %1173 = vmatpush1.msra.mxu0 0.0
  %1174 = vmatprep.subr.mxu0 0.0
  %1175 = vmatpush1.msra.mxu0 0.0
  %1176 = vmatprep.subr.mxu0 0.0
  %1177 = vmatpush1.msra.mxu0 0.0
  %1178 = vmatprep.subr.mxu0 0.0
  %1179 = vmatpush1.msra.mxu0 0.0
  %1180 = vmatprep.subr.mxu0 0.0
  %1181 = vmatpush1.msra.mxu0 0.0
  %1182 = vmatprep.subr.mxu0 0.0
  %1183 = vmatpush1.msra.mxu0 0.0
  %1184 = vmatprep.subr.mxu0 0.0
  %1185 = vmatpush1.msra.mxu0 0.0
  %1186 = vmatprep.subr.mxu0 0.0
  %1187 = vmatpush1.msra.mxu0 0.0
  %1188 = vmatprep.subr.mxu0 0.0
  %1189 = vmatpush1.msra.mxu0 0.0
  %1190 = vmatprep.subr.mxu0 0.0
  %1191 = vmatpush1.msra.mxu0 0.0
  %1192 = vmatprep.subr.mxu0 0.0
  %1193 = vmatpush1.msra.mxu0 0.0
  %1194 = vmatprep.subr.mxu0 0.0
  %1195 = vmatpush1.msra.mxu0 0.0
  %1196 = vmatprep.subr.mxu0 0.0
  %1197 = vmatpush1.msra.mxu0 0.0
  %1198 = vmatprep.subr.mxu0 0.0
  %1199 = vmatpush1.msra.mxu0 0.0
  %1200 = vmatprep.subr.mxu0 0.0
  %1201 = vmatpush1.msra.mxu0 0.0
  %1202 = vmatprep.subr.mxu0 0.0
  %1203 = vmatpush1.msra.mxu0 0.0
  %1204 = vmatprep.subr.mxu0 0.0
  %1205 = vmatpush1.msra.mxu0 0.0
  %1206 = vmatprep.subr.mxu0 0.0
  %1207 = vmatpush1.msra.mxu0 0.0
  %1208 = vmatprep.subr.mxu0 0.0
  %1209 = vmatpush1.msra.mxu0 0.0
  %1210 = vmatprep.subr.mxu0 0.0
  %1211 = vmatpush1.msra.mxu0 0.0
  %1212 = vmatprep.subr.mxu0 0.0
  %1213 = vmatpush1.msra.mxu0 0.0
  %1214 = vmatprep.subr.mxu0 0.0
  %1215 = vmatpush1.msra.mxu0 0.0
  %1216 = vmatprep.subr.mxu0 0.0
  %1217 = vmatpush1.msra.mxu0 0.0
  %1218 = vmatprep.subr.mxu0 0.0
  %1219 = vmatpush1.msra.mxu0 0.0
  %1220 = vmatprep.subr.mxu0 0.0
  %1221 = vmatpush1.msra.mxu0 0.0
  %1222 = vmatprep.subr.mxu0 0.0
  %1223 = vmatpush1.msra.mxu0 0.0
  %1224 = vmatprep.subr.mxu0 0.0
  %1225 = vmatpush1.msra.mxu0 0.0
  %1226 = vmatprep.subr.mxu0 0.0
  %1227 = vmatpush1.msra.mxu0 0.0
  %1228 = vmatprep.mubr.f32.mxu0 0.0
  %1229 = vmatmul.mubr.f32.gmra.mrb[0].mxu0 %v819
  %v1230 = vpop.f32.mrb[0].mxu0
  %v1231 = vadd.f32 %v1163, %v1230
  %v1232 = vpop.f32.mrb[0].mxu0
  %1233 = vdwg.mxu0
  %v1234 = vpack.c.bf16 %v1231, %v1231
  %v1235 = vld [vmem:[%s9] sm:$0xf]
  %v1236 = vld [vmem:[%s9 + $0x4] sm:$0xf]
  %v1237 = vld [vmem:[%s9 + $0x8] sm:$0xf]
  %v1238 = vld [vmem:[%s9 + $0xc] sm:$0xf]
  %v1239 = vld [vmem:[%s9 + $0x10] sm:$0xf]
  %v1240 = vld [vmem:[%s9 + $0x14] sm:$0xf]
  %v1241 = vld [vmem:[%s9 + $0x18] sm:$0xf]
  %v1242 = vld [vmem:[%s9 + $0x1c] sm:$0xf]
  %v1243 = vld [vmem:[%s10] sm:$0x1]
  %v1245 = vlaneseq
  %v1246 = vshrl.u32 %v1245, 7
  %v1247 = vsub.s32 0, %v1246
  %v1248 = vrot.slane %v1243, %v1247
  %v1258 = vunpack.c.l.b16 %v1235
  %v1259 = vunpack.c.l.b16 %v1236
  %v1260 = vunpack.c.l.b16 %v1237
  %v1261 = vunpack.c.l.b16 %v1238
  %v1262 = vunpack.c.l.b16 %v1239
  %v1263 = vunpack.c.l.b16 %v1240
  %v1264 = vunpack.c.l.b16 %v1241
  %v1265 = vunpack.c.l.b16 %v1242
  %v1266 = vpack.c.b16 %v1259, %v1258
  %v1267 = vpack.c.b16 %v1261, %v1260
  %v1268 = vpack.c.b16 %v1263, %v1262
  %v1269 = vpack.c.b16 %v1265, %v1264
  %v1275 = vsel %vm196, %v1234, 0
  %1277 = vmatprep.subr.bf16.mxu0 0
  %1278 = vmatpush1.bf16.msra.mxu0 %v1266
  %1279 = vmatprep.subr.bf16.mxu0 0
  %1280 = vmatpush1.bf16.msra.mxu0 %v1267
  %1281 = vmatprep.subr.bf16.mxu0 0
  %1282 = vmatpush1.bf16.msra.mxu0 %v1268
  %1283 = vmatprep.subr.bf16.mxu0 0
  %1284 = vmatpush1.bf16.msra.mxu0 %v1269
  %1285 = vmatprep.subr.bf16.mxu0 0
  %1286 = vmatpush1.bf16.msra.mxu0 0
  %1287 = vmatprep.subr.bf16.mxu0 0
  %1288 = vmatpush1.bf16.msra.mxu0 0
  %1289 = vmatprep.subr.bf16.mxu0 0
  %1290 = vmatpush1.bf16.msra.mxu0 0
  %1291 = vmatprep.subr.bf16.mxu0 0
  %1292 = vmatpush1.bf16.msra.mxu0 0
  %1293 = vmatprep.subr.bf16.mxu0 0
  %1294 = vmatpush1.bf16.msra.mxu0 0
  %1295 = vmatprep.subr.bf16.mxu0 0
  %1296 = vmatpush1.bf16.msra.mxu0 0
  %1297 = vmatprep.subr.bf16.mxu0 0
  %1298 = vmatpush1.bf16.msra.mxu0 0
  %1299 = vmatprep.subr.bf16.mxu0 0
  %1300 = vmatpush1.bf16.msra.mxu0 0
  %1301 = vmatprep.subr.bf16.mxu0 0
  %1302 = vmatpush1.bf16.msra.mxu0 0
  %1303 = vmatprep.subr.bf16.mxu0 0
  %1304 = vmatpush1.bf16.msra.mxu0 0
  %1305 = vmatprep.subr.bf16.mxu0 0
  %1306 = vmatpush1.bf16.msra.mxu0 0
  %1307 = vmatprep.subr.bf16.mxu0 0
  %1308 = vmatpush1.bf16.msra.mxu0 0
  %1309 = vmatprep.mubr.bf16.mxu0 0
  %1310 = vmatmul.mubr.bf16.gmra.mrb[0].mxu0 %v1275
  %v1311 = vpop.f32.mrb[0].mxu0
  %v1312 = vadd.f32 %v1248, %v1311
  %v1313 = vpop.f32.mrb[0].mxu0
  %v1314 = vpop.f32.mrb[0].mxu0
  %v1315 = vpop.f32.mrb[0].mxu0
  %1316 = vdwg.mxu0
  %v1317 = vpack.c.bf16 %v1312, %v1312
  %v1318 = vld [vmem:[%s11] sm:$0xf]
  %v1319 = vld [vmem:[%s11 + $0x4] sm:$0xf]
  %v1320 = vld [vmem:[%s11 + $0x8] sm:$0xf]
  %v1321 = vld [vmem:[%s11 + $0xc] sm:$0xf]
  %v1322 = vld [vmem:[%s11 + $0x10] sm:$0xf]
  %v1323 = vld [vmem:[%s11 + $0x14] sm:$0xf]
  %v1324 = vld [vmem:[%s11 + $0x18] sm:$0xf]
  %v1325 = vld [vmem:[%s11 + $0x1c] sm:$0xf]
  %v1326 = vld [vmem:[%s12] sm:$0x1]
  %v1328 = vlaneseq
  %v1329 = vshrl.u32 %v1328, 7
  %v1330 = vsub.s32 0, %v1329
  %v1331 = vrot.slane %v1326, %v1330
  %v1341 = vunpack.c.l.b16 %v1318
  %v1342 = vunpack.c.l.b16 %v1319
  %v1343 = vunpack.c.l.b16 %v1320
  %v1344 = vunpack.c.l.b16 %v1321
  %v1345 = vunpack.c.l.b16 %v1322
  %v1346 = vunpack.c.l.b16 %v1323
  %v1347 = vunpack.c.l.b16 %v1324
  %v1348 = vunpack.c.l.b16 %v1325
  %v1349 = vpack.c.b16 %v1342, %v1341
  %v1350 = vpack.c.b16 %v1344, %v1343
  %v1351 = vpack.c.b16 %v1346, %v1345
  %v1352 = vpack.c.b16 %v1348, %v1347
  %v1358 = vsel %vm196, %v1317, 0
  %1360 = vmatprep.subr.bf16.mxu0 0
  %1361 = vmatpush1.bf16.msra.mxu0 %v1349
  %1362 = vmatprep.subr.bf16.mxu0 0
  %1363 = vmatpush1.bf16.msra.mxu0 %v1350
  %1364 = vmatprep.subr.bf16.mxu0 0
  %1365 = vmatpush1.bf16.msra.mxu0 %v1351
  %1366 = vmatprep.subr.bf16.mxu0 0
  %1367 = vmatpush1.bf16.msra.mxu0 %v1352
  %1368 = vmatprep.subr.bf16.mxu0 0
  %1369 = vmatpush1.bf16.msra.mxu0 0
  %1370 = vmatprep.subr.bf16.mxu0 0
  %1371 = vmatpush1.bf16.msra.mxu0 0
  %1372 = vmatprep.subr.bf16.mxu0 0
  %1373 = vmatpush1.bf16.msra.mxu0 0
  %1374 = vmatprep.subr.bf16.mxu0 0
  %1375 = vmatpush1.bf16.msra.mxu0 0
  %1376 = vmatprep.subr.bf16.mxu0 0
  %1377 = vmatpush1.bf16.msra.mxu0 0
  %1378 = vmatprep.subr.bf16.mxu0 0
  %1379 = vmatpush1.bf16.msra.mxu0 0
  %1380 = vmatprep.subr.bf16.mxu0 0
  %1381 = vmatpush1.bf16.msra.mxu0 0
  %1382 = vmatprep.subr.bf16.mxu0 0
  %1383 = vmatpush1.bf16.msra.mxu0 0
  %1384 = vmatprep.subr.bf16.mxu0 0
  %1385 = vmatpush1.bf16.msra.mxu0 0
  %1386 = vmatprep.subr.bf16.mxu0 0
  %1387 = vmatpush1.bf16.msra.mxu0 0
  %1388 = vmatprep.subr.bf16.mxu0 0
  %1389 = vmatpush1.bf16.msra.mxu0 0
  %1390 = vmatprep.subr.bf16.mxu0 0
  %1391 = vmatpush1.bf16.msra.mxu0 0
  %1392 = vmatprep.mubr.bf16.mxu0 0
  %1393 = vmatmul.mubr.bf16.gmra.mrb[0].mxu0 %v1358
  %v1394 = vpop.f32.mrb[0].mxu0
  %v1395 = vadd.f32 %v1331, %v1394
  %v1396 = vpop.f32.mrb[0].mxu0
  %v1397 = vpop.f32.mrb[0].mxu0
  %v1398 = vpop.f32.mrb[0].mxu0
  %1399 = vdwg.mxu0
  %v1400 = vadd.f32 %v1395, %v57
  %vm1401 = vcmask 254976
  %1402 = vst.msk [vmem:[%s17] sm:$0x3] %vm1401, %v1400
  // Predicated region
  $region70: #{_lambda_.4} parent=0 // pred_check
    _
  $region71: #{_lambda_.4} parent=0 // pred_check_branch
    %1404 = sbr.rel (0) target = $region73
  $region72: #{_lambda_.4} parent=0 // pred_region
    _
  $region73: #{_lambda_.4} parent=0 // pred_fallthru
    _
  // Predicated region
  $region74: #{_lambda_.4} parent=0 // pred_check
    _
  $region75: #{_lambda_.4} parent=0 // pred_check_branch
    %1406 = sbr.rel (0) target = $region77
  $region76: #{_lambda_.4} parent=0 // pred_region
    _
  $region77: #{_lambda_.4} parent=0 // pred_fallthru
    _

</llo_original>
